<compile_context>
chip_gen: v7x
topology: tpu7x:2x2x1
jax: 0.10.0
libtpu: 0.0.40
codegen_flags: <defaults>
</compile_context>

<pallas_src>
import functools

import jax
import jax.numpy as jnp
from jax.experimental import pallas as pl
from jax.experimental.pallas import tpu as pltpu

EPS = 1e-5


# --------------------------------------------------------------------------
# Pallas kernel: one (batch, d-tile) block per grid step.
#   gx_ref  : (1, 1, C, Lp)     bf16   C = Cg + Cx, flattened padded spatial
#   mask_ref: (9, TILE_S)       bf16   h/w boundary masks per (kh, kw)
#   w_ref   : (27, Fint, C)     bf16   BN-folded fused conv weights, tap-major
#   aux_ref : (Fint, 3)         f32    [:,0]=fused bias, [:,1]=psi weight, [:,2]=psi bias
#   out_ref : (1, 1, Cx, TILE_S) f32   gated x, spatial on lanes (lane-dense)
# --------------------------------------------------------------------------
def _lgag_kernel(gx_ref, mask_ref, w_ref, aux_ref, out_ref, *,
                 Cg, Cx, Fint, tile_d, H, W):
    HW = H * W
    TILE_S = tile_d * HW
    C = Cg + Cx

    tile = gx_ref[0, 0]                                   # (C, Lp) bf16
    acc = jnp.zeros((Fint, TILE_S), jnp.float32)

    # 3x3x3 conv as 27 shifted-window matmuls accumulated in f32.
    for kd in range(3):
        for kh in range(3):
            for kw in range(3):
                off = kd * HW + kh * W + kw               # static lane offset
                tap = tile[:, off:off + TILE_S]           # (C, TILE_S) bf16
                if not (kh == 1 and kw == 1):             # center tap needs no mask
                    r = kh * 3 + kw
                    tap = tap * mask_ref[r:r + 1, :]      # zero h/w out-of-range taps
                wt = w_ref[kd * 9 + kh * 3 + kw]          # (Fint, C) bf16
                acc = acc + jnp.dot(wt, tap, preferred_element_type=jnp.float32)

    bias = aux_ref[:, 0:1]                                # (Fint, 1) fused conv+BN bias
    wpsi = aux_ref[:, 1:2]                                # (Fint, 1) BN-folded psi weight
    bpsi = aux_ref[0:1, 2:3]                              # (1, 1)    BN-folded psi bias

    a = jnp.maximum(acc + bias, 0.0)                      # ReLU(g1 + x1)
    # psi 1x1x1 conv as a VPU multiply + sublane reduce (no N=1 MXU matmul).
    psi = jax.nn.sigmoid(jnp.sum(a * wpsi, axis=0, keepdims=True) + bpsi)  # (1, TILE_S)

    # Gate x with psi: reuse the center tap (kd=kh=kw=1) of the resident tile.
    center = HW + W + 1
    xc = tile[Cg:C, center:center + TILE_S].astype(jnp.float32)            # (Cx, TILE_S)
    out_ref[0, 0] = xc * psi


def _fold_bn(gamma, beta, mean, var):
    s = gamma / jnp.sqrt(var + EPS)
    return s, beta - mean * s


def _pick_tile_d(D, HW):
    """Largest D-tile whose flattened spatial extent is lane-friendly and small
    enough to pipeline; prefer >=2 tiles so the spatial grid axis is parallel."""
    divs = [d for d in range(1, D + 1) if D % d == 0]
    in_range = [d for d in divs if 128 <= d * HW <= 2048]
    multi = [d for d in in_range if D // d >= 2]
    if multi:
        return max(multi)
    if in_range:
        return max(in_range)
    return min(divs, key=lambda d: abs(d * HW - 512))


# --------------------------------------------------------------------------
# Wrapper: BN folding, layout prep (cheap glue only), pallas_call.
# --------------------------------------------------------------------------
def lgag_forward(g_ncdhw, x_ncdhw, params):
    B, Cg, D, H, W = g_ncdhw.shape
    Cx = x_ncdhw.shape[1]
    C = Cg + Cx
    Fint = params['wg'].shape[0]
    HW = H * W

    tile_d = _pick_tile_d(D, HW)
    n_t = D // tile_d
    TILE_S = tile_d * HW

    # Activations: concat channels, flatten (H,W), zero-pad D, cut D-tiles with
    # a 1-plane halo on each side, then add a (W+1)-element zero guard so every
    # 3x3x3 tap window is a contiguous in-bounds lane slice.
    gx = jnp.concatenate([g_ncdhw, x_ncdhw], axis=1)               # (B, C, D, H, W)
    gx = gx.reshape(B, C, D, HW)
    gx = jnp.pad(gx, ((0, 0), (0, 0), (1, 1), (0, 0)))             # (B, C, D+2, HW)
    slabs = [gx[:, :, t * tile_d: t * tile_d + tile_d + 2, :] for t in range(n_t)]
    gx_t = jnp.stack(slabs, axis=1).reshape(B, n_t, C, (tile_d + 2) * HW)
    L0 = (tile_d + 2) * HW
    Lp = ((L0 + 2 * (W + 1) + 127) // 128) * 128                   # round lanes to 128
    gx_t = jnp.pad(gx_t, ((0, 0), (0, 0), (0, 0), (W + 1, Lp - L0 - (W + 1))))
    gx_t = gx_t.astype(jnp.bfloat16)                               # (B, nT, C, Lp)

    # h/w boundary masks (independent of d): one row per (kh, kw).
    f = jnp.arange(TILE_S)
    h_idx = (f // W) % H
    w_idx = f % W
    rows = []
    for kh in range(3):
        for kw in range(3):
            ok = ((h_idx + kh - 1 >= 0) & (h_idx + kh - 1 < H) &
                  (w_idx + kw - 1 >= 0) & (w_idx + kw - 1 < W))
            rows.append(ok)
    mask = jnp.stack(rows).astype(jnp.bfloat16)                    # (9, TILE_S)

    # BN-folded fused weights: per tap, columns = [g channels | x channels].
    sg, og = _fold_bn(params['bn_g_gamma'], params['bn_g_beta'],
                      params['bn_g_mean'], params['bn_g_var'])
    sx, ox = _fold_bn(params['bn_x_gamma'], params['bn_x_beta'],
                      params['bn_x_mean'], params['bn_x_var'])
    sp, op = _fold_bn(params['bn_p_gamma'], params['bn_p_beta'],
                      params['bn_p_mean'], params['bn_p_var'])

    wg_t = jnp.transpose(params['wg'], (2, 3, 4, 0, 1)).reshape(27, Fint, Cg)
    wx_t = jnp.transpose(params['wx'], (2, 3, 4, 0, 1)).reshape(27, Fint, Cx)
    w_fused = jnp.concatenate([wg_t * sg[None, :, None],
                               wx_t * sx[None, :, None]], axis=-1)
    w_fused = w_fused.astype(jnp.bfloat16)                         # (27, Fint, C)

    bias = (params['bg'] * sg + og) + (params['bx'] * sx + ox)     # (Fint,)
    wpsi_col = params['wpsi'].reshape(Fint) * sp[0]                # (Fint,)
    bpsi = params['bpsi'][0] * sp[0] + op[0]                       # scalar
    aux = jnp.stack([bias, wpsi_col, jnp.full((Fint,), bpsi)],
                    axis=1).astype(jnp.float32)                    # (Fint, 3)

    kernel = functools.partial(_lgag_kernel, Cg=Cg, Cx=Cx, Fint=Fint,
                               tile_d=tile_d, H=H, W=W)

    out = pl.pallas_call(
        kernel,
        out_shape=jax.ShapeDtypeStruct((B, n_t, Cx, TILE_S), jnp.float32),
        grid_spec=pltpu.PrefetchScalarGridSpec(
            num_scalar_prefetch=0,
            grid=(B, n_t),
            in_specs=[
                pl.BlockSpec((1, 1, C, Lp), lambda b, t: (b, t, 0, 0)),
                pl.BlockSpec((9, TILE_S), lambda b, t: (0, 0)),
                pl.BlockSpec((27, Fint, C), lambda b, t: (0, 0, 0)),
                pl.BlockSpec((Fint, 3), lambda b, t: (0, 0)),
            ],
            out_specs=pl.BlockSpec((1, 1, Cx, TILE_S), lambda b, t: (b, t, 0, 0)),
        ),
        compiler_params=pltpu.CompilerParams(
            dimension_semantics=("parallel", "parallel"),
            vmem_limit_bytes=32 * 1024 * 1024),
    )(gx_t, mask, w_fused, aux)

    # (B, nT, Cx, TILE_S) -> (B, Cx, D, H, W)
    out = out.reshape(B, n_t, Cx, tile_d, H, W)
    return jnp.transpose(out, (0, 2, 1, 3, 4, 5)).reshape(B, Cx, D, H, W)


# --------------------------------------------------------------------------
# Pure-JAX reference (NCDHW, same semantics) for a correctness check.
# --------------------------------------------------------------------------
def lgag_reference(g, x, p):
    def conv3(inp, w, b, pad):
        y = jax.lax.conv_general_dilated(
            inp, w, window_strides=(1, 1, 1),
            padding=[(pad, pad)] * 3,
            dimension_numbers=('NCDHW', 'OIDHW', 'NCDHW'))
        return y + b[None, :, None, None, None]

    def bn(y, gamma, beta, mean, var):
        s = gamma / jnp.sqrt(var + EPS)
        return y * s[None, :, None, None, None] + \
            (beta - mean * s)[None, :, None, None, None]

    g1 = bn(conv3(g, p['wg'], p['bg'], 1),
            p['bn_g_gamma'], p['bn_g_beta'], p['bn_g_mean'], p['bn_g_var'])
    x1 = bn(conv3(x, p['wx'], p['bx'], 1),
            p['bn_x_gamma'], p['bn_x_beta'], p['bn_x_mean'], p['bn_x_var'])
    a = jax.nn.relu(g1 + x1)
    psi = bn(conv3(a, p['wpsi'], p['bpsi'], 0),
             p['bn_p_gamma'], p['bn_p_beta'], p['bn_p_mean'], p['bn_p_var'])
    psi = jax.nn.sigmoid(psi)
    return x * psi


if __name__ == "__main__":
    B, F_g, F_l, F_int = 2, 4, 4, 16
    D = H = W = 8

    key = jax.random.PRNGKey(0)
    ks = jax.random.split(key, 16)

    params = {
        # Conv3d 3x3x3 weights (O, I, kd, kh, kw) + bias
        'wg': 0.1 * jax.random.normal(ks[0], (F_int, F_g, 3, 3, 3), jnp.float32),
        'bg': 0.05 * jax.random.normal(ks[1], (F_int,), jnp.float32),
        'wx': 0.1 * jax.random.normal(ks[2], (F_int, F_l, 3, 3, 3), jnp.float32),
        'bx': 0.05 * jax.random.normal(ks[3], (F_int,), jnp.float32),
        # psi 1x1x1 conv
        'wpsi': 0.1 * jax.random.normal(ks[4], (1, F_int, 1, 1, 1), jnp.float32),
        'bpsi': 0.05 * jax.random.normal(ks[5], (1,), jnp.float32),
        # BatchNorm params/stats (inference mode)
        # TODO(synk): PyTorch default is train-mode BN (batch stats); inference
        # semantics with explicit running stats are used here.
        'bn_g_gamma': 1.0 + 0.1 * jax.random.normal(ks[6], (F_int,), jnp.float32),
        'bn_g_beta': 0.1 * jax.random.normal(ks[7], (F_int,), jnp.float32),
        'bn_g_mean': 0.05 * jax.random.normal(ks[8], (F_int,), jnp.float32),
        'bn_g_var': 1.0 + 0.1 * jax.random.uniform(ks[9], (F_int,), jnp.float32),
        'bn_x_gamma': 1.0 + 0.1 * jax.random.normal(ks[10], (F_int,), jnp.float32),
        'bn_x_beta': 0.1 * jax.random.normal(ks[11], (F_int,), jnp.float32),
        'bn_x_mean': 0.05 * jax.random.normal(ks[12], (F_int,), jnp.float32),
        'bn_x_var': 1.0 + 0.1 * jax.random.uniform(ks[13], (F_int,), jnp.float32),
        'bn_p_gamma': jnp.array([1.1], jnp.float32),
        'bn_p_beta': jnp.array([0.05], jnp.float32),
        'bn_p_mean': jnp.array([0.02], jnp.float32),
        'bn_p_var': jnp.array([1.05], jnp.float32),
    }

    kg, kx = jax.random.split(jax.random.PRNGKey(42))
    g = jax.random.normal(kg, (B, F_g, D, H, W), jnp.float32)
    x = jax.random.normal(kx, (B, F_l, D, H, W), jnp.float32)

    out = jax.block_until_ready(lgag_forward(g, x, params))
    ref = jax.block_until_ready(lgag_reference(g, x, params))

    assert out.shape == (B, F_l, D, H, W)
    # bf16 matmul operands (f32 accumulation) -> loosened tolerance vs f32 ref.
    assert jnp.allclose(out, ref, rtol=2e-2, atol=2e-2), \
        float(jnp.max(jnp.abs(out - ref)))

    print("KERNEL_OK")
</pallas_src>

<mosaic_0001>
module attributes {stable_mosaic.version = 11 : i64} {
  func.func @_lgag_kernel(%arg0: i32, %arg1: i32, %arg2: memref<1x1x8x512xbf16, #tpu.memory_space<vmem>>, %arg3: memref<9x256xbf16, #tpu.memory_space<vmem>>, %arg4: memref<27x16x8xbf16, #tpu.memory_space<vmem>>, %arg5: memref<16x3xf32, #tpu.memory_space<vmem>>, %arg6: memref<1x1x4x256xf32, #tpu.memory_space<vmem>>) attributes {dimension_semantics = [#tpu.dimension_semantics<parallel>, #tpu.dimension_semantics<parallel>], iteration_bounds = array<i64: 2, 2>, scalar_prefetch = 0 : i64, scratch_operands = 0 : i64, tpu.core_type = #tpu.core_type<tc>, window_params = [{transform_indices = @transform_0, window_bounds = array<i64: 1, 1, 8, 512>}, {pipeline_mode = #tpu.pipeline_mode<synchronous>, transform_indices = @transform_1, window_bounds = array<i64: 9, 256>}, {pipeline_mode = #tpu.pipeline_mode<synchronous>, transform_indices = @transform_2, window_bounds = array<i64: 27, 16, 8>}, {pipeline_mode = #tpu.pipeline_mode<synchronous>, transform_indices = @transform_3, window_bounds = array<i64: 16, 3>}, {transform_indices = @transform_4, window_bounds = array<i64: 1, 1, 4, 256>}]} {
    %c0 = arith.constant 0 : index
    %c0_0 = arith.constant 0 : index
    %c0_1 = arith.constant 0 : index
    %c0_2 = arith.constant 0 : index
    %0 = vector.load %arg2[%c0, %c0_0, %c0_1, %c0_2] : memref<1x1x8x512xbf16, #tpu.memory_space<vmem>>, vector<1x1x8x512xbf16>
    %1 = vector.shape_cast %0 : vector<1x1x8x512xbf16> to vector<8x512xbf16>
    %cst = arith.constant 0.000000e+00 : f32
    %2 = vector.broadcast %cst : f32 to vector<16x256xf32>
    %3 = vector.extract_strided_slice %1 {offsets = [0, 0], sizes = [8, 256], strides = [1, 1]} : vector<8x512xbf16> to vector<8x256xbf16>
    %c0_3 = arith.constant 0 : index
    %c0_4 = arith.constant 0 : index
    %4 = vector.load %arg3[%c0_3, %c0_4] : memref<9x256xbf16, #tpu.memory_space<vmem>>, vector<1x256xbf16>
    %5 = vector.broadcast %4 : vector<1x256xbf16> to vector<8x256xbf16>
    %6 = arith.mulf %3, %5 : vector<8x256xbf16>
    %c0_5 = arith.constant 0 : index
    %c0_6 = arith.constant 0 : index
    %c0_7 = arith.constant 0 : index
    %7 = vector.load %arg4[%c0_5, %c0_6, %c0_7] : memref<27x16x8xbf16, #tpu.memory_space<vmem>>, vector<1x16x8xbf16>
    %8 = vector.shape_cast %7 : vector<1x16x8xbf16> to vector<16x8xbf16>
    %cst_8 = arith.constant dense<0.000000e+00> : vector<16x256xf32>
    %9 = tpu.matmul %8, %6, %cst_8 {dimension_numbers = #tpu.dot_dimension_numbers<[1], [0], [0], [1], [0, 0, 1, 1], [], []>} : vector<16x8xbf16>, vector<8x256xbf16>, vector<16x256xf32> -> vector<16x256xf32>
    %10 = arith.addf %2, %9 : vector<16x256xf32>
    %11 = vector.extract_strided_slice %1 {offsets = [0, 1], sizes = [8, 256], strides = [1, 1]} : vector<8x512xbf16> to vector<8x256xbf16>
    %c1 = arith.constant 1 : index
    %c0_9 = arith.constant 0 : index
    %12 = vector.load %arg3[%c1, %c0_9] : memref<9x256xbf16, #tpu.memory_space<vmem>>, vector<1x256xbf16>
    %13 = vector.broadcast %12 : vector<1x256xbf16> to vector<8x256xbf16>
    %14 = arith.mulf %11, %13 : vector<8x256xbf16>
    %c1_10 = arith.constant 1 : index
    %c0_11 = arith.constant 0 : index
    %c0_12 = arith.constant 0 : index
    %15 = vector.load %arg4[%c1_10, %c0_11, %c0_12] : memref<27x16x8xbf16, #tpu.memory_space<vmem>>, vector<1x16x8xbf16>
    %16 = vector.shape_cast %15 : vector<1x16x8xbf16> to vector<16x8xbf16>
    %cst_13 = arith.constant dense<0.000000e+00> : vector<16x256xf32>
    %17 = tpu.matmul %16, %14, %cst_13 {dimension_numbers = #tpu.dot_dimension_numbers<[1], [0], [0], [1], [0, 0, 1, 1], [], []>} : vector<16x8xbf16>, vector<8x256xbf16>, vector<16x256xf32> -> vector<16x256xf32>
    %18 = arith.addf %10, %17 : vector<16x256xf32>
    %19 = vector.extract_strided_slice %1 {offsets = [0, 2], sizes = [8, 256], strides = [1, 1]} : vector<8x512xbf16> to vector<8x256xbf16>
    %c2 = arith.constant 2 : index
    %c0_14 = arith.constant 0 : index
    %20 = vector.load %arg3[%c2, %c0_14] : memref<9x256xbf16, #tpu.memory_space<vmem>>, vector<1x256xbf16>
    %21 = vector.broadcast %20 : vector<1x256xbf16> to vector<8x256xbf16>
    %22 = arith.mulf %19, %21 : vector<8x256xbf16>
    %c2_15 = arith.constant 2 : index
    %c0_16 = arith.constant 0 : index
    %c0_17 = arith.constant 0 : index
    %23 = vector.load %arg4[%c2_15, %c0_16, %c0_17] : memref<27x16x8xbf16, #tpu.memory_space<vmem>>, vector<1x16x8xbf16>
    %24 = vector.shape_cast %23 : vector<1x16x8xbf16> to vector<16x8xbf16>
    %cst_18 = arith.constant dense<0.000000e+00> : vector<16x256xf32>
    %25 = tpu.matmul %24, %22, %cst_18 {dimension_numbers = #tpu.dot_dimension_numbers<[1], [0], [0], [1], [0, 0, 1, 1], [], []>} : vector<16x8xbf16>, vector<8x256xbf16>, vector<16x256xf32> -> vector<16x256xf32>
    %26 = arith.addf %18, %25 : vector<16x256xf32>
    %27 = vector.extract_strided_slice %1 {offsets = [0, 8], sizes = [8, 256], strides = [1, 1]} : vector<8x512xbf16> to vector<8x256xbf16>
    %c3 = arith.constant 3 : index
    %c0_19 = arith.constant 0 : index
    %28 = vector.load %arg3[%c3, %c0_19] : memref<9x256xbf16, #tpu.memory_space<vmem>>, vector<1x256xbf16>
    %29 = vector.broadcast %28 : vector<1x256xbf16> to vector<8x256xbf16>
    %30 = arith.mulf %27, %29 : vector<8x256xbf16>
    %c3_20 = arith.constant 3 : index
    %c0_21 = arith.constant 0 : index
    %c0_22 = arith.constant 0 : index
    %31 = vector.load %arg4[%c3_20, %c0_21, %c0_22] : memref<27x16x8xbf16, #tpu.memory_space<vmem>>, vector<1x16x8xbf16>
    %32 = vector.shape_cast %31 : vector<1x16x8xbf16> to vector<16x8xbf16>
    %cst_23 = arith.constant dense<0.000000e+00> : vector<16x256xf32>
    %33 = tpu.matmul %32, %30, %cst_23 {dimension_numbers = #tpu.dot_dimension_numbers<[1], [0], [0], [1], [0, 0, 1, 1], [], []>} : vector<16x8xbf16>, vector<8x256xbf16>, vector<16x256xf32> -> vector<16x256xf32>
    %34 = arith.addf %26, %33 : vector<16x256xf32>
    %35 = vector.extract_strided_slice %1 {offsets = [0, 9], sizes = [8, 256], strides = [1, 1]} : vector<8x512xbf16> to vector<8x256xbf16>
    %c4 = arith.constant 4 : index
    %c0_24 = arith.constant 0 : index
    %c0_25 = arith.constant 0 : index
    %36 = vector.load %arg4[%c4, %c0_24, %c0_25] : memref<27x16x8xbf16, #tpu.memory_space<vmem>>, vector<1x16x8xbf16>
    %37 = vector.shape_cast %36 : vector<1x16x8xbf16> to vector<16x8xbf16>
    %cst_26 = arith.constant dense<0.000000e+00> : vector<16x256xf32>
    %38 = tpu.matmul %37, %35, %cst_26 {dimension_numbers = #tpu.dot_dimension_numbers<[1], [0], [0], [1], [0, 0, 1, 1], [], []>} : vector<16x8xbf16>, vector<8x256xbf16>, vector<16x256xf32> -> vector<16x256xf32>
    %39 = arith.addf %34, %38 : vector<16x256xf32>
    %40 = vector.extract_strided_slice %1 {offsets = [0, 10], sizes = [8, 256], strides = [1, 1]} : vector<8x512xbf16> to vector<8x256xbf16>
    %c5 = arith.constant 5 : index
    %c0_27 = arith.constant 0 : index
    %41 = vector.load %arg3[%c5, %c0_27] : memref<9x256xbf16, #tpu.memory_space<vmem>>, vector<1x256xbf16>
    %42 = vector.broadcast %41 : vector<1x256xbf16> to vector<8x256xbf16>
    %43 = arith.mulf %40, %42 : vector<8x256xbf16>
    %c5_28 = arith.constant 5 : index
    %c0_29 = arith.constant 0 : index
    %c0_30 = arith.constant 0 : index
    %44 = vector.load %arg4[%c5_28, %c0_29, %c0_30] : memref<27x16x8xbf16, #tpu.memory_space<vmem>>, vector<1x16x8xbf16>
    %45 = vector.shape_cast %44 : vector<1x16x8xbf16> to vector<16x8xbf16>
    %cst_31 = arith.constant dense<0.000000e+00> : vector<16x256xf32>
    %46 = tpu.matmul %45, %43, %cst_31 {dimension_numbers = #tpu.dot_dimension_numbers<[1], [0], [0], [1], [0, 0, 1, 1], [], []>} : vector<16x8xbf16>, vector<8x256xbf16>, vector<16x256xf32> -> vector<16x256xf32>
    %47 = arith.addf %39, %46 : vector<16x256xf32>
    %48 = vector.extract_strided_slice %1 {offsets = [0, 16], sizes = [8, 256], strides = [1, 1]} : vector<8x512xbf16> to vector<8x256xbf16>
    %c6 = arith.constant 6 : index
    %c0_32 = arith.constant 0 : index
    %49 = vector.load %arg3[%c6, %c0_32] : memref<9x256xbf16, #tpu.memory_space<vmem>>, vector<1x256xbf16>
    %50 = vector.broadcast %49 : vector<1x256xbf16> to vector<8x256xbf16>
    %51 = arith.mulf %48, %50 : vector<8x256xbf16>
    %c6_33 = arith.constant 6 : index
    %c0_34 = arith.constant 0 : index
    %c0_35 = arith.constant 0 : index
    %52 = vector.load %arg4[%c6_33, %c0_34, %c0_35] : memref<27x16x8xbf16, #tpu.memory_space<vmem>>, vector<1x16x8xbf16>
    %53 = vector.shape_cast %52 : vector<1x16x8xbf16> to vector<16x8xbf16>
    %cst_36 = arith.constant dense<0.000000e+00> : vector<16x256xf32>
    %54 = tpu.matmul %53, %51, %cst_36 {dimension_numbers = #tpu.dot_dimension_numbers<[1], [0], [0], [1], [0, 0, 1, 1], [], []>} : vector<16x8xbf16>, vector<8x256xbf16>, vector<16x256xf32> -> vector<16x256xf32>
    %55 = arith.addf %47, %54 : vector<16x256xf32>
    %56 = vector.extract_strided_slice %1 {offsets = [0, 17], sizes = [8, 256], strides = [1, 1]} : vector<8x512xbf16> to vector<8x256xbf16>
    %c7 = arith.constant 7 : index
    %c0_37 = arith.constant 0 : index
    %57 = vector.load %arg3[%c7, %c0_37] : memref<9x256xbf16, #tpu.memory_space<vmem>>, vector<1x256xbf16>
    %58 = vector.broadcast %57 : vector<1x256xbf16> to vector<8x256xbf16>
    %59 = arith.mulf %56, %58 : vector<8x256xbf16>
    %c7_38 = arith.constant 7 : index
    %c0_39 = arith.constant 0 : index
    %c0_40 = arith.constant 0 : index
    %60 = vector.load %arg4[%c7_38, %c0_39, %c0_40] : memref<27x16x8xbf16, #tpu.memory_space<vmem>>, vector<1x16x8xbf16>
    %61 = vector.shape_cast %60 : vector<1x16x8xbf16> to vector<16x8xbf16>
    %cst_41 = arith.constant dense<0.000000e+00> : vector<16x256xf32>
    %62 = tpu.matmul %61, %59, %cst_41 {dimension_numbers = #tpu.dot_dimension_numbers<[1], [0], [0], [1], [0, 0, 1, 1], [], []>} : vector<16x8xbf16>, vector<8x256xbf16>, vector<16x256xf32> -> vector<16x256xf32>
    %63 = arith.addf %55, %62 : vector<16x256xf32>
    %64 = vector.extract_strided_slice %1 {offsets = [0, 18], sizes = [8, 256], strides = [1, 1]} : vector<8x512xbf16> to vector<8x256xbf16>
    %c8 = arith.constant 8 : index
    %c0_42 = arith.constant 0 : index
    %65 = vector.load %arg3[%c8, %c0_42] : memref<9x256xbf16, #tpu.memory_space<vmem>>, vector<1x256xbf16>
    %66 = vector.broadcast %65 : vector<1x256xbf16> to vector<8x256xbf16>
    %67 = arith.mulf %64, %66 : vector<8x256xbf16>
    %c8_43 = arith.constant 8 : index
    %c0_44 = arith.constant 0 : index
    %c0_45 = arith.constant 0 : index
    %68 = vector.load %arg4[%c8_43, %c0_44, %c0_45] : memref<27x16x8xbf16, #tpu.memory_space<vmem>>, vector<1x16x8xbf16>
    %69 = vector.shape_cast %68 : vector<1x16x8xbf16> to vector<16x8xbf16>
    %cst_46 = arith.constant dense<0.000000e+00> : vector<16x256xf32>
    %70 = tpu.matmul %69, %67, %cst_46 {dimension_numbers = #tpu.dot_dimension_numbers<[1], [0], [0], [1], [0, 0, 1, 1], [], []>} : vector<16x8xbf16>, vector<8x256xbf16>, vector<16x256xf32> -> vector<16x256xf32>
    %71 = arith.addf %63, %70 : vector<16x256xf32>
    %72 = vector.extract_strided_slice %1 {offsets = [0, 64], sizes = [8, 256], strides = [1, 1]} : vector<8x512xbf16> to vector<8x256xbf16>
    %c0_47 = arith.constant 0 : index
    %c0_48 = arith.constant 0 : index
    %73 = vector.load %arg3[%c0_47, %c0_48] : memref<9x256xbf16, #tpu.memory_space<vmem>>, vector<1x256xbf16>
    %74 = vector.broadcast %73 : vector<1x256xbf16> to vector<8x256xbf16>
    %75 = arith.mulf %72, %74 : vector<8x256xbf16>
    %c9 = arith.constant 9 : index
    %c0_49 = arith.constant 0 : index
    %c0_50 = arith.constant 0 : index
    %76 = vector.load %arg4[%c9, %c0_49, %c0_50] : memref<27x16x8xbf16, #tpu.memory_space<vmem>>, vector<1x16x8xbf16>
    %77 = vector.shape_cast %76 : vector<1x16x8xbf16> to vector<16x8xbf16>
    %cst_51 = arith.constant dense<0.000000e+00> : vector<16x256xf32>
    %78 = tpu.matmul %77, %75, %cst_51 {dimension_numbers = #tpu.dot_dimension_numbers<[1], [0], [0], [1], [0, 0, 1, 1], [], []>} : vector<16x8xbf16>, vector<8x256xbf16>, vector<16x256xf32> -> vector<16x256xf32>
    %79 = arith.addf %71, %78 : vector<16x256xf32>
    %80 = vector.extract_strided_slice %1 {offsets = [0, 65], sizes = [8, 256], strides = [1, 1]} : vector<8x512xbf16> to vector<8x256xbf16>
    %c1_52 = arith.constant 1 : index
    %c0_53 = arith.constant 0 : index
    %81 = vector.load %arg3[%c1_52, %c0_53] : memref<9x256xbf16, #tpu.memory_space<vmem>>, vector<1x256xbf16>
    %82 = vector.broadcast %81 : vector<1x256xbf16> to vector<8x256xbf16>
    %83 = arith.mulf %80, %82 : vector<8x256xbf16>
    %c10 = arith.constant 10 : index
    %c0_54 = arith.constant 0 : index
    %c0_55 = arith.constant 0 : index
    %84 = vector.load %arg4[%c10, %c0_54, %c0_55] : memref<27x16x8xbf16, #tpu.memory_space<vmem>>, vector<1x16x8xbf16>
    %85 = vector.shape_cast %84 : vector<1x16x8xbf16> to vector<16x8xbf16>
    %cst_56 = arith.constant dense<0.000000e+00> : vector<16x256xf32>
    %86 = tpu.matmul %85, %83, %cst_56 {dimension_numbers = #tpu.dot_dimension_numbers<[1], [0], [0], [1], [0, 0, 1, 1], [], []>} : vector<16x8xbf16>, vector<8x256xbf16>, vector<16x256xf32> -> vector<16x256xf32>
    %87 = arith.addf %79, %86 : vector<16x256xf32>
    %88 = vector.extract_strided_slice %1 {offsets = [0, 66], sizes = [8, 256], strides = [1, 1]} : vector<8x512xbf16> to vector<8x256xbf16>
    %c2_57 = arith.constant 2 : index
    %c0_58 = arith.constant 0 : index
    %89 = vector.load %arg3[%c2_57, %c0_58] : memref<9x256xbf16, #tpu.memory_space<vmem>>, vector<1x256xbf16>
    %90 = vector.broadcast %89 : vector<1x256xbf16> to vector<8x256xbf16>
    %91 = arith.mulf %88, %90 : vector<8x256xbf16>
    %c11 = arith.constant 11 : index
    %c0_59 = arith.constant 0 : index
    %c0_60 = arith.constant 0 : index
    %92 = vector.load %arg4[%c11, %c0_59, %c0_60] : memref<27x16x8xbf16, #tpu.memory_space<vmem>>, vector<1x16x8xbf16>
    %93 = vector.shape_cast %92 : vector<1x16x8xbf16> to vector<16x8xbf16>
    %cst_61 = arith.constant dense<0.000000e+00> : vector<16x256xf32>
    %94 = tpu.matmul %93, %91, %cst_61 {dimension_numbers = #tpu.dot_dimension_numbers<[1], [0], [0], [1], [0, 0, 1, 1], [], []>} : vector<16x8xbf16>, vector<8x256xbf16>, vector<16x256xf32> -> vector<16x256xf32>
    %95 = arith.addf %87, %94 : vector<16x256xf32>
    %96 = vector.extract_strided_slice %1 {offsets = [0, 72], sizes = [8, 256], strides = [1, 1]} : vector<8x512xbf16> to vector<8x256xbf16>
    %c3_62 = arith.constant 3 : index
    %c0_63 = arith.constant 0 : index
    %97 = vector.load %arg3[%c3_62, %c0_63] : memref<9x256xbf16, #tpu.memory_space<vmem>>, vector<1x256xbf16>
    %98 = vector.broadcast %97 : vector<1x256xbf16> to vector<8x256xbf16>
    %99 = arith.mulf %96, %98 : vector<8x256xbf16>
    %c12 = arith.constant 12 : index
    %c0_64 = arith.constant 0 : index
    %c0_65 = arith.constant 0 : index
    %100 = vector.load %arg4[%c12, %c0_64, %c0_65] : memref<27x16x8xbf16, #tpu.memory_space<vmem>>, vector<1x16x8xbf16>
    %101 = vector.shape_cast %100 : vector<1x16x8xbf16> to vector<16x8xbf16>
    %cst_66 = arith.constant dense<0.000000e+00> : vector<16x256xf32>
    %102 = tpu.matmul %101, %99, %cst_66 {dimension_numbers = #tpu.dot_dimension_numbers<[1], [0], [0], [1], [0, 0, 1, 1], [], []>} : vector<16x8xbf16>, vector<8x256xbf16>, vector<16x256xf32> -> vector<16x256xf32>
    %103 = arith.addf %95, %102 : vector<16x256xf32>
    %104 = vector.extract_strided_slice %1 {offsets = [0, 73], sizes = [8, 256], strides = [1, 1]} : vector<8x512xbf16> to vector<8x256xbf16>
    %c13 = arith.constant 13 : index
    %c0_67 = arith.constant 0 : index
    %c0_68 = arith.constant 0 : index
    %105 = vector.load %arg4[%c13, %c0_67, %c0_68] : memref<27x16x8xbf16, #tpu.memory_space<vmem>>, vector<1x16x8xbf16>
    %106 = vector.shape_cast %105 : vector<1x16x8xbf16> to vector<16x8xbf16>
    %cst_69 = arith.constant dense<0.000000e+00> : vector<16x256xf32>
    %107 = tpu.matmul %106, %104, %cst_69 {dimension_numbers = #tpu.dot_dimension_numbers<[1], [0], [0], [1], [0, 0, 1, 1], [], []>} : vector<16x8xbf16>, vector<8x256xbf16>, vector<16x256xf32> -> vector<16x256xf32>
    %108 = arith.addf %103, %107 : vector<16x256xf32>
    %109 = vector.extract_strided_slice %1 {offsets = [0, 74], sizes = [8, 256], strides = [1, 1]} : vector<8x512xbf16> to vector<8x256xbf16>
    %c5_70 = arith.constant 5 : index
    %c0_71 = arith.constant 0 : index
    %110 = vector.load %arg3[%c5_70, %c0_71] : memref<9x256xbf16, #tpu.memory_space<vmem>>, vector<1x256xbf16>
    %111 = vector.broadcast %110 : vector<1x256xbf16> to vector<8x256xbf16>
    %112 = arith.mulf %109, %111 : vector<8x256xbf16>
    %c14 = arith.constant 14 : index
    %c0_72 = arith.constant 0 : index
    %c0_73 = arith.constant 0 : index
    %113 = vector.load %arg4[%c14, %c0_72, %c0_73] : memref<27x16x8xbf16, #tpu.memory_space<vmem>>, vector<1x16x8xbf16>
    %114 = vector.shape_cast %113 : vector<1x16x8xbf16> to vector<16x8xbf16>
    %cst_74 = arith.constant dense<0.000000e+00> : vector<16x256xf32>
    %115 = tpu.matmul %114, %112, %cst_74 {dimension_numbers = #tpu.dot_dimension_numbers<[1], [0], [0], [1], [0, 0, 1, 1], [], []>} : vector<16x8xbf16>, vector<8x256xbf16>, vector<16x256xf32> -> vector<16x256xf32>
    %116 = arith.addf %108, %115 : vector<16x256xf32>
    %117 = vector.extract_strided_slice %1 {offsets = [0, 80], sizes = [8, 256], strides = [1, 1]} : vector<8x512xbf16> to vector<8x256xbf16>
    %c6_75 = arith.constant 6 : index
    %c0_76 = arith.constant 0 : index
    %118 = vector.load %arg3[%c6_75, %c0_76] : memref<9x256xbf16, #tpu.memory_space<vmem>>, vector<1x256xbf16>
    %119 = vector.broadcast %118 : vector<1x256xbf16> to vector<8x256xbf16>
    %120 = arith.mulf %117, %119 : vector<8x256xbf16>
    %c15 = arith.constant 15 : index
    %c0_77 = arith.constant 0 : index
    %c0_78 = arith.constant 0 : index
    %121 = vector.load %arg4[%c15, %c0_77, %c0_78] : memref<27x16x8xbf16, #tpu.memory_space<vmem>>, vector<1x16x8xbf16>
    %122 = vector.shape_cast %121 : vector<1x16x8xbf16> to vector<16x8xbf16>
    %cst_79 = arith.constant dense<0.000000e+00> : vector<16x256xf32>
    %123 = tpu.matmul %122, %120, %cst_79 {dimension_numbers = #tpu.dot_dimension_numbers<[1], [0], [0], [1], [0, 0, 1, 1], [], []>} : vector<16x8xbf16>, vector<8x256xbf16>, vector<16x256xf32> -> vector<16x256xf32>
    %124 = arith.addf %116, %123 : vector<16x256xf32>
    %125 = vector.extract_strided_slice %1 {offsets = [0, 81], sizes = [8, 256], strides = [1, 1]} : vector<8x512xbf16> to vector<8x256xbf16>
    %c7_80 = arith.constant 7 : index
    %c0_81 = arith.constant 0 : index
    %126 = vector.load %arg3[%c7_80, %c0_81] : memref<9x256xbf16, #tpu.memory_space<vmem>>, vector<1x256xbf16>
    %127 = vector.broadcast %126 : vector<1x256xbf16> to vector<8x256xbf16>
    %128 = arith.mulf %125, %127 : vector<8x256xbf16>
    %c16 = arith.constant 16 : index
    %c0_82 = arith.constant 0 : index
    %c0_83 = arith.constant 0 : index
    %129 = vector.load %arg4[%c16, %c0_82, %c0_83] : memref<27x16x8xbf16, #tpu.memory_space<vmem>>, vector<1x16x8xbf16>
    %130 = vector.shape_cast %129 : vector<1x16x8xbf16> to vector<16x8xbf16>
    %cst_84 = arith.constant dense<0.000000e+00> : vector<16x256xf32>
    %131 = tpu.matmul %130, %128, %cst_84 {dimension_numbers = #tpu.dot_dimension_numbers<[1], [0], [0], [1], [0, 0, 1, 1], [], []>} : vector<16x8xbf16>, vector<8x256xbf16>, vector<16x256xf32> -> vector<16x256xf32>
    %132 = arith.addf %124, %131 : vector<16x256xf32>
    %133 = vector.extract_strided_slice %1 {offsets = [0, 82], sizes = [8, 256], strides = [1, 1]} : vector<8x512xbf16> to vector<8x256xbf16>
    %c8_85 = arith.constant 8 : index
    %c0_86 = arith.constant 0 : index
    %134 = vector.load %arg3[%c8_85, %c0_86] : memref<9x256xbf16, #tpu.memory_space<vmem>>, vector<1x256xbf16>
    %135 = vector.broadcast %134 : vector<1x256xbf16> to vector<8x256xbf16>
    %136 = arith.mulf %133, %135 : vector<8x256xbf16>
    %c17 = arith.constant 17 : index
    %c0_87 = arith.constant 0 : index
    %c0_88 = arith.constant 0 : index
    %137 = vector.load %arg4[%c17, %c0_87, %c0_88] : memref<27x16x8xbf16, #tpu.memory_space<vmem>>, vector<1x16x8xbf16>
    %138 = vector.shape_cast %137 : vector<1x16x8xbf16> to vector<16x8xbf16>
    %cst_89 = arith.constant dense<0.000000e+00> : vector<16x256xf32>
    %139 = tpu.matmul %138, %136, %cst_89 {dimension_numbers = #tpu.dot_dimension_numbers<[1], [0], [0], [1], [0, 0, 1, 1], [], []>} : vector<16x8xbf16>, vector<8x256xbf16>, vector<16x256xf32> -> vector<16x256xf32>
    %140 = arith.addf %132, %139 : vector<16x256xf32>
    %141 = vector.extract_strided_slice %1 {offsets = [0, 128], sizes = [8, 256], strides = [1, 1]} : vector<8x512xbf16> to vector<8x256xbf16>
    %c0_90 = arith.constant 0 : index
    %c0_91 = arith.constant 0 : index
    %142 = vector.load %arg3[%c0_90, %c0_91] : memref<9x256xbf16, #tpu.memory_space<vmem>>, vector<1x256xbf16>
    %143 = vector.broadcast %142 : vector<1x256xbf16> to vector<8x256xbf16>
    %144 = arith.mulf %141, %143 : vector<8x256xbf16>
    %c18 = arith.constant 18 : index
    %c0_92 = arith.constant 0 : index
    %c0_93 = arith.constant 0 : index
    %145 = vector.load %arg4[%c18, %c0_92, %c0_93] : memref<27x16x8xbf16, #tpu.memory_space<vmem>>, vector<1x16x8xbf16>
    %146 = vector.shape_cast %145 : vector<1x16x8xbf16> to vector<16x8xbf16>
    %cst_94 = arith.constant dense<0.000000e+00> : vector<16x256xf32>
    %147 = tpu.matmul %146, %144, %cst_94 {dimension_numbers = #tpu.dot_dimension_numbers<[1], [0], [0], [1], [0, 0, 1, 1], [], []>} : vector<16x8xbf16>, vector<8x256xbf16>, vector<16x256xf32> -> vector<16x256xf32>
    %148 = arith.addf %140, %147 : vector<16x256xf32>
    %149 = vector.extract_strided_slice %1 {offsets = [0, 129], sizes = [8, 256], strides = [1, 1]} : vector<8x512xbf16> to vector<8x256xbf16>
    %c1_95 = arith.constant 1 : index
    %c0_96 = arith.constant 0 : index
    %150 = vector.load %arg3[%c1_95, %c0_96] : memref<9x256xbf16, #tpu.memory_space<vmem>>, vector<1x256xbf16>
    %151 = vector.broadcast %150 : vector<1x256xbf16> to vector<8x256xbf16>
    %152 = arith.mulf %149, %151 : vector<8x256xbf16>
    %c19 = arith.constant 19 : index
    %c0_97 = arith.constant 0 : index
    %c0_98 = arith.constant 0 : index
    %153 = vector.load %arg4[%c19, %c0_97, %c0_98] : memref<27x16x8xbf16, #tpu.memory_space<vmem>>, vector<1x16x8xbf16>
    %154 = vector.shape_cast %153 : vector<1x16x8xbf16> to vector<16x8xbf16>
    %cst_99 = arith.constant dense<0.000000e+00> : vector<16x256xf32>
    %155 = tpu.matmul %154, %152, %cst_99 {dimension_numbers = #tpu.dot_dimension_numbers<[1], [0], [0], [1], [0, 0, 1, 1], [], []>} : vector<16x8xbf16>, vector<8x256xbf16>, vector<16x256xf32> -> vector<16x256xf32>
    %156 = arith.addf %148, %155 : vector<16x256xf32>
    %157 = vector.extract_strided_slice %1 {offsets = [0, 130], sizes = [8, 256], strides = [1, 1]} : vector<8x512xbf16> to vector<8x256xbf16>
    %c2_100 = arith.constant 2 : index
    %c0_101 = arith.constant 0 : index
    %158 = vector.load %arg3[%c2_100, %c0_101] : memref<9x256xbf16, #tpu.memory_space<vmem>>, vector<1x256xbf16>
    %159 = vector.broadcast %158 : vector<1x256xbf16> to vector<8x256xbf16>
    %160 = arith.mulf %157, %159 : vector<8x256xbf16>
    %c20 = arith.constant 20 : index
    %c0_102 = arith.constant 0 : index
    %c0_103 = arith.constant 0 : index
    %161 = vector.load %arg4[%c20, %c0_102, %c0_103] : memref<27x16x8xbf16, #tpu.memory_space<vmem>>, vector<1x16x8xbf16>
    %162 = vector.shape_cast %161 : vector<1x16x8xbf16> to vector<16x8xbf16>
    %cst_104 = arith.constant dense<0.000000e+00> : vector<16x256xf32>
    %163 = tpu.matmul %162, %160, %cst_104 {dimension_numbers = #tpu.dot_dimension_numbers<[1], [0], [0], [1], [0, 0, 1, 1], [], []>} : vector<16x8xbf16>, vector<8x256xbf16>, vector<16x256xf32> -> vector<16x256xf32>
    %164 = arith.addf %156, %163 : vector<16x256xf32>
    %165 = vector.extract_strided_slice %1 {offsets = [0, 136], sizes = [8, 256], strides = [1, 1]} : vector<8x512xbf16> to vector<8x256xbf16>
    %c3_105 = arith.constant 3 : index
    %c0_106 = arith.constant 0 : index
    %166 = vector.load %arg3[%c3_105, %c0_106] : memref<9x256xbf16, #tpu.memory_space<vmem>>, vector<1x256xbf16>
    %167 = vector.broadcast %166 : vector<1x256xbf16> to vector<8x256xbf16>
    %168 = arith.mulf %165, %167 : vector<8x256xbf16>
    %c21 = arith.constant 21 : index
    %c0_107 = arith.constant 0 : index
    %c0_108 = arith.constant 0 : index
    %169 = vector.load %arg4[%c21, %c0_107, %c0_108] : memref<27x16x8xbf16, #tpu.memory_space<vmem>>, vector<1x16x8xbf16>
    %170 = vector.shape_cast %169 : vector<1x16x8xbf16> to vector<16x8xbf16>
    %cst_109 = arith.constant dense<0.000000e+00> : vector<16x256xf32>
    %171 = tpu.matmul %170, %168, %cst_109 {dimension_numbers = #tpu.dot_dimension_numbers<[1], [0], [0], [1], [0, 0, 1, 1], [], []>} : vector<16x8xbf16>, vector<8x256xbf16>, vector<16x256xf32> -> vector<16x256xf32>
    %172 = arith.addf %164, %171 : vector<16x256xf32>
    %173 = vector.extract_strided_slice %1 {offsets = [0, 137], sizes = [8, 256], strides = [1, 1]} : vector<8x512xbf16> to vector<8x256xbf16>
    %c22 = arith.constant 22 : index
    %c0_110 = arith.constant 0 : index
    %c0_111 = arith.constant 0 : index
    %174 = vector.load %arg4[%c22, %c0_110, %c0_111] : memref<27x16x8xbf16, #tpu.memory_space<vmem>>, vector<1x16x8xbf16>
    %175 = vector.shape_cast %174 : vector<1x16x8xbf16> to vector<16x8xbf16>
    %cst_112 = arith.constant dense<0.000000e+00> : vector<16x256xf32>
    %176 = tpu.matmul %175, %173, %cst_112 {dimension_numbers = #tpu.dot_dimension_numbers<[1], [0], [0], [1], [0, 0, 1, 1], [], []>} : vector<16x8xbf16>, vector<8x256xbf16>, vector<16x256xf32> -> vector<16x256xf32>
    %177 = arith.addf %172, %176 : vector<16x256xf32>
    %178 = vector.extract_strided_slice %1 {offsets = [0, 138], sizes = [8, 256], strides = [1, 1]} : vector<8x512xbf16> to vector<8x256xbf16>
    %c5_113 = arith.constant 5 : index
    %c0_114 = arith.constant 0 : index
    %179 = vector.load %arg3[%c5_113, %c0_114] : memref<9x256xbf16, #tpu.memory_space<vmem>>, vector<1x256xbf16>
    %180 = vector.broadcast %179 : vector<1x256xbf16> to vector<8x256xbf16>
    %181 = arith.mulf %178, %180 : vector<8x256xbf16>
    %c23 = arith.constant 23 : index
    %c0_115 = arith.constant 0 : index
    %c0_116 = arith.constant 0 : index
    %182 = vector.load %arg4[%c23, %c0_115, %c0_116] : memref<27x16x8xbf16, #tpu.memory_space<vmem>>, vector<1x16x8xbf16>
    %183 = vector.shape_cast %182 : vector<1x16x8xbf16> to vector<16x8xbf16>
    %cst_117 = arith.constant dense<0.000000e+00> : vector<16x256xf32>
    %184 = tpu.matmul %183, %181, %cst_117 {dimension_numbers = #tpu.dot_dimension_numbers<[1], [0], [0], [1], [0, 0, 1, 1], [], []>} : vector<16x8xbf16>, vector<8x256xbf16>, vector<16x256xf32> -> vector<16x256xf32>
    %185 = arith.addf %177, %184 : vector<16x256xf32>
    %186 = vector.extract_strided_slice %1 {offsets = [0, 144], sizes = [8, 256], strides = [1, 1]} : vector<8x512xbf16> to vector<8x256xbf16>
    %c6_118 = arith.constant 6 : index
    %c0_119 = arith.constant 0 : index
    %187 = vector.load %arg3[%c6_118, %c0_119] : memref<9x256xbf16, #tpu.memory_space<vmem>>, vector<1x256xbf16>
    %188 = vector.broadcast %187 : vector<1x256xbf16> to vector<8x256xbf16>
    %189 = arith.mulf %186, %188 : vector<8x256xbf16>
    %c24 = arith.constant 24 : index
    %c0_120 = arith.constant 0 : index
    %c0_121 = arith.constant 0 : index
    %190 = vector.load %arg4[%c24, %c0_120, %c0_121] : memref<27x16x8xbf16, #tpu.memory_space<vmem>>, vector<1x16x8xbf16>
    %191 = vector.shape_cast %190 : vector<1x16x8xbf16> to vector<16x8xbf16>
    %cst_122 = arith.constant dense<0.000000e+00> : vector<16x256xf32>
    %192 = tpu.matmul %191, %189, %cst_122 {dimension_numbers = #tpu.dot_dimension_numbers<[1], [0], [0], [1], [0, 0, 1, 1], [], []>} : vector<16x8xbf16>, vector<8x256xbf16>, vector<16x256xf32> -> vector<16x256xf32>
    %193 = arith.addf %185, %192 : vector<16x256xf32>
    %194 = vector.extract_strided_slice %1 {offsets = [0, 145], sizes = [8, 256], strides = [1, 1]} : vector<8x512xbf16> to vector<8x256xbf16>
    %c7_123 = arith.constant 7 : index
    %c0_124 = arith.constant 0 : index
    %195 = vector.load %arg3[%c7_123, %c0_124] : memref<9x256xbf16, #tpu.memory_space<vmem>>, vector<1x256xbf16>
    %196 = vector.broadcast %195 : vector<1x256xbf16> to vector<8x256xbf16>
    %197 = arith.mulf %194, %196 : vector<8x256xbf16>
    %c25 = arith.constant 25 : index
    %c0_125 = arith.constant 0 : index
    %c0_126 = arith.constant 0 : index
    %198 = vector.load %arg4[%c25, %c0_125, %c0_126] : memref<27x16x8xbf16, #tpu.memory_space<vmem>>, vector<1x16x8xbf16>
    %199 = vector.shape_cast %198 : vector<1x16x8xbf16> to vector<16x8xbf16>
    %cst_127 = arith.constant dense<0.000000e+00> : vector<16x256xf32>
    %200 = tpu.matmul %199, %197, %cst_127 {dimension_numbers = #tpu.dot_dimension_numbers<[1], [0], [0], [1], [0, 0, 1, 1], [], []>} : vector<16x8xbf16>, vector<8x256xbf16>, vector<16x256xf32> -> vector<16x256xf32>
    %201 = arith.addf %193, %200 : vector<16x256xf32>
    %202 = vector.extract_strided_slice %1 {offsets = [0, 146], sizes = [8, 256], strides = [1, 1]} : vector<8x512xbf16> to vector<8x256xbf16>
    %c8_128 = arith.constant 8 : index
    %c0_129 = arith.constant 0 : index
    %203 = vector.load %arg3[%c8_128, %c0_129] : memref<9x256xbf16, #tpu.memory_space<vmem>>, vector<1x256xbf16>
    %204 = vector.broadcast %203 : vector<1x256xbf16> to vector<8x256xbf16>
    %205 = arith.mulf %202, %204 : vector<8x256xbf16>
    %c26 = arith.constant 26 : index
    %c0_130 = arith.constant 0 : index
    %c0_131 = arith.constant 0 : index
    %206 = vector.load %arg4[%c26, %c0_130, %c0_131] : memref<27x16x8xbf16, #tpu.memory_space<vmem>>, vector<1x16x8xbf16>
    %207 = vector.shape_cast %206 : vector<1x16x8xbf16> to vector<16x8xbf16>
    %cst_132 = arith.constant dense<0.000000e+00> : vector<16x256xf32>
    %208 = tpu.matmul %207, %205, %cst_132 {dimension_numbers = #tpu.dot_dimension_numbers<[1], [0], [0], [1], [0, 0, 1, 1], [], []>} : vector<16x8xbf16>, vector<8x256xbf16>, vector<16x256xf32> -> vector<16x256xf32>
    %209 = arith.addf %201, %208 : vector<16x256xf32>
    %c0_133 = arith.constant 0 : index
    %c0_134 = arith.constant 0 : index
    %210 = vector.load %arg5[%c0_133, %c0_134] : memref<16x3xf32, #tpu.memory_space<vmem>>, vector<16x1xf32>
    %c0_135 = arith.constant 0 : index
    %c1_136 = arith.constant 1 : index
    %211 = vector.load %arg5[%c0_135, %c1_136] : memref<16x3xf32, #tpu.memory_space<vmem>>, vector<16x1xf32>
    %c0_137 = arith.constant 0 : index
    %c2_138 = arith.constant 2 : index
    %212 = vector.load %arg5[%c0_137, %c2_138] : memref<16x3xf32, #tpu.memory_space<vmem>>, vector<1x1xf32>
    %213 = vector.broadcast %210 : vector<16x1xf32> to vector<16x256xf32>
    %214 = arith.addf %209, %213 : vector<16x256xf32>
    %cst_139 = arith.constant 0.000000e+00 : f32
    %215 = vector.broadcast %cst_139 : f32 to vector<16x256xf32>
    %216 = arith.maximumf %214, %215 : vector<16x256xf32>
    %217 = vector.broadcast %211 : vector<16x1xf32> to vector<16x256xf32>
    %218 = arith.mulf %216, %217 : vector<16x256xf32>
    %cst_140 = arith.constant dense<0.000000e+00> : vector<256xf32>
    %219 = vector.multi_reduction <add>, %218, %cst_140 [0] : vector<16x256xf32> to vector<256xf32>
    %220 = vector.shape_cast %219 : vector<256xf32> to vector<1x256xf32>
    %221 = vector.broadcast %212 : vector<1x1xf32> to vector<1x256xf32>
    %222 = arith.addf %220, %221 : vector<1x256xf32>
    %223 = arith.negf %222 : vector<1x256xf32>
    %224 = math.exp %223 : vector<1x256xf32>
    %cst_141 = arith.constant 1.000000e+00 : f32
    %225 = vector.broadcast %cst_141 : f32 to vector<1x256xf32>
    %226 = arith.addf %225, %224 : vector<1x256xf32>
    %227 = arith.divf %225, %226 : vector<1x256xf32>
    %228 = vector.extract_strided_slice %1 {offsets = [4, 73], sizes = [4, 256], strides = [1, 1]} : vector<8x512xbf16> to vector<4x256xbf16>
    %229 = arith.extf %228 : vector<4x256xbf16> to vector<4x256xf32>
    %230 = vector.broadcast %227 : vector<1x256xf32> to vector<4x256xf32>
    %231 = arith.mulf %229, %230 : vector<4x256xf32>
    %c0_142 = arith.constant 0 : index
    %c0_143 = arith.constant 0 : index
    %c0_144 = arith.constant 0 : index
    %c0_145 = arith.constant 0 : index
    %232 = vector.load %arg6[%c0_142, %c0_143, %c0_144, %c0_145] : memref<1x1x4x256xf32, #tpu.memory_space<vmem>>, vector<1x1x4x256xf32>
    %233 = vector.shape_cast %232 : vector<1x1x4x256xf32> to vector<4x256xf32>
    %234 = vector.shape_cast %231 : vector<4x256xf32> to vector<1x1x4x256xf32>
    tpu.vector_store %arg6[%c0_142, %c0_143, %c0_144, %c0_145], %234 {strides = array<i32>} : memref<1x1x4x256xf32, #tpu.memory_space<vmem>>, vector<1x1x4x256xf32>,
    return
  }
  func.func @transform_0(%arg0: i32, %arg1: i32) -> (i32, i32, i32, i32) {
    %c0_i32 = arith.constant 0 : i32
    %c0_i32_0 = arith.constant 0 : i32
    %c0_i32_1 = arith.constant 0 : i32
    return %arg0, %arg1, %c0_i32, %c0_i32_0 : i32, i32, i32, i32
  }
  func.func @transform_1(%arg0: i32, %arg1: i32) -> (i32, i32) {
    %c0_i32 = arith.constant 0 : i32
    %c0_i32_0 = arith.constant 0 : i32
    %c0_i32_1 = arith.constant 0 : i32
    return %c0_i32, %c0_i32_0 : i32, i32
  }
  func.func @transform_2(%arg0: i32, %arg1: i32) -> (i32, i32, i32) {
    %c0_i32 = arith.constant 0 : i32
    %c0_i32_0 = arith.constant 0 : i32
    %c0_i32_1 = arith.constant 0 : i32
    %c0_i32_2 = arith.constant 0 : i32
    return %c0_i32, %c0_i32_0, %c0_i32_1 : i32, i32, i32
  }
  func.func @transform_3(%arg0: i32, %arg1: i32) -> (i32, i32) {
    %c0_i32 = arith.constant 0 : i32
    %c0_i32_0 = arith.constant 0 : i32
    %c0_i32_1 = arith.constant 0 : i32
    return %c0_i32, %c0_i32_0 : i32, i32
  }
  func.func @transform_4(%arg0: i32, %arg1: i32) -> (i32, i32, i32, i32) {
    %c0_i32 = arith.constant 0 : i32
    %c0_i32_0 = arith.constant 0 : i32
    %c0_i32_1 = arith.constant 0 : i32
    return %arg0, %arg1, %c0_i32, %c0_i32_0 : i32, i32, i32, i32
  }
}

</mosaic_0001>

<llo_original>
// kernel: tpu_custom_call.1
$region0: #{tpu_custom_call.1}
  #allocation0 [shape = 'u32[]', space=smem, size = 0x4, offset = 0x4, fixed_abs, tag = 'smem constant byte address 0x4 - core index']
  #allocation1 [shape = 'u32[144,128]{1,0:T(1,128)}', space=vmem, size = 0x12000, scoped, tag = 'internal scratch']
  %s0 = inlined_call_operand.vmem [shape: bf16[2,2,8,512], index: 0, kind: input, shape index: {}]
  %s1 = inlined_call_operand.vmem [shape: bf16[9,256], index: 1, kind: input, shape index: {}]
  %s2 = inlined_call_operand.vmem [shape: bf16[27,16,8], index: 2, kind: input, shape index: {}]
  %s3 = inlined_call_operand.vmem [shape: f32[16,3], index: 3, kind: input, shape index: {}]
  %s4 = inlined_call_operand.hbm [shape: f32[2,2,4,256], index: 4, kind: output, shape index: {}]
  %s5 = sld [smem:[#allocation0]]
  $region49: #{tpu_custom_call.1} parent=0
    _
  %s7 = ssub.s32 1, %s5
  %s8 = scalar_select 0, %s7, %s5
  $region1: #{tpu_custom_call.1} parent=0
    #allocation2 [shape = 'u8[8192]{0}', space=vmem, size = 0x2000, scoped, tag = 'output window, operand 0']
    #allocation3 [shape = 's32[2]{0}', space=sflag, size = 0x8, scoped, tag = 'scoped memory for tpu_custom_call.1']
    %9 = vsyncpa [#allocation3], 0
    %s10 = scalar_lea.sflag [#allocation3], 1
    %11 = vsyncpa %s10, 0
    loop: start=0, step=1, limit=6
    $region2: #{tpu_custom_call.1} parent=1 // loop_pre_header
      _
    $region3: #{tpu_custom_call.1} parent=1 // loop_header
      %s13 = sphi 0, %s17
      %p14 = scmp.ge.s32.totalorder %s13, 6
      %s20 = sphi 0, %s32
      %s21 = sphi 0, %s28
      %s22 = sphi 0, %s20
      %s23 = sphi 0, %s21
      %s24 = sphi 0, %s22
      %s25 = sphi 0, %s23
      %s37 = sphi 0, %s39
      %s40 = sphi 0, %s37
      %s41 = sphi 0, %s40
      %s57 = sphi 0, %s41
      %s61 = sphi 0, %s61
      %s63 = sphi 0, %s61
      %s64 = sphi 0, %s63
      %s78 = sphi 0, %s64
      %s82 = sphi 0, %s82
      %s84 = sphi 0, %s82
      %s85 = sphi 0, %s84
      %s99 = sphi 0, %s85
      %s103 = sphi 0, %s103
      %s105 = sphi 0, %s103
      %s106 = sphi 0, %s105
      %s120 = sphi 0, %s106
      %s128 = sphi 0, %s130
      %s131 = sphi 0, %s128
      %s132 = sphi 0, %s131
      %s148 = sphi 0, %s132
    $region4: #{tpu_custom_call.1} parent=1 // loop_header_branch
      %16 = sbr.rel (%p14) target = $region8
    $region5: #{tpu_custom_call.1} parent=1 // loop_body
      %s18 = ssub.s32 %s13, 1
      %s19 = ssub.s32 %s13, 2
      %s26 = sadd.s32 1, %s21
      %p27 = scmp.ge.s32.totalorder %s26, 2
      %s28 = scalar_select %p27, 0, %s26
      %s29 = sadd.s32 1, %s20
      %s30 = scalar_select %p27, %s29, %s20
      %p31 = scmp.ge.s32.totalorder %s30, 2
      %s32 = scalar_select %p31, 0, %s30
      %s33 = ssub.s32 %s20, %s32
      %s34 = ssub.s32 %s21, %s28
      %s35 = sor.u32 %s33, %s34
      %p36 = scmp.eq.s32.totalorder %s35, 0
      %s38 = sadd.s32 %s37, 1
      %s39 = scalar_select %p36, %s37, %s38
      %p42 = pneg %p36
      %p43 = scmp.eq.s32.totalorder %s13, 3
      %p44 = por %p42, %p43
      %p45 = scmp.ne.s32.totalorder %s37, %s40
      %p46 = scmp.eq.s32.totalorder %s13, 0
      %p47 = por %p45, %p46
      %p48 = scmp.ne.s32.totalorder %s37, %s40
      %p49 = scmp.eq.s32.totalorder %s18, 3
      %p50 = por %p48, %p49
      %p51 = scmp.ne.s32.totalorder %s40, %s41
      %p52 = scmp.eq.s32.totalorder %s18, 0
      %p53 = por %p51, %p52
      %p54 = scmp.ne.s32.totalorder %s40, %s41
      %p55 = scmp.eq.s32.totalorder %s19, 3
      %p56 = por %p54, %p55
      %p58 = scmp.ne.s32.totalorder %s41, %s57
      %p59 = scmp.eq.s32.totalorder %s19, 0
      %p60 = por %p58, %p59
      %s62 = sadd.s32 %s61, 1
      %p65 = scmp.eq.s32.totalorder %s13, 3
      %p66 = scmp.ne.s32.totalorder %s61, %s63
      %p67 = scmp.eq.s32.totalorder %s13, 0
      %p68 = por %p66, %p67
      %p69 = scmp.ne.s32.totalorder %s61, %s63
      %p70 = scmp.eq.s32.totalorder %s18, 3
      %p71 = por %p69, %p70
      %p72 = scmp.ne.s32.totalorder %s63, %s64
      %p73 = scmp.eq.s32.totalorder %s18, 0
      %p74 = por %p72, %p73
      %p75 = scmp.ne.s32.totalorder %s63, %s64
      %p76 = scmp.eq.s32.totalorder %s19, 3
      %p77 = por %p75, %p76
      %p79 = scmp.ne.s32.totalorder %s64, %s78
      %p80 = scmp.eq.s32.totalorder %s19, 0
      %p81 = por %p79, %p80
      %s83 = sadd.s32 %s82, 1
      %p86 = scmp.eq.s32.totalorder %s13, 3
      %p87 = scmp.ne.s32.totalorder %s82, %s84
      %p88 = scmp.eq.s32.totalorder %s13, 0
      %p89 = por %p87, %p88
      %p90 = scmp.ne.s32.totalorder %s82, %s84
      %p91 = scmp.eq.s32.totalorder %s18, 3
      %p92 = por %p90, %p91
      %p93 = scmp.ne.s32.totalorder %s84, %s85
      %p94 = scmp.eq.s32.totalorder %s18, 0
      %p95 = por %p93, %p94
      %p96 = scmp.ne.s32.totalorder %s84, %s85
      %p97 = scmp.eq.s32.totalorder %s19, 3
      %p98 = por %p96, %p97
      %p100 = scmp.ne.s32.totalorder %s85, %s99
      %p101 = scmp.eq.s32.totalorder %s19, 0
      %p102 = por %p100, %p101
      %s104 = sadd.s32 %s103, 1
      %p107 = scmp.eq.s32.totalorder %s13, 3
      %p108 = scmp.ne.s32.totalorder %s103, %s105
      %p109 = scmp.eq.s32.totalorder %s13, 0
      %p110 = por %p108, %p109
      %p111 = scmp.ne.s32.totalorder %s103, %s105
      %p112 = scmp.eq.s32.totalorder %s18, 3
      %p113 = por %p111, %p112
      %p114 = scmp.ne.s32.totalorder %s105, %s106
      %p115 = scmp.eq.s32.totalorder %s18, 0
      %p116 = por %p114, %p115
      %p117 = scmp.ne.s32.totalorder %s105, %s106
      %p118 = scmp.eq.s32.totalorder %s19, 3
      %p119 = por %p117, %p118
      %p121 = scmp.ne.s32.totalorder %s106, %s120
      %p122 = scmp.eq.s32.totalorder %s19, 0
      %p123 = por %p121, %p122
      %s124 = ssub.s32 %s20, %s32
      %s125 = ssub.s32 %s21, %s28
      %s126 = sor.u32 %s124, %s125
      %p127 = scmp.eq.s32.totalorder %s126, 0
      %s129 = sadd.s32 %s128, 1
      %s130 = scalar_select %p127, %s128, %s129
      %p133 = pneg %p127
      %p134 = scmp.eq.s32.totalorder %s13, 3
      %p135 = por %p133, %p134
      %p136 = scmp.ne.s32.totalorder %s128, %s131
      %p137 = scmp.eq.s32.totalorder %s13, 0
      %p138 = por %p136, %p137
      %p139 = scmp.ne.s32.totalorder %s128, %s131
      %p140 = scmp.eq.s32.totalorder %s18, 3
      %p141 = por %p139, %p140
      %p142 = scmp.ne.s32.totalorder %s131, %s132
      %p143 = scmp.eq.s32.totalorder %s18, 0
      %p144 = por %p142, %p143
      %p145 = scmp.ne.s32.totalorder %s131, %s132
      %p146 = scmp.eq.s32.totalorder %s19, 3
      %p147 = por %p145, %p146
      %p149 = scmp.ne.s32.totalorder %s132, %s148
      %p150 = scmp.eq.s32.totalorder %s19, 0
      %p151 = por %p149, %p150
      %p152 = scmp.le.s32.totalorder 1, %s13
      %p153 = scmp.lt.s32.totalorder %s13, 5
      %p154 = pnand %p152, %p153
      %p155 = pneg %p154
      // Predicated region
      $region9: #{tpu_custom_call.1} parent=5 // pred_check
        _
      $region10: #{tpu_custom_call.1} parent=5 // pred_check_branch
        %157 = sbr.rel (%p154) target = $region12
      $region11: #{tpu_custom_call.1} parent=5 // pred_region
        %s158 = ssub.s32 %s13, 1
        // Predicated region
        $region13: #{tpu_custom_call.1} parent=11 // pred_check
          %p159 = pneg %p74
        $region14: #{tpu_custom_call.1} parent=11 // pred_check_branch
          %161 = sbr.rel (%p159) target = $region16
        $region15: #{tpu_custom_call.1} parent=11 // pred_region
          _
        $region16: #{tpu_custom_call.1} parent=11 // pred_fallthru
          _
        // Predicated region
        $region17: #{tpu_custom_call.1} parent=11 // pred_check
          %p162 = pneg %p95
        $region18: #{tpu_custom_call.1} parent=11 // pred_check_branch
          %164 = sbr.rel (%p162) target = $region20
        $region19: #{tpu_custom_call.1} parent=11 // pred_region
          _
        $region20: #{tpu_custom_call.1} parent=11 // pred_fallthru
          _
        // Predicated region
        $region21: #{tpu_custom_call.1} parent=11 // pred_check
          %p165 = pneg %p116
        $region22: #{tpu_custom_call.1} parent=11 // pred_check_branch
          %167 = sbr.rel (%p165) target = $region24
        $region23: #{tpu_custom_call.1} parent=11 // pred_region
          _
        $region24: #{tpu_custom_call.1} parent=11 // pred_fallthru
          _
      $region12: #{tpu_custom_call.1} parent=5 // pred_fallthru
        _
      %p168 = scmp.lt.s32.totalorder %s13, 4
      // Predicated region
      $region25: #{tpu_custom_call.1} parent=5 // pred_check
        %p169 = pneg %p168
      $region26: #{tpu_custom_call.1} parent=5 // pred_check_branch
        %171 = sbr.rel (%p169) target = $region28
      $region27: #{tpu_custom_call.1} parent=5 // pred_region
        // Predicated region
        $region29: #{tpu_custom_call.1} parent=27 // pred_check
          %p172 = pneg %p47
        $region30: #{tpu_custom_call.1} parent=27 // pred_check_branch
          %174 = sbr.rel (%p172) target = $region32
        $region31: #{tpu_custom_call.1} parent=27 // pred_region
          %p175 = scmp.lt.s32.totalorder %s20, 1
          %s176 = scalar_select %p175, %s20, 1
          %p177 = scmp.lt.s32.totalorder %s21, 1
          %s178 = scalar_select %p177, %s21, 1
          %s179 = smul.addr %s178, 4
          %s180 = smul.addr %s176, 8
          %s181 = sadd.s32 %s179, %s180
          %s182 = smul.addr %s181, 4
          %s183 = scalar_lea.vmem %s0, %s182
        $region32: #{tpu_custom_call.1} parent=27 // pred_fallthru
          _
      $region28: #{tpu_custom_call.1} parent=5 // pred_fallthru
        _
      %p184 = scmp.le.s32.totalorder 1, %s13
      %p185 = scmp.lt.s32.totalorder %s13, 5
      %p186 = pnand %p184, %p185
      %p187 = pneg %p186
      // Predicated region
      $region33: #{tpu_custom_call.1} parent=5 // pred_check
        _
      $region34: #{tpu_custom_call.1} parent=5 // pred_check_branch
        %189 = sbr.rel (%p186) target = $region36
      $region35: #{tpu_custom_call.1} parent=5 // pred_region
        %s190 = ssub.s32 %s13, 1
        %p191 = scmp.lt.s32.totalorder %s22, 1
        %s192 = scalar_select %p191, %s22, 1
        %p193 = scmp.lt.s32.totalorder %s23, 1
        %s194 = scalar_select %p193, %s23, 1
        %s195 = smul.addr %s194, 4
        %s196 = smul.addr %s192, 8
        %s197 = sadd.s32 %s195, %s196
        %s198 = smul.addr %s197, 4
        %s199 = scalar_lea.vmem %s0, %s198
        %p200 = pneg %p53
        %p201 = pneg %p50
        %p202 = pneg %p74
        %p203 = pneg %p71
        %p204 = pneg %p95
        %p205 = pneg %p92
        %p206 = pneg %p116
        %p207 = pneg %p113
        %p208 = pneg %p144
        %p209 = pneg %p141
        %s210 = sand.u32 %s131, 1
        %s211 = scalar_lea.sflag [#allocation3], %s210
        %s212 = sand.u32 %s131, 1
        %s213 = smul.addr %s212, 8
        %s214 = scalar_lea.vmem [#allocation2], %s213
        %p215 = scmp.lt.s32.totalorder %s22, 1
        %s216 = scalar_select %p215, %s22, 1
        %p217 = scmp.lt.s32.totalorder %s23, 1
        %s218 = scalar_select %p217, %s23, 1
        %s219 = smul.addr %s218, 4
        %s220 = smul.addr %s216, 8
        %s221 = sadd.s32 %s219, %s220
        %s222 = smul.addr %s221, 4
        %s223 = scalar_lea.vmem %s0, %s222
        %v225 = vld [vmem:[%s223] sm:$0xff]
        %v226 = vld [vmem:[%s223 + $0x8] sm:$0xff]
        %v227 = vld [vmem:[%s1] sm:$0x11]
        %v229 = vunpack.c.l.b16 %v227
        %v230 = vunpack.c.h.b16 %v227
        %v231 = vpack.c.b16 %v229, %v229
        %v232 = vpack.c.b16 %v230, %v230
        %v234 = vpack.i.b16 %v231, %v231
        %v236 = vlaneseq
        %v237 = vshrl.u32 %v236, 7
        %v238 = vsub.s32 0, %v237
        %v239 = vrot.slane %v234, %v238
        %v241 = vpack.i.b16 %v232, %v232
        %v243 = vlaneseq
        %v244 = vshrl.u32 %v243, 7
        %v245 = vsub.s32 0, %v244
        %v246 = vrot.slane %v241, %v245
        %v249 = vunpack.c.l.b16 %v239
        %v250 = vunpack.c.l.b16 %v246
        %v251 = vpack.c.b16 %v250, %v249
        %v253 = vmul.bf16 %v225, %v251
        %v254 = vld [vmem:[%s2] sm:$0xf]
        %v255 = vld [vmem:[%s2 + $0x4] sm:$0xf]
        %v256 = vshrl.u32 %v231, 16
        %v257 = vpack.i.b16 %v256, %v256
        %v259 = vlaneseq
        %v260 = vshrl.u32 %v259, 7
        %v261 = vsub.s32 0, %v260
        %v262 = vrot.slane %v257, %v261
        %v263 = vshrl.u32 %v232, 16
        %v264 = vpack.i.b16 %v263, %v263
        %v266 = vlaneseq
        %v267 = vshrl.u32 %v266, 7
        %v268 = vsub.s32 0, %v267
        %v269 = vrot.slane %v264, %v268
        %v272 = vunpack.c.l.b16 %v262
        %v273 = vunpack.c.l.b16 %v269
        %v274 = vpack.c.b16 %v273, %v272
        %275 = vrot.lane.b32.xlu0 %v274, 1
        %v276 = vpop.permute.xlu0 %275
        %v277 = vrot.slane %v276, 4
        %vm278 = vcmask 7168
        %v279 = vsel %vm278, %v277, %v276
        %v282 = vmul.bf16 %v225, %v279
        %v283 = vmul.bf16 %v226, %v277
        %s284 = scalar_lea.vmem %s2, 8
        %v285 = vld [vmem:[%s284] sm:$0xf]
        %v286 = vld [vmem:[%s284 + $0x4] sm:$0xf]
        %v289 = vunpack.c.l.b16 %v285
        %v290 = vunpack.c.l.b16 %v286
        %v291 = vpack.c.b16 %v290, %v289
        %v294 = vunpack.c.l.b16 %v282
        %v295 = vunpack.c.h.b16 %v282
        %v296 = vunpack.c.l.b16 %v283
        %v297 = vpack.c.b16 %v294, %v294
        %v298 = vpack.c.b16 %v295, %v295
        %v299 = vpack.c.b16 %v296, %v296
        %300 = vrot.lane.b32.xlu0 %v297, 127
        %v301 = vpop.permute.xlu0 %300
        %302 = vrot.lane.b32.xlu0 %v298, 127
        %v303 = vpop.permute.xlu0 %302
        %304 = vrot.lane.b32.xlu0 %v299, 127
        %v305 = vpop.permute.xlu0 %304
        %vm306 = vcmask 1039360
        %v307 = vsel %vm306, %v301, %v303
        %v308 = vsel %vm306, %v303, %v305
        %vm309 = vcmask 64512
        %v311 = vsel %vm309, %v291, 0
        %vm313 = vcmask 1043456
        %v315 = vsel %vm313, %v307, 0
        %v318 = vsel %vm313, %v308, 0
        %320 = vmatprep.subr.bf16.mxu0 %v318
        %321 = vmatpush1.bf16.msra.mxu0 %v315
        %322 = vmatprep.subr.bf16.mxu0 0
        %323 = vmatpush1.bf16.msra.mxu0 0
        %324 = vmatprep.subr.bf16.mxu0 0
        %325 = vmatpush1.bf16.msra.mxu0 0
        %326 = vmatprep.subr.bf16.mxu0 0
        %327 = vmatpush1.bf16.msra.mxu0 0
        %328 = vmatprep.subr.bf16.mxu0 0
        %329 = vmatpush1.bf16.msra.mxu0 0
        %330 = vmatprep.subr.bf16.mxu0 0
        %331 = vmatpush1.bf16.msra.mxu0 0
        %332 = vmatprep.subr.bf16.mxu0 0
        %333 = vmatpush1.bf16.msra.mxu0 0
        %334 = vmatprep.subr.bf16.mxu0 0
        %335 = vmatpush1.bf16.msra.mxu0 0
        %336 = vmatprep.subr.bf16.mxu0 0
        %337 = vmatpush1.bf16.msra.mxu0 0
        %338 = vmatprep.subr.bf16.mxu0 0
        %339 = vmatpush1.bf16.msra.mxu0 0
        %340 = vmatprep.subr.bf16.mxu0 0
        %341 = vmatpush1.bf16.msra.mxu0 0
        %342 = vmatprep.subr.bf16.mxu0 0
        %343 = vmatpush1.bf16.msra.mxu0 0
        %344 = vmatprep.subr.bf16.mxu0 0
        %345 = vmatpush1.bf16.msra.mxu0 0
        %346 = vmatprep.subr.bf16.mxu0 0
        %347 = vmatpush1.bf16.msra.mxu0 0
        %348 = vmatprep.subr.bf16.mxu0 0
        %349 = vmatpush1.bf16.msra.mxu0 0
        %350 = vmatprep.subr.bf16.mxu0 0
        %351 = vmatpush1.bf16.msra.mxu0 0
        %352 = vmatprep.mubr.bf16.mxu0 0
        %353 = vmatmul.mubr.bf16.gmra.mrb[0].mxu0 %v311
        %v354 = vpop.f32.mrb[0].mxu0
        %v355 = vadd.f32 0.0, %v354
        %v356 = vpop.f32.mrb[0].mxu0
        %v357 = vadd.f32 0.0, %v356
        %v358 = vpop.f32.mrb[0].mxu0
        %v359 = vadd.f32 0.0, %v358
        %v360 = vpop.f32.mrb[0].mxu0
        %v361 = vadd.f32 0.0, %v360
        %362 = vdwg.mxu0
        %v365 = vunpack.c.l.b16 %v254
        %v366 = vunpack.c.l.b16 %v255
        %v367 = vpack.c.b16 %v366, %v365
        %v369 = vunpack.c.l.b16 %v253
        %v370 = vunpack.c.h.b16 %v253
        %v371 = vpack.c.b16 %v369, %v369
        %v372 = vpack.c.b16 %v370, %v370
        %v374 = vsel %vm309, %v367, 0
        %v377 = vsel %vm313, %v371, 0
        %v380 = vsel %vm313, %v372, 0
        %382 = vmatprep.subr.bf16.mxu0 %v380
        %383 = vmatpush1.bf16.msra.mxu0 %v377
        %384 = vmatprep.subr.bf16.mxu0 0
        %385 = vmatpush1.bf16.msra.mxu0 0
        %386 = vmatprep.subr.bf16.mxu0 0
        %387 = vmatpush1.bf16.msra.mxu0 0
        %388 = vmatprep.subr.bf16.mxu0 0
        %389 = vmatpush1.bf16.msra.mxu0 0
        %390 = vmatprep.subr.bf16.mxu0 0
        %391 = vmatpush1.bf16.msra.mxu0 0
        %392 = vmatprep.subr.bf16.mxu0 0
        %393 = vmatpush1.bf16.msra.mxu0 0
        %394 = vmatprep.subr.bf16.mxu0 0
        %395 = vmatpush1.bf16.msra.mxu0 0
        %396 = vmatprep.subr.bf16.mxu0 0
        %397 = vmatpush1.bf16.msra.mxu0 0
        %398 = vmatprep.subr.bf16.mxu0 0
        %399 = vmatpush1.bf16.msra.mxu0 0
        %400 = vmatprep.subr.bf16.mxu0 0
        %401 = vmatpush1.bf16.msra.mxu0 0
        %402 = vmatprep.subr.bf16.mxu0 0
        %403 = vmatpush1.bf16.msra.mxu0 0
        %404 = vmatprep.subr.bf16.mxu0 0
        %405 = vmatpush1.bf16.msra.mxu0 0
        %406 = vmatprep.subr.bf16.mxu0 0
        %407 = vmatpush1.bf16.msra.mxu0 0
        %408 = vmatprep.subr.bf16.mxu0 0
        %409 = vmatpush1.bf16.msra.mxu0 0
        %410 = vmatprep.subr.bf16.mxu0 0
        %411 = vmatpush1.bf16.msra.mxu0 0
        %412 = vmatprep.subr.bf16.mxu0 0
        %413 = vmatpush1.bf16.msra.mxu0 0
        %414 = vmatprep.mubr.bf16.mxu0 0
        %415 = vmatmul.mubr.bf16.gmra.mrb[0].mxu0 %v374
        %v416 = vpop.f32.mrb[0].mxu0
        %v417 = vadd.f32 %v355, %v416
        %v418 = vpop.f32.mrb[0].mxu0
        %v419 = vadd.f32 %v357, %v418
        %v420 = vpop.f32.mrb[0].mxu0
        %v421 = vadd.f32 %v359, %v420
        %v422 = vpop.f32.mrb[0].mxu0
        %v423 = vadd.f32 %v361, %v422
        %424 = vdwg.mxu0
        %v425 = vld [vmem:[%s1] sm:$0x22]
        %v427 = vunpack.c.l.b16 %v425
        %v428 = vunpack.c.h.b16 %v425
        %v429 = vpack.c.b16 %v427, %v427
        %v430 = vpack.c.b16 %v428, %v428
        %v432 = vpack.i.b16 %v429, %v429
        %v434 = vlaneseq
        %v435 = vshrl.u32 %v434, 7
        %v436 = vsub.s32 1, %v435
        %v437 = vrot.slane %v432, %v436
        %v439 = vpack.i.b16 %v430, %v430
        %v441 = vlaneseq
        %v442 = vshrl.u32 %v441, 7
        %v443 = vsub.s32 1, %v442
        %v444 = vrot.slane %v439, %v443
        %v447 = vunpack.c.l.b16 %v437
        %v448 = vunpack.c.l.b16 %v444
        %v449 = vpack.c.b16 %v448, %v447
        %450 = vrot.lane.b32.xlu0 %v449, 2
        %v451 = vpop.permute.xlu0 %450
        %v452 = vrot.slane %v451, 4
        %vm453 = vcmask 15360
        %v454 = vsel %vm453, %v452, %v451
        %v457 = vmul.bf16 %v225, %v454
        %v458 = vmul.bf16 %v226, %v452
        %s459 = scalar_lea.vmem %s2, 16
        %v460 = vld [vmem:[%s459] sm:$0xf]
        %v461 = vld [vmem:[%s459 + $0x4] sm:$0xf]
        %v464 = vunpack.c.l.b16 %v460
        %v465 = vunpack.c.l.b16 %v461
        %v466 = vpack.c.b16 %v465, %v464
        %v469 = vunpack.c.l.b16 %v457
        %v470 = vunpack.c.h.b16 %v457
        %v471 = vunpack.c.l.b16 %v458
        %v472 = vpack.c.b16 %v469, %v469
        %v473 = vpack.c.b16 %v470, %v470
        %v474 = vpack.c.b16 %v471, %v471
        %475 = vrot.lane.b32.xlu0 %v472, 126
        %v476 = vpop.permute.xlu0 %475
        %477 = vrot.lane.b32.xlu0 %v473, 126
        %v478 = vpop.permute.xlu0 %477
        %479 = vrot.lane.b32.xlu0 %v474, 126
        %v480 = vpop.permute.xlu0 %479
        %vm481 = vcmask 1031168
        %v482 = vsel %vm481, %v476, %v478
        %v483 = vsel %vm481, %v478, %v480
        %v485 = vsel %vm309, %v466, 0
        %v488 = vsel %vm313, %v482, 0
        %v491 = vsel %vm313, %v483, 0
        %493 = vmatprep.subr.bf16.mxu0 %v491
        %494 = vmatpush1.bf16.msra.mxu0 %v488
        %495 = vmatprep.subr.bf16.mxu0 0
        %496 = vmatpush1.bf16.msra.mxu0 0
        %497 = vmatprep.subr.bf16.mxu0 0
        %498 = vmatpush1.bf16.msra.mxu0 0
        %499 = vmatprep.subr.bf16.mxu0 0
        %500 = vmatpush1.bf16.msra.mxu0 0
        %501 = vmatprep.subr.bf16.mxu0 0
        %502 = vmatpush1.bf16.msra.mxu0 0
        %503 = vmatprep.subr.bf16.mxu0 0
        %504 = vmatpush1.bf16.msra.mxu0 0
        %505 = vmatprep.subr.bf16.mxu0 0
        %506 = vmatpush1.bf16.msra.mxu0 0
        %507 = vmatprep.subr.bf16.mxu0 0
        %508 = vmatpush1.bf16.msra.mxu0 0
        %509 = vmatprep.subr.bf16.mxu0 0
        %510 = vmatpush1.bf16.msra.mxu0 0
        %511 = vmatprep.subr.bf16.mxu0 0
        %512 = vmatpush1.bf16.msra.mxu0 0
        %513 = vmatprep.subr.bf16.mxu0 0
        %514 = vmatpush1.bf16.msra.mxu0 0
        %515 = vmatprep.subr.bf16.mxu0 0
        %516 = vmatpush1.bf16.msra.mxu0 0
        %517 = vmatprep.subr.bf16.mxu0 0
        %518 = vmatpush1.bf16.msra.mxu0 0
        %519 = vmatprep.subr.bf16.mxu0 0
        %520 = vmatpush1.bf16.msra.mxu0 0
        %521 = vmatprep.subr.bf16.mxu0 0
        %522 = vmatpush1.bf16.msra.mxu0 0
        %523 = vmatprep.subr.bf16.mxu0 0
        %524 = vmatpush1.bf16.msra.mxu0 0
        %525 = vmatprep.mubr.bf16.mxu0 0
        %526 = vmatmul.mubr.bf16.gmra.mrb[0].mxu0 %v485
        %v527 = vpop.f32.mrb[0].mxu0
        %v528 = vadd.f32 0.0, %v527
        %v529 = vpop.f32.mrb[0].mxu0
        %v530 = vadd.f32 0.0, %v529
        %v531 = vpop.f32.mrb[0].mxu0
        %v532 = vadd.f32 0.0, %v531
        %v533 = vpop.f32.mrb[0].mxu0
        %v534 = vadd.f32 0.0, %v533
        %535 = vdwg.mxu0
        %v536 = vadd.f32 %v417, %v528
        %v537 = vadd.f32 %v419, %v530
        %v538 = vadd.f32 %v421, %v532
        %v539 = vadd.f32 %v423, %v534
        %v540 = vshrl.u32 %v429, 16
        %v541 = vpack.i.b16 %v540, %v540
        %v543 = vlaneseq
        %v544 = vshrl.u32 %v543, 7
        %v545 = vsub.s32 1, %v544
        %v546 = vrot.slane %v541, %v545
        %v547 = vshrl.u32 %v430, 16
        %v548 = vpack.i.b16 %v547, %v547
        %v550 = vlaneseq
        %v551 = vshrl.u32 %v550, 7
        %v552 = vsub.s32 1, %v551
        %v553 = vrot.slane %v548, %v552
        %v556 = vunpack.c.l.b16 %v546
        %v557 = vunpack.c.l.b16 %v553
        %v558 = vpack.c.b16 %v557, %v556
        %559 = vrot.lane.b32.xlu0 %v558, 8
        %v560 = vpop.permute.xlu0 %559
        %v561 = vrot.slane %v560, 4
        %vm562 = vcmask 64512
        %v563 = vsel %vm562, %v561, %v560
        %v566 = vmul.bf16 %v225, %v563
        %v567 = vmul.bf16 %v226, %v561
        %s568 = scalar_lea.vmem %s2, 24
        %v569 = vld [vmem:[%s568] sm:$0xf]
        %v570 = vld [vmem:[%s568 + $0x4] sm:$0xf]
        %v573 = vunpack.c.l.b16 %v569
        %v574 = vunpack.c.l.b16 %v570
        %v575 = vpack.c.b16 %v574, %v573
        %v578 = vunpack.c.l.b16 %v566
        %v579 = vunpack.c.h.b16 %v566
        %v580 = vunpack.c.l.b16 %v567
        %v581 = vpack.c.b16 %v578, %v578
        %v582 = vpack.c.b16 %v579, %v579
        %v583 = vpack.c.b16 %v580, %v580
        %584 = vrot.lane.b32.xlu0 %v581, 120
        %v585 = vpop.permute.xlu0 %584
        %586 = vrot.lane.b32.xlu0 %v582, 120
        %v587 = vpop.permute.xlu0 %586
        %588 = vrot.lane.b32.xlu0 %v583, 120
        %v589 = vpop.permute.xlu0 %588
        %vm590 = vcmask 982016
        %v591 = vsel %vm590, %v585, %v587
        %v592 = vsel %vm590, %v587, %v589
        %v594 = vsel %vm309, %v575, 0
        %v597 = vsel %vm313, %v591, 0
        %v600 = vsel %vm313, %v592, 0
        %602 = vmatprep.subr.bf16.mxu0 %v600
        %603 = vmatpush1.bf16.msra.mxu0 %v597
        %604 = vmatprep.subr.bf16.mxu0 0
        %605 = vmatpush1.bf16.msra.mxu0 0
        %606 = vmatprep.subr.bf16.mxu0 0
        %607 = vmatpush1.bf16.msra.mxu0 0
        %608 = vmatprep.subr.bf16.mxu0 0
        %609 = vmatpush1.bf16.msra.mxu0 0
        %610 = vmatprep.subr.bf16.mxu0 0
        %611 = vmatpush1.bf16.msra.mxu0 0
        %612 = vmatprep.subr.bf16.mxu0 0
        %613 = vmatpush1.bf16.msra.mxu0 0
        %614 = vmatprep.subr.bf16.mxu0 0
        %615 = vmatpush1.bf16.msra.mxu0 0
        %616 = vmatprep.subr.bf16.mxu0 0
        %617 = vmatpush1.bf16.msra.mxu0 0
        %618 = vmatprep.subr.bf16.mxu0 0
        %619 = vmatpush1.bf16.msra.mxu0 0
        %620 = vmatprep.subr.bf16.mxu0 0
        %621 = vmatpush1.bf16.msra.mxu0 0
        %622 = vmatprep.subr.bf16.mxu0 0
        %623 = vmatpush1.bf16.msra.mxu0 0
        %624 = vmatprep.subr.bf16.mxu0 0
        %625 = vmatpush1.bf16.msra.mxu0 0
        %626 = vmatprep.subr.bf16.mxu0 0
        %627 = vmatpush1.bf16.msra.mxu0 0
        %628 = vmatprep.subr.bf16.mxu0 0
        %629 = vmatpush1.bf16.msra.mxu0 0
        %630 = vmatprep.subr.bf16.mxu0 0
        %631 = vmatpush1.bf16.msra.mxu0 0
        %632 = vmatprep.subr.bf16.mxu0 0
        %633 = vmatpush1.bf16.msra.mxu0 0
        %634 = vmatprep.mubr.bf16.mxu0 0
        %635 = vmatmul.mubr.bf16.gmra.mrb[0].mxu0 %v594
        %v636 = vpop.f32.mrb[0].mxu0
        %v637 = vadd.f32 0.0, %v636
        %v638 = vpop.f32.mrb[0].mxu0
        %v639 = vadd.f32 0.0, %v638
        %v640 = vpop.f32.mrb[0].mxu0
        %v641 = vadd.f32 0.0, %v640
        %v642 = vpop.f32.mrb[0].mxu0
        %v643 = vadd.f32 0.0, %v642
        %644 = vdwg.mxu0
        %v645 = vadd.f32 %v536, %v637
        %v646 = vadd.f32 %v537, %v639
        %v647 = vadd.f32 %v538, %v641
        %v648 = vadd.f32 %v539, %v643
        %s649 = scalar_lea.vmem %s2, 32
        %v650 = vld [vmem:[%s649] sm:$0xf]
        %v651 = vld [vmem:[%s649 + $0x4] sm:$0xf]
        %v654 = vunpack.c.l.b16 %v650
        %v655 = vunpack.c.l.b16 %v651
        %v656 = vpack.c.b16 %v655, %v654
        %v659 = vunpack.c.l.b16 %v225
        %v660 = vunpack.c.h.b16 %v225
        %v661 = vunpack.c.l.b16 %v226
        %v662 = vpack.c.b16 %v659, %v659
        %v663 = vpack.c.b16 %v660, %v660
        %v664 = vpack.c.b16 %v661, %v661
        %665 = vrot.lane.b32.xlu0 %v662, 119
        %v666 = vpop.permute.xlu0 %665
        %667 = vrot.lane.b32.xlu0 %v663, 119
        %v668 = vpop.permute.xlu0 %667
        %669 = vrot.lane.b32.xlu0 %v664, 119
        %v670 = vpop.permute.xlu0 %669
        %vm671 = vcmask 973824
        %v672 = vsel %vm671, %v666, %v668
        %v673 = vsel %vm671, %v668, %v670
        %v675 = vsel %vm309, %v656, 0
        %v678 = vsel %vm313, %v672, 0
        %v681 = vsel %vm313, %v673, 0
        %683 = vmatprep.subr.bf16.mxu0 %v681
        %684 = vmatpush1.bf16.msra.mxu0 %v678
        %685 = vmatprep.subr.bf16.mxu0 0
        %686 = vmatpush1.bf16.msra.mxu0 0
        %687 = vmatprep.subr.bf16.mxu0 0
        %688 = vmatpush1.bf16.msra.mxu0 0
        %689 = vmatprep.subr.bf16.mxu0 0
        %690 = vmatpush1.bf16.msra.mxu0 0
        %691 = vmatprep.subr.bf16.mxu0 0
        %692 = vmatpush1.bf16.msra.mxu0 0
        %693 = vmatprep.subr.bf16.mxu0 0
        %694 = vmatpush1.bf16.msra.mxu0 0
        %695 = vmatprep.subr.bf16.mxu0 0
        %696 = vmatpush1.bf16.msra.mxu0 0
        %697 = vmatprep.subr.bf16.mxu0 0
        %698 = vmatpush1.bf16.msra.mxu0 0
        %699 = vmatprep.subr.bf16.mxu0 0
        %700 = vmatpush1.bf16.msra.mxu0 0
        %701 = vmatprep.subr.bf16.mxu0 0
        %702 = vmatpush1.bf16.msra.mxu0 0
        %703 = vmatprep.subr.bf16.mxu0 0
        %704 = vmatpush1.bf16.msra.mxu0 0
        %705 = vmatprep.subr.bf16.mxu0 0
        %706 = vmatpush1.bf16.msra.mxu0 0
        %707 = vmatprep.subr.bf16.mxu0 0
        %708 = vmatpush1.bf16.msra.mxu0 0
        %709 = vmatprep.subr.bf16.mxu0 0
        %710 = vmatpush1.bf16.msra.mxu0 0
        %711 = vmatprep.subr.bf16.mxu0 0
        %712 = vmatpush1.bf16.msra.mxu0 0
        %713 = vmatprep.subr.bf16.mxu0 0
        %714 = vmatpush1.bf16.msra.mxu0 0
        %715 = vmatprep.mubr.bf16.mxu0 0
        %716 = vmatmul.mubr.bf16.gmra.mrb[0].mxu0 %v675
        %v717 = vpop.f32.mrb[0].mxu0
        %v718 = vadd.f32 0.0, %v717
        %v719 = vpop.f32.mrb[0].mxu0
        %v720 = vadd.f32 0.0, %v719
        %v721 = vpop.f32.mrb[0].mxu0
        %v722 = vadd.f32 0.0, %v721
        %v723 = vpop.f32.mrb[0].mxu0
        %v724 = vadd.f32 0.0, %v723
        %725 = vdwg.mxu0
        %v726 = vadd.f32 %v645, %v718
        %v727 = vadd.f32 %v646, %v720
        %v728 = vadd.f32 %v647, %v722
        %v729 = vadd.f32 %v648, %v724
        %v730 = vld [vmem:[%s1] sm:$0x44]
        %v732 = vunpack.c.l.b16 %v730
        %v733 = vunpack.c.h.b16 %v730
        %v734 = vpack.c.b16 %v732, %v732
        %v735 = vpack.c.b16 %v733, %v733
        %v737 = vshrl.u32 %v734, 16
        %v738 = vpack.i.b16 %v737, %v737
        %v740 = vlaneseq
        %v741 = vshrl.u32 %v740, 7
        %v742 = vsub.s32 2, %v741
        %v743 = vrot.slane %v738, %v742
        %v745 = vshrl.u32 %v735, 16
        %v746 = vpack.i.b16 %v745, %v745
        %v748 = vlaneseq
        %v749 = vshrl.u32 %v748, 7
        %v750 = vsub.s32 2, %v749
        %v751 = vrot.slane %v746, %v750
        %v754 = vunpack.c.l.b16 %v743
        %v755 = vunpack.c.l.b16 %v751
        %v756 = vpack.c.b16 %v755, %v754
        %757 = vrot.lane.b32.xlu0 %v756, 10
        %v758 = vpop.permute.xlu0 %757
        %v759 = vrot.slane %v758, 4
        %vm760 = vcmask 80896
        %v761 = vsel %vm760, %v759, %v758
        %v764 = vmul.bf16 %v225, %v761
        %v765 = vmul.bf16 %v226, %v759
        %s766 = scalar_lea.vmem %s2, 40
        %v767 = vld [vmem:[%s766] sm:$0xf]
        %v768 = vld [vmem:[%s766 + $0x4] sm:$0xf]
        %v771 = vunpack.c.l.b16 %v767
        %v772 = vunpack.c.l.b16 %v768
        %v773 = vpack.c.b16 %v772, %v771
        %v776 = vunpack.c.l.b16 %v764
        %v777 = vunpack.c.h.b16 %v764
        %v778 = vunpack.c.l.b16 %v765
        %v779 = vpack.c.b16 %v776, %v776
        %v780 = vpack.c.b16 %v777, %v777
        %v781 = vpack.c.b16 %v778, %v778
        %782 = vrot.lane.b32.xlu0 %v779, 118
        %v783 = vpop.permute.xlu0 %782
        %784 = vrot.lane.b32.xlu0 %v780, 118
        %v785 = vpop.permute.xlu0 %784
        %786 = vrot.lane.b32.xlu0 %v781, 118
        %v787 = vpop.permute.xlu0 %786
        %vm788 = vcmask 965632
        %v789 = vsel %vm788, %v783, %v785
        %v790 = vsel %vm788, %v785, %v787
        %v792 = vsel %vm309, %v773, 0
        %v795 = vsel %vm313, %v789, 0
        %v798 = vsel %vm313, %v790, 0
        %800 = vmatprep.subr.bf16.mxu0 %v798
        %801 = vmatpush1.bf16.msra.mxu0 %v795
        %802 = vmatprep.subr.bf16.mxu0 0
        %803 = vmatpush1.bf16.msra.mxu0 0
        %804 = vmatprep.subr.bf16.mxu0 0
        %805 = vmatpush1.bf16.msra.mxu0 0
        %806 = vmatprep.subr.bf16.mxu0 0
        %807 = vmatpush1.bf16.msra.mxu0 0
        %808 = vmatprep.subr.bf16.mxu0 0
        %809 = vmatpush1.bf16.msra.mxu0 0
        %810 = vmatprep.subr.bf16.mxu0 0
        %811 = vmatpush1.bf16.msra.mxu0 0
        %812 = vmatprep.subr.bf16.mxu0 0
        %813 = vmatpush1.bf16.msra.mxu0 0
        %814 = vmatprep.subr.bf16.mxu0 0
        %815 = vmatpush1.bf16.msra.mxu0 0
        %816 = vmatprep.subr.bf16.mxu0 0
        %817 = vmatpush1.bf16.msra.mxu0 0
        %818 = vmatprep.subr.bf16.mxu0 0
        %819 = vmatpush1.bf16.msra.mxu0 0
        %820 = vmatprep.subr.bf16.mxu0 0
        %821 = vmatpush1.bf16.msra.mxu0 0
        %822 = vmatprep.subr.bf16.mxu0 0
        %823 = vmatpush1.bf16.msra.mxu0 0
        %824 = vmatprep.subr.bf16.mxu0 0
        %825 = vmatpush1.bf16.msra.mxu0 0
        %826 = vmatprep.subr.bf16.mxu0 0
        %827 = vmatpush1.bf16.msra.mxu0 0
        %828 = vmatprep.subr.bf16.mxu0 0
        %829 = vmatpush1.bf16.msra.mxu0 0
        %830 = vmatprep.subr.bf16.mxu0 0
        %831 = vmatpush1.bf16.msra.mxu0 0
        %832 = vmatprep.mubr.bf16.mxu0 0
        %833 = vmatmul.mubr.bf16.gmra.mrb[0].mxu0 %v792
        %v834 = vpop.f32.mrb[0].mxu0
        %v835 = vadd.f32 0.0, %v834
        %v836 = vpop.f32.mrb[0].mxu0
        %v837 = vadd.f32 0.0, %v836
        %v838 = vpop.f32.mrb[0].mxu0
        %v839 = vadd.f32 0.0, %v838
        %v840 = vpop.f32.mrb[0].mxu0
        %v841 = vadd.f32 0.0, %v840
        %842 = vdwg.mxu0
        %v843 = vadd.f32 %v726, %v835
        %v844 = vadd.f32 %v727, %v837
        %v845 = vadd.f32 %v728, %v839
        %v846 = vadd.f32 %v729, %v841
        %v847 = vld [vmem:[%s1] sm:$0x88]
        %v849 = vunpack.c.l.b16 %v847
        %v850 = vunpack.c.h.b16 %v847
        %v851 = vpack.c.b16 %v849, %v849
        %v852 = vpack.c.b16 %v850, %v850
        %v854 = vpack.i.b16 %v851, %v851
        %v856 = vlaneseq
        %v857 = vshrl.u32 %v856, 7
        %v858 = vsub.s32 3, %v857
        %v859 = vrot.slane %v854, %v858
        %v861 = vpack.i.b16 %v852, %v852
        %v863 = vlaneseq
        %v864 = vshrl.u32 %v863, 7
        %v865 = vsub.s32 3, %v864
        %v866 = vrot.slane %v861, %v865
        %v869 = vunpack.c.l.b16 %v859
        %v870 = vunpack.c.l.b16 %v866
        %v871 = vpack.c.b16 %v870, %v869
        %872 = vrot.lane.b32.xlu0 %v871, 16
        %v873 = vpop.permute.xlu0 %872
        %v874 = vrot.slane %v873, 4
        %vm875 = vcmask 130048
        %v876 = vsel %vm875, %v874, %v873
        %v879 = vmul.bf16 %v225, %v876
        %v880 = vmul.bf16 %v226, %v874
        %s881 = scalar_lea.vmem %s2, 48
        %v882 = vld [vmem:[%s881] sm:$0xf]
        %v883 = vld [vmem:[%s881 + $0x4] sm:$0xf]
        %v886 = vunpack.c.l.b16 %v882
        %v887 = vunpack.c.l.b16 %v883
        %v888 = vpack.c.b16 %v887, %v886
        %v891 = vunpack.c.l.b16 %v879
        %v892 = vunpack.c.h.b16 %v879
        %v893 = vunpack.c.l.b16 %v880
        %v894 = vpack.c.b16 %v891, %v891
        %v895 = vpack.c.b16 %v892, %v892
        %v896 = vpack.c.b16 %v893, %v893
        %897 = vrot.lane.b32.xlu0 %v894, 112
        %v898 = vpop.permute.xlu0 %897
        %899 = vrot.lane.b32.xlu0 %v895, 112
        %v900 = vpop.permute.xlu0 %899
        %901 = vrot.lane.b32.xlu0 %v896, 112
        %v902 = vpop.permute.xlu0 %901
        %vm903 = vcmask 916480
        %v904 = vsel %vm903, %v898, %v900
        %v905 = vsel %vm903, %v900, %v902
        %v907 = vsel %vm309, %v888, 0
        %v910 = vsel %vm313, %v904, 0
        %v913 = vsel %vm313, %v905, 0
        %915 = vmatprep.subr.bf16.mxu0 %v913
        %916 = vmatpush1.bf16.msra.mxu0 %v910
        %917 = vmatprep.subr.bf16.mxu0 0
        %918 = vmatpush1.bf16.msra.mxu0 0
        %919 = vmatprep.subr.bf16.mxu0 0
        %920 = vmatpush1.bf16.msra.mxu0 0
        %921 = vmatprep.subr.bf16.mxu0 0
        %922 = vmatpush1.bf16.msra.mxu0 0
        %923 = vmatprep.subr.bf16.mxu0 0
        %924 = vmatpush1.bf16.msra.mxu0 0
        %925 = vmatprep.subr.bf16.mxu0 0
        %926 = vmatpush1.bf16.msra.mxu0 0
        %927 = vmatprep.subr.bf16.mxu0 0
        %928 = vmatpush1.bf16.msra.mxu0 0
        %929 = vmatprep.subr.bf16.mxu0 0
        %930 = vmatpush1.bf16.msra.mxu0 0
        %931 = vmatprep.subr.bf16.mxu0 0
        %932 = vmatpush1.bf16.msra.mxu0 0
        %933 = vmatprep.subr.bf16.mxu0 0
        %934 = vmatpush1.bf16.msra.mxu0 0
        %935 = vmatprep.subr.bf16.mxu0 0
        %936 = vmatpush1.bf16.msra.mxu0 0
        %937 = vmatprep.subr.bf16.mxu0 0
        %938 = vmatpush1.bf16.msra.mxu0 0
        %939 = vmatprep.subr.bf16.mxu0 0
        %940 = vmatpush1.bf16.msra.mxu0 0
        %941 = vmatprep.subr.bf16.mxu0 0
        %942 = vmatpush1.bf16.msra.mxu0 0
        %943 = vmatprep.subr.bf16.mxu0 0
        %944 = vmatpush1.bf16.msra.mxu0 0
        %945 = vmatprep.subr.bf16.mxu0 0
        %946 = vmatpush1.bf16.msra.mxu0 0
        %947 = vmatprep.mubr.bf16.mxu0 0
        %948 = vmatmul.mubr.bf16.gmra.mrb[0].mxu0 %v907
        %v949 = vpop.f32.mrb[0].mxu0
        %v950 = vadd.f32 0.0, %v949
        %v951 = vpop.f32.mrb[0].mxu0
        %v952 = vadd.f32 0.0, %v951
        %v953 = vpop.f32.mrb[0].mxu0
        %v954 = vadd.f32 0.0, %v953
        %v955 = vpop.f32.mrb[0].mxu0
        %v956 = vadd.f32 0.0, %v955
        %957 = vdwg.mxu0
        %v958 = vadd.f32 %v843, %v950
        %v959 = vadd.f32 %v844, %v952
        %v960 = vadd.f32 %v845, %v954
        %v961 = vadd.f32 %v846, %v956
        %v962 = vshrl.u32 %v851, 16
        %v963 = vpack.i.b16 %v962, %v962
        %v965 = vlaneseq
        %v966 = vshrl.u32 %v965, 7
        %v967 = vsub.s32 3, %v966
        %v968 = vrot.slane %v963, %v967
        %v969 = vshrl.u32 %v852, 16
        %v970 = vpack.i.b16 %v969, %v969
        %v972 = vlaneseq
        %v973 = vshrl.u32 %v972, 7
        %v974 = vsub.s32 3, %v973
        %v975 = vrot.slane %v970, %v974
        %v978 = vunpack.c.l.b16 %v968
        %v979 = vunpack.c.l.b16 %v975
        %v980 = vpack.c.b16 %v979, %v978
        %981 = vrot.lane.b32.xlu0 %v980, 17
        %v982 = vpop.permute.xlu0 %981
        %v983 = vrot.slane %v982, 4
        %vm984 = vcmask 138240
        %v985 = vsel %vm984, %v983, %v982
        %v988 = vmul.bf16 %v225, %v985
        %v989 = vmul.bf16 %v226, %v983
        %s990 = scalar_lea.vmem %s2, 56
        %v991 = vld [vmem:[%s990] sm:$0xf]
        %v992 = vld [vmem:[%s990 + $0x4] sm:$0xf]
        %v995 = vunpack.c.l.b16 %v991
        %v996 = vunpack.c.l.b16 %v992
        %v997 = vpack.c.b16 %v996, %v995
        %v1000 = vunpack.c.l.b16 %v988
        %v1001 = vunpack.c.h.b16 %v988
        %v1002 = vunpack.c.l.b16 %v989
        %v1003 = vpack.c.b16 %v1000, %v1000
        %v1004 = vpack.c.b16 %v1001, %v1001
        %v1005 = vpack.c.b16 %v1002, %v1002
        %1006 = vrot.lane.b32.xlu0 %v1003, 111
        %v1007 = vpop.permute.xlu0 %1006
        %1008 = vrot.lane.b32.xlu0 %v1004, 111
        %v1009 = vpop.permute.xlu0 %1008
        %1010 = vrot.lane.b32.xlu0 %v1005, 111
        %v1011 = vpop.permute.xlu0 %1010
        %vm1012 = vcmask 908288
        %v1013 = vsel %vm1012, %v1007, %v1009
        %v1014 = vsel %vm1012, %v1009, %v1011
        %v1016 = vsel %vm309, %v997, 0
        %v1019 = vsel %vm313, %v1013, 0
        %v1022 = vsel %vm313, %v1014, 0
        %1024 = vmatprep.subr.bf16.mxu0 %v1022
        %1025 = vmatpush1.bf16.msra.mxu0 %v1019
        %1026 = vmatprep.subr.bf16.mxu0 0
        %1027 = vmatpush1.bf16.msra.mxu0 0
        %1028 = vmatprep.subr.bf16.mxu0 0
        %1029 = vmatpush1.bf16.msra.mxu0 0
        %1030 = vmatprep.subr.bf16.mxu0 0
        %1031 = vmatpush1.bf16.msra.mxu0 0
        %1032 = vmatprep.subr.bf16.mxu0 0
        %1033 = vmatpush1.bf16.msra.mxu0 0
        %1034 = vmatprep.subr.bf16.mxu0 0
        %1035 = vmatpush1.bf16.msra.mxu0 0
        %1036 = vmatprep.subr.bf16.mxu0 0
        %1037 = vmatpush1.bf16.msra.mxu0 0
        %1038 = vmatprep.subr.bf16.mxu0 0
        %1039 = vmatpush1.bf16.msra.mxu0 0
        %1040 = vmatprep.subr.bf16.mxu0 0
        %1041 = vmatpush1.bf16.msra.mxu0 0
        %1042 = vmatprep.subr.bf16.mxu0 0
        %1043 = vmatpush1.bf16.msra.mxu0 0
        %1044 = vmatprep.subr.bf16.mxu0 0
        %1045 = vmatpush1.bf16.msra.mxu0 0
        %1046 = vmatprep.subr.bf16.mxu0 0
        %1047 = vmatpush1.bf16.msra.mxu0 0
        %1048 = vmatprep.subr.bf16.mxu0 0
        %1049 = vmatpush1.bf16.msra.mxu0 0
        %1050 = vmatprep.subr.bf16.mxu0 0
        %1051 = vmatpush1.bf16.msra.mxu0 0
        %1052 = vmatprep.subr.bf16.mxu0 0
        %1053 = vmatpush1.bf16.msra.mxu0 0
        %1054 = vmatprep.subr.bf16.mxu0 0
        %1055 = vmatpush1.bf16.msra.mxu0 0
        %1056 = vmatprep.mubr.bf16.mxu0 0
        %1057 = vmatmul.mubr.bf16.gmra.mrb[0].mxu0 %v1016
        %v1058 = vpop.f32.mrb[0].mxu0
        %v1059 = vadd.f32 0.0, %v1058
        %v1060 = vpop.f32.mrb[0].mxu0
        %v1061 = vadd.f32 0.0, %v1060
        %v1062 = vpop.f32.mrb[0].mxu0
        %v1063 = vadd.f32 0.0, %v1062
        %v1064 = vpop.f32.mrb[0].mxu0
        %v1065 = vadd.f32 0.0, %v1064
        %1066 = vdwg.mxu0
        %v1067 = vadd.f32 %v958, %v1059
        %v1068 = vadd.f32 %v959, %v1061
        %v1069 = vadd.f32 %v960, %v1063
        %v1070 = vadd.f32 %v961, %v1065
        %v1071 = vld [vmem:[%s1 + $0x8] sm:$0x11]
        %v1073 = vunpack.c.l.b16 %v1071
        %v1074 = vunpack.c.h.b16 %v1071
        %v1075 = vpack.c.b16 %v1073, %v1073
        %v1076 = vpack.c.b16 %v1074, %v1074
        %v1078 = vpack.i.b16 %v1075, %v1075
        %v1080 = vlaneseq
        %v1081 = vshrl.u32 %v1080, 7
        %v1082 = vsub.s32 0, %v1081
        %v1083 = vrot.slane %v1078, %v1082
        %v1085 = vpack.i.b16 %v1076, %v1076
        %v1087 = vlaneseq
        %v1088 = vshrl.u32 %v1087, 7
        %v1089 = vsub.s32 0, %v1088
        %v1090 = vrot.slane %v1085, %v1089
        %v1093 = vunpack.c.l.b16 %v1083
        %v1094 = vunpack.c.l.b16 %v1090
        %v1095 = vpack.c.b16 %v1094, %v1093
        %1096 = vrot.lane.b32.xlu0 %v1095, 18
        %v1097 = vpop.permute.xlu0 %1096
        %v1098 = vrot.slane %v1097, 4
        %vm1099 = vcmask 146432
        %v1100 = vsel %vm1099, %v1098, %v1097
        %v1103 = vmul.bf16 %v225, %v1100
        %v1104 = vmul.bf16 %v226, %v1098
        %s1105 = scalar_lea.vmem %s2, 64
        %v1106 = vld [vmem:[%s1105] sm:$0xf]
        %v1107 = vld [vmem:[%s1105 + $0x4] sm:$0xf]
        %v1110 = vunpack.c.l.b16 %v1106
        %v1111 = vunpack.c.l.b16 %v1107
        %v1112 = vpack.c.b16 %v1111, %v1110
        %v1115 = vunpack.c.l.b16 %v1103
        %v1116 = vunpack.c.h.b16 %v1103
        %v1117 = vunpack.c.l.b16 %v1104
        %v1118 = vpack.c.b16 %v1115, %v1115
        %v1119 = vpack.c.b16 %v1116, %v1116
        %v1120 = vpack.c.b16 %v1117, %v1117
        %1121 = vrot.lane.b32.xlu0 %v1118, 110
        %v1122 = vpop.permute.xlu0 %1121
        %1123 = vrot.lane.b32.xlu0 %v1119, 110
        %v1124 = vpop.permute.xlu0 %1123
        %1125 = vrot.lane.b32.xlu0 %v1120, 110
        %v1126 = vpop.permute.xlu0 %1125
        %vm1127 = vcmask 900096
        %v1128 = vsel %vm1127, %v1122, %v1124
        %v1129 = vsel %vm1127, %v1124, %v1126
        %v1131 = vsel %vm309, %v1112, 0
        %v1134 = vsel %vm313, %v1128, 0
        %v1137 = vsel %vm313, %v1129, 0
        %1139 = vmatprep.subr.bf16.mxu0 %v1137
        %1140 = vmatpush1.bf16.msra.mxu0 %v1134
        %1141 = vmatprep.subr.bf16.mxu0 0
        %1142 = vmatpush1.bf16.msra.mxu0 0
        %1143 = vmatprep.subr.bf16.mxu0 0
        %1144 = vmatpush1.bf16.msra.mxu0 0
        %1145 = vmatprep.subr.bf16.mxu0 0
        %1146 = vmatpush1.bf16.msra.mxu0 0
        %1147 = vmatprep.subr.bf16.mxu0 0
        %1148 = vmatpush1.bf16.msra.mxu0 0
        %1149 = vmatprep.subr.bf16.mxu0 0
        %1150 = vmatpush1.bf16.msra.mxu0 0
        %1151 = vmatprep.subr.bf16.mxu0 0
        %1152 = vmatpush1.bf16.msra.mxu0 0
        %1153 = vmatprep.subr.bf16.mxu0 0
        %1154 = vmatpush1.bf16.msra.mxu0 0
        %1155 = vmatprep.subr.bf16.mxu0 0
        %1156 = vmatpush1.bf16.msra.mxu0 0
        %1157 = vmatprep.subr.bf16.mxu0 0
        %1158 = vmatpush1.bf16.msra.mxu0 0
        %1159 = vmatprep.subr.bf16.mxu0 0
        %1160 = vmatpush1.bf16.msra.mxu0 0
        %1161 = vmatprep.subr.bf16.mxu0 0
        %1162 = vmatpush1.bf16.msra.mxu0 0
        %1163 = vmatprep.subr.bf16.mxu0 0
        %1164 = vmatpush1.bf16.msra.mxu0 0
        %1165 = vmatprep.subr.bf16.mxu0 0
        %1166 = vmatpush1.bf16.msra.mxu0 0
        %1167 = vmatprep.subr.bf16.mxu0 0
        %1168 = vmatpush1.bf16.msra.mxu0 0
        %1169 = vmatprep.subr.bf16.mxu0 0
        %1170 = vmatpush1.bf16.msra.mxu0 0
        %1171 = vmatprep.mubr.bf16.mxu0 0
        %1172 = vmatmul.mubr.bf16.gmra.mrb[0].mxu0 %v1131
        %v1173 = vpop.f32.mrb[0].mxu0
        %v1174 = vadd.f32 0.0, %v1173
        %v1175 = vpop.f32.mrb[0].mxu0
        %v1176 = vadd.f32 0.0, %v1175
        %v1177 = vpop.f32.mrb[0].mxu0
        %v1178 = vadd.f32 0.0, %v1177
        %v1179 = vpop.f32.mrb[0].mxu0
        %v1180 = vadd.f32 0.0, %v1179
        %1181 = vdwg.mxu0
        %v1182 = vadd.f32 %v1067, %v1174
        %v1183 = vadd.f32 %v1068, %v1176
        %v1184 = vadd.f32 %v1069, %v1178
        %v1185 = vadd.f32 %v1070, %v1180
        %1186 = vrot.lane.b32.xlu0 %v251, 64
        %v1187 = vpop.permute.xlu0 %1186
        %v1188 = vrot.slane %v1187, 4
        %vm1189 = vcmask 523264
        %v1190 = vsel %vm1189, %v1188, %v1187
        %v1193 = vmul.bf16 %v225, %v1190
        %v1194 = vmul.bf16 %v226, %v1188
        %s1195 = scalar_lea.vmem %s2, 72
        %v1196 = vld [vmem:[%s1195] sm:$0xf]
        %v1197 = vld [vmem:[%s1195 + $0x4] sm:$0xf]
        %v1200 = vunpack.c.l.b16 %v1196
        %v1201 = vunpack.c.l.b16 %v1197
        %v1202 = vpack.c.b16 %v1201, %v1200
        %v1205 = vunpack.c.l.b16 %v1193
        %v1206 = vunpack.c.h.b16 %v1193
        %v1207 = vunpack.c.l.b16 %v1194
        %v1208 = vpack.c.b16 %v1205, %v1205
        %v1209 = vpack.c.b16 %v1206, %v1206
        %v1210 = vpack.c.b16 %v1207, %v1207
        %1211 = vrot.lane.b32.xlu0 %v1208, 64
        %v1212 = vpop.permute.xlu0 %1211
        %1213 = vrot.lane.b32.xlu0 %v1209, 64
        %v1214 = vpop.permute.xlu0 %1213
        %1215 = vrot.lane.b32.xlu0 %v1210, 64
        %v1216 = vpop.permute.xlu0 %1215
        %v1217 = vsel %vm1189, %v1212, %v1214
        %v1218 = vsel %vm1189, %v1214, %v1216
        %v1220 = vsel %vm309, %v1202, 0
        %v1223 = vsel %vm313, %v1217, 0
        %v1226 = vsel %vm313, %v1218, 0
        %1228 = vmatprep.subr.bf16.mxu0 %v1226
        %1229 = vmatpush1.bf16.msra.mxu0 %v1223
        %1230 = vmatprep.subr.bf16.mxu0 0
        %1231 = vmatpush1.bf16.msra.mxu0 0
        %1232 = vmatprep.subr.bf16.mxu0 0
        %1233 = vmatpush1.bf16.msra.mxu0 0
        %1234 = vmatprep.subr.bf16.mxu0 0
        %1235 = vmatpush1.bf16.msra.mxu0 0
        %1236 = vmatprep.subr.bf16.mxu0 0
        %1237 = vmatpush1.bf16.msra.mxu0 0
        %1238 = vmatprep.subr.bf16.mxu0 0
        %1239 = vmatpush1.bf16.msra.mxu0 0
        %1240 = vmatprep.subr.bf16.mxu0 0
        %1241 = vmatpush1.bf16.msra.mxu0 0
        %1242 = vmatprep.subr.bf16.mxu0 0
        %1243 = vmatpush1.bf16.msra.mxu0 0
        %1244 = vmatprep.subr.bf16.mxu0 0
        %1245 = vmatpush1.bf16.msra.mxu0 0
        %1246 = vmatprep.subr.bf16.mxu0 0
        %1247 = vmatpush1.bf16.msra.mxu0 0
        %1248 = vmatprep.subr.bf16.mxu0 0
        %1249 = vmatpush1.bf16.msra.mxu0 0
        %1250 = vmatprep.subr.bf16.mxu0 0
        %1251 = vmatpush1.bf16.msra.mxu0 0
        %1252 = vmatprep.subr.bf16.mxu0 0
        %1253 = vmatpush1.bf16.msra.mxu0 0
        %1254 = vmatprep.subr.bf16.mxu0 0
        %1255 = vmatpush1.bf16.msra.mxu0 0
        %1256 = vmatprep.subr.bf16.mxu0 0
        %1257 = vmatpush1.bf16.msra.mxu0 0
        %1258 = vmatprep.subr.bf16.mxu0 0
        %1259 = vmatpush1.bf16.msra.mxu0 0
        %1260 = vmatprep.mubr.bf16.mxu0 0
        %1261 = vmatmul.mubr.bf16.gmra.mrb[0].mxu0 %v1220
        %v1262 = vpop.f32.mrb[0].mxu0
        %v1263 = vadd.f32 0.0, %v1262
        %v1264 = vpop.f32.mrb[0].mxu0
        %v1265 = vadd.f32 0.0, %v1264
        %v1266 = vpop.f32.mrb[0].mxu0
        %v1267 = vadd.f32 0.0, %v1266
        %v1268 = vpop.f32.mrb[0].mxu0
        %v1269 = vadd.f32 0.0, %v1268
        %1270 = vdwg.mxu0
        %v1271 = vadd.f32 %v1182, %v1263
        %v1272 = vadd.f32 %v1183, %v1265
        %v1273 = vadd.f32 %v1184, %v1267
        %v1274 = vadd.f32 %v1185, %v1269
        %1275 = vrot.lane.b32.xlu0 %v274, 65
        %v1276 = vpop.permute.xlu0 %1275
        %v1277 = vrot.slane %v1276, 4
        %vm1278 = vcmask 531456
        %v1279 = vsel %vm1278, %v1277, %v1276
        %v1282 = vmul.bf16 %v225, %v1279
        %v1283 = vmul.bf16 %v226, %v1277
        %s1284 = scalar_lea.vmem %s2, 80
        %v1285 = vld [vmem:[%s1284] sm:$0xf]
        %v1286 = vld [vmem:[%s1284 + $0x4] sm:$0xf]
        %v1289 = vunpack.c.l.b16 %v1285
        %v1290 = vunpack.c.l.b16 %v1286
        %v1291 = vpack.c.b16 %v1290, %v1289
        %v1294 = vunpack.c.l.b16 %v1282
        %v1295 = vunpack.c.h.b16 %v1282
        %v1296 = vunpack.c.l.b16 %v1283
        %v1297 = vpack.c.b16 %v1294, %v1294
        %v1298 = vpack.c.b16 %v1295, %v1295
        %v1299 = vpack.c.b16 %v1296, %v1296
        %1300 = vrot.lane.b32.xlu0 %v1297, 63
        %v1301 = vpop.permute.xlu0 %1300
        %1302 = vrot.lane.b32.xlu0 %v1298, 63
        %v1303 = vpop.permute.xlu0 %1302
        %1304 = vrot.lane.b32.xlu0 %v1299, 63
        %v1305 = vpop.permute.xlu0 %1304
        %vm1306 = vcmask 515072
        %v1307 = vsel %vm1306, %v1301, %v1303
        %v1308 = vsel %vm1306, %v1303, %v1305
        %v1310 = vsel %vm309, %v1291, 0
        %v1313 = vsel %vm313, %v1307, 0
        %v1316 = vsel %vm313, %v1308, 0
        %1318 = vmatprep.subr.bf16.mxu0 %v1316
        %1319 = vmatpush1.bf16.msra.mxu0 %v1313
        %1320 = vmatprep.subr.bf16.mxu0 0
        %1321 = vmatpush1.bf16.msra.mxu0 0
        %1322 = vmatprep.subr.bf16.mxu0 0
        %1323 = vmatpush1.bf16.msra.mxu0 0
        %1324 = vmatprep.subr.bf16.mxu0 0
        %1325 = vmatpush1.bf16.msra.mxu0 0
        %1326 = vmatprep.subr.bf16.mxu0 0
        %1327 = vmatpush1.bf16.msra.mxu0 0
        %1328 = vmatprep.subr.bf16.mxu0 0
        %1329 = vmatpush1.bf16.msra.mxu0 0
        %1330 = vmatprep.subr.bf16.mxu0 0
        %1331 = vmatpush1.bf16.msra.mxu0 0
        %1332 = vmatprep.subr.bf16.mxu0 0
        %1333 = vmatpush1.bf16.msra.mxu0 0
        %1334 = vmatprep.subr.bf16.mxu0 0
        %1335 = vmatpush1.bf16.msra.mxu0 0
        %1336 = vmatprep.subr.bf16.mxu0 0
        %1337 = vmatpush1.bf16.msra.mxu0 0
        %1338 = vmatprep.subr.bf16.mxu0 0
        %1339 = vmatpush1.bf16.msra.mxu0 0
        %1340 = vmatprep.subr.bf16.mxu0 0
        %1341 = vmatpush1.bf16.msra.mxu0 0
        %1342 = vmatprep.subr.bf16.mxu0 0
        %1343 = vmatpush1.bf16.msra.mxu0 0
        %1344 = vmatprep.subr.bf16.mxu0 0
        %1345 = vmatpush1.bf16.msra.mxu0 0
        %1346 = vmatprep.subr.bf16.mxu0 0
        %1347 = vmatpush1.bf16.msra.mxu0 0
        %1348 = vmatprep.subr.bf16.mxu0 0
        %1349 = vmatpush1.bf16.msra.mxu0 0
        %1350 = vmatprep.mubr.bf16.mxu0 0
        %1351 = vmatmul.mubr.bf16.gmra.mrb[0].mxu0 %v1310
        %v1352 = vpop.f32.mrb[0].mxu0
        %v1353 = vadd.f32 0.0, %v1352
        %v1354 = vpop.f32.mrb[0].mxu0
        %v1355 = vadd.f32 0.0, %v1354
        %v1356 = vpop.f32.mrb[0].mxu0
        %v1357 = vadd.f32 0.0, %v1356
        %v1358 = vpop.f32.mrb[0].mxu0
        %v1359 = vadd.f32 0.0, %v1358
        %1360 = vdwg.mxu0
        %v1361 = vadd.f32 %v1271, %v1353
        %v1362 = vadd.f32 %v1272, %v1355
        %v1363 = vadd.f32 %v1273, %v1357
        %v1364 = vadd.f32 %v1274, %v1359
        %1365 = vrot.lane.b32.xlu0 %v449, 66
        %v1366 = vpop.permute.xlu0 %1365
        %v1367 = vrot.slane %v1366, 4
        %vm1368 = vcmask 539648
        %v1369 = vsel %vm1368, %v1367, %v1366
        %v1372 = vmul.bf16 %v225, %v1369
        %v1373 = vmul.bf16 %v226, %v1367
        %s1374 = scalar_lea.vmem %s2, 88
        %v1375 = vld [vmem:[%s1374] sm:$0xf]
        %v1376 = vld [vmem:[%s1374 + $0x4] sm:$0xf]
        %v1379 = vunpack.c.l.b16 %v1375
        %v1380 = vunpack.c.l.b16 %v1376
        %v1381 = vpack.c.b16 %v1380, %v1379
        %v1384 = vunpack.c.l.b16 %v1372
        %v1385 = vunpack.c.h.b16 %v1372
        %v1386 = vunpack.c.l.b16 %v1373
        %v1387 = vpack.c.b16 %v1384, %v1384
        %v1388 = vpack.c.b16 %v1385, %v1385
        %v1389 = vpack.c.b16 %v1386, %v1386
        %1390 = vrot.lane.b32.xlu0 %v1387, 62
        %v1391 = vpop.permute.xlu0 %1390
        %1392 = vrot.lane.b32.xlu0 %v1388, 62
        %v1393 = vpop.permute.xlu0 %1392
        %1394 = vrot.lane.b32.xlu0 %v1389, 62
        %v1395 = vpop.permute.xlu0 %1394
        %vm1396 = vcmask 506880
        %v1397 = vsel %vm1396, %v1391, %v1393
        %v1398 = vsel %vm1396, %v1393, %v1395
        %v1400 = vsel %vm309, %v1381, 0
        %v1403 = vsel %vm313, %v1397, 0
        %v1406 = vsel %vm313, %v1398, 0
        %1408 = vmatprep.subr.bf16.mxu0 %v1406
        %1409 = vmatpush1.bf16.msra.mxu0 %v1403
        %1410 = vmatprep.subr.bf16.mxu0 0
        %1411 = vmatpush1.bf16.msra.mxu0 0
        %1412 = vmatprep.subr.bf16.mxu0 0
        %1413 = vmatpush1.bf16.msra.mxu0 0
        %1414 = vmatprep.subr.bf16.mxu0 0
        %1415 = vmatpush1.bf16.msra.mxu0 0
        %1416 = vmatprep.subr.bf16.mxu0 0
        %1417 = vmatpush1.bf16.msra.mxu0 0
        %1418 = vmatprep.subr.bf16.mxu0 0
        %1419 = vmatpush1.bf16.msra.mxu0 0
        %1420 = vmatprep.subr.bf16.mxu0 0
        %1421 = vmatpush1.bf16.msra.mxu0 0
        %1422 = vmatprep.subr.bf16.mxu0 0
        %1423 = vmatpush1.bf16.msra.mxu0 0
        %1424 = vmatprep.subr.bf16.mxu0 0
        %1425 = vmatpush1.bf16.msra.mxu0 0
        %1426 = vmatprep.subr.bf16.mxu0 0
        %1427 = vmatpush1.bf16.msra.mxu0 0
        %1428 = vmatprep.subr.bf16.mxu0 0
        %1429 = vmatpush1.bf16.msra.mxu0 0
        %1430 = vmatprep.subr.bf16.mxu0 0
        %1431 = vmatpush1.bf16.msra.mxu0 0
        %1432 = vmatprep.subr.bf16.mxu0 0
        %1433 = vmatpush1.bf16.msra.mxu0 0
        %1434 = vmatprep.subr.bf16.mxu0 0
        %1435 = vmatpush1.bf16.msra.mxu0 0
        %1436 = vmatprep.subr.bf16.mxu0 0
        %1437 = vmatpush1.bf16.msra.mxu0 0
        %1438 = vmatprep.subr.bf16.mxu0 0
        %1439 = vmatpush1.bf16.msra.mxu0 0
        %1440 = vmatprep.mubr.bf16.mxu0 0
        %1441 = vmatmul.mubr.bf16.gmra.mrb[0].mxu0 %v1400
        %v1442 = vpop.f32.mrb[0].mxu0
        %v1443 = vadd.f32 0.0, %v1442
        %v1444 = vpop.f32.mrb[0].mxu0
        %v1445 = vadd.f32 0.0, %v1444
        %v1446 = vpop.f32.mrb[0].mxu0
        %v1447 = vadd.f32 0.0, %v1446
        %v1448 = vpop.f32.mrb[0].mxu0
        %v1449 = vadd.f32 0.0, %v1448
        %1450 = vdwg.mxu0
        %v1451 = vadd.f32 %v1361, %v1443
        %v1452 = vadd.f32 %v1362, %v1445
        %v1453 = vadd.f32 %v1363, %v1447
        %v1454 = vadd.f32 %v1364, %v1449
        %1455 = vrot.lane.b32.xlu0 %v558, 72
        %v1456 = vpop.permute.xlu0 %1455
        %v1457 = vrot.slane %v1456, 4
        %vm1458 = vcmask 588800
        %v1459 = vsel %vm1458, %v1457, %v1456
        %v1462 = vmul.bf16 %v225, %v1459
        %v1463 = vmul.bf16 %v226, %v1457
        %s1464 = scalar_lea.vmem %s2, 96
        %v1465 = vld [vmem:[%s1464] sm:$0xf]
        %v1466 = vld [vmem:[%s1464 + $0x4] sm:$0xf]
        %v1469 = vunpack.c.l.b16 %v1465
        %v1470 = vunpack.c.l.b16 %v1466
        %v1471 = vpack.c.b16 %v1470, %v1469
        %v1474 = vunpack.c.l.b16 %v1462
        %v1475 = vunpack.c.h.b16 %v1462
        %v1476 = vunpack.c.l.b16 %v1463
        %v1477 = vpack.c.b16 %v1474, %v1474
        %v1478 = vpack.c.b16 %v1475, %v1475
        %v1479 = vpack.c.b16 %v1476, %v1476
        %1480 = vrot.lane.b32.xlu0 %v1477, 56
        %v1481 = vpop.permute.xlu0 %1480
        %1482 = vrot.lane.b32.xlu0 %v1478, 56
        %v1483 = vpop.permute.xlu0 %1482
        %1484 = vrot.lane.b32.xlu0 %v1479, 56
        %v1485 = vpop.permute.xlu0 %1484
        %vm1486 = vcmask 457728
        %v1487 = vsel %vm1486, %v1481, %v1483
        %v1488 = vsel %vm1486, %v1483, %v1485
        %v1490 = vsel %vm309, %v1471, 0
        %v1493 = vsel %vm313, %v1487, 0
        %v1496 = vsel %vm313, %v1488, 0
        %1498 = vmatprep.subr.bf16.mxu0 %v1496
        %1499 = vmatpush1.bf16.msra.mxu0 %v1493
        %1500 = vmatprep.subr.bf16.mxu0 0
        %1501 = vmatpush1.bf16.msra.mxu0 0
        %1502 = vmatprep.subr.bf16.mxu0 0
        %1503 = vmatpush1.bf16.msra.mxu0 0
        %1504 = vmatprep.subr.bf16.mxu0 0
        %1505 = vmatpush1.bf16.msra.mxu0 0
        %1506 = vmatprep.subr.bf16.mxu0 0
        %1507 = vmatpush1.bf16.msra.mxu0 0
        %1508 = vmatprep.subr.bf16.mxu0 0
        %1509 = vmatpush1.bf16.msra.mxu0 0
        %1510 = vmatprep.subr.bf16.mxu0 0
        %1511 = vmatpush1.bf16.msra.mxu0 0
        %1512 = vmatprep.subr.bf16.mxu0 0
        %1513 = vmatpush1.bf16.msra.mxu0 0
        %1514 = vmatprep.subr.bf16.mxu0 0
        %1515 = vmatpush1.bf16.msra.mxu0 0
        %1516 = vmatprep.subr.bf16.mxu0 0
        %1517 = vmatpush1.bf16.msra.mxu0 0
        %1518 = vmatprep.subr.bf16.mxu0 0
        %1519 = vmatpush1.bf16.msra.mxu0 0
        %1520 = vmatprep.subr.bf16.mxu0 0
        %1521 = vmatpush1.bf16.msra.mxu0 0
        %1522 = vmatprep.subr.bf16.mxu0 0
        %1523 = vmatpush1.bf16.msra.mxu0 0
        %1524 = vmatprep.subr.bf16.mxu0 0
        %1525 = vmatpush1.bf16.msra.mxu0 0
        %1526 = vmatprep.subr.bf16.mxu0 0
        %1527 = vmatpush1.bf16.msra.mxu0 0
        %1528 = vmatprep.subr.bf16.mxu0 0
        %1529 = vmatpush1.bf16.msra.mxu0 0
        %1530 = vmatprep.mubr.bf16.mxu0 0
        %1531 = vmatmul.mubr.bf16.gmra.mrb[0].mxu0 %v1490
        %v1532 = vpop.f32.mrb[0].mxu0
        %v1533 = vadd.f32 0.0, %v1532
        %v1534 = vpop.f32.mrb[0].mxu0
        %v1535 = vadd.f32 0.0, %v1534
        %v1536 = vpop.f32.mrb[0].mxu0
        %v1537 = vadd.f32 0.0, %v1536
        %v1538 = vpop.f32.mrb[0].mxu0
        %v1539 = vadd.f32 0.0, %v1538
        %1540 = vdwg.mxu0
        %v1541 = vadd.f32 %v1451, %v1533
        %v1542 = vadd.f32 %v1452, %v1535
        %v1543 = vadd.f32 %v1453, %v1537
        %v1544 = vadd.f32 %v1454, %v1539
        %s1545 = scalar_lea.vmem %s2, 104
        %v1546 = vld [vmem:[%s1545] sm:$0xf]
        %v1547 = vld [vmem:[%s1545 + $0x4] sm:$0xf]
        %v1550 = vunpack.c.l.b16 %v1546
        %v1551 = vunpack.c.l.b16 %v1547
        %v1552 = vpack.c.b16 %v1551, %v1550
        %1553 = vrot.lane.b32.xlu0 %v662, 55
        %v1554 = vpop.permute.xlu0 %1553
        %1555 = vrot.lane.b32.xlu0 %v663, 55
        %v1556 = vpop.permute.xlu0 %1555
        %1557 = vrot.lane.b32.xlu0 %v664, 55
        %v1558 = vpop.permute.xlu0 %1557
        %vm1559 = vcmask 449536
        %v1560 = vsel %vm1559, %v1554, %v1556
        %v1561 = vsel %vm1559, %v1556, %v1558
        %v1563 = vsel %vm309, %v1552, 0
        %v1566 = vsel %vm313, %v1560, 0
        %v1569 = vsel %vm313, %v1561, 0
        %1571 = vmatprep.subr.bf16.mxu0 %v1569
        %1572 = vmatpush1.bf16.msra.mxu0 %v1566
        %1573 = vmatprep.subr.bf16.mxu0 0
        %1574 = vmatpush1.bf16.msra.mxu0 0
        %1575 = vmatprep.subr.bf16.mxu0 0
        %1576 = vmatpush1.bf16.msra.mxu0 0
        %1577 = vmatprep.subr.bf16.mxu0 0
        %1578 = vmatpush1.bf16.msra.mxu0 0
        %1579 = vmatprep.subr.bf16.mxu0 0
        %1580 = vmatpush1.bf16.msra.mxu0 0
        %1581 = vmatprep.subr.bf16.mxu0 0
        %1582 = vmatpush1.bf16.msra.mxu0 0
        %1583 = vmatprep.subr.bf16.mxu0 0
        %1584 = vmatpush1.bf16.msra.mxu0 0
        %1585 = vmatprep.subr.bf16.mxu0 0
        %1586 = vmatpush1.bf16.msra.mxu0 0
        %1587 = vmatprep.subr.bf16.mxu0 0
        %1588 = vmatpush1.bf16.msra.mxu0 0
        %1589 = vmatprep.subr.bf16.mxu0 0
        %1590 = vmatpush1.bf16.msra.mxu0 0
        %1591 = vmatprep.subr.bf16.mxu0 0
        %1592 = vmatpush1.bf16.msra.mxu0 0
        %1593 = vmatprep.subr.bf16.mxu0 0
        %1594 = vmatpush1.bf16.msra.mxu0 0
        %1595 = vmatprep.subr.bf16.mxu0 0
        %1596 = vmatpush1.bf16.msra.mxu0 0
        %1597 = vmatprep.subr.bf16.mxu0 0
        %1598 = vmatpush1.bf16.msra.mxu0 0
        %1599 = vmatprep.subr.bf16.mxu0 0
        %1600 = vmatpush1.bf16.msra.mxu0 0
        %1601 = vmatprep.subr.bf16.mxu0 0
        %1602 = vmatpush1.bf16.msra.mxu0 0
        %1603 = vmatprep.mubr.bf16.mxu0 0
        %1604 = vmatmul.mubr.bf16.gmra.mrb[0].mxu0 %v1563
        %v1605 = vpop.f32.mrb[0].mxu0
        %v1606 = vadd.f32 0.0, %v1605
        %v1607 = vpop.f32.mrb[0].mxu0
        %v1608 = vadd.f32 0.0, %v1607
        %v1609 = vpop.f32.mrb[0].mxu0
        %v1610 = vadd.f32 0.0, %v1609
        %v1611 = vpop.f32.mrb[0].mxu0
        %v1612 = vadd.f32 0.0, %v1611
        %1613 = vdwg.mxu0
        %v1614 = vadd.f32 %v1541, %v1606
        %v1615 = vadd.f32 %v1542, %v1608
        %v1616 = vadd.f32 %v1543, %v1610
        %v1617 = vadd.f32 %v1544, %v1612
        %1618 = vrot.lane.b32.xlu0 %v756, 74
        %v1619 = vpop.permute.xlu0 %1618
        %v1620 = vrot.slane %v1619, 4
        %vm1621 = vcmask 605184
        %v1622 = vsel %vm1621, %v1620, %v1619
        %v1625 = vmul.bf16 %v225, %v1622
        %v1626 = vmul.bf16 %v226, %v1620
        %s1627 = scalar_lea.vmem %s2, 112
        %v1628 = vld [vmem:[%s1627] sm:$0xf]
        %v1629 = vld [vmem:[%s1627 + $0x4] sm:$0xf]
        %v1632 = vunpack.c.l.b16 %v1628
        %v1633 = vunpack.c.l.b16 %v1629
        %v1634 = vpack.c.b16 %v1633, %v1632
        %v1637 = vunpack.c.l.b16 %v1625
        %v1638 = vunpack.c.h.b16 %v1625
        %v1639 = vunpack.c.l.b16 %v1626
        %v1640 = vpack.c.b16 %v1637, %v1637
        %v1641 = vpack.c.b16 %v1638, %v1638
        %v1642 = vpack.c.b16 %v1639, %v1639
        %1643 = vrot.lane.b32.xlu0 %v1640, 54
        %v1644 = vpop.permute.xlu0 %1643
        %1645 = vrot.lane.b32.xlu0 %v1641, 54
        %v1646 = vpop.permute.xlu0 %1645
        %1647 = vrot.lane.b32.xlu0 %v1642, 54
        %v1648 = vpop.permute.xlu0 %1647
        %vm1649 = vcmask 441344
        %v1650 = vsel %vm1649, %v1644, %v1646
        %v1651 = vsel %vm1649, %v1646, %v1648
        %v1653 = vsel %vm309, %v1634, 0
        %v1656 = vsel %vm313, %v1650, 0
        %v1659 = vsel %vm313, %v1651, 0
        %1661 = vmatprep.subr.bf16.mxu0 %v1659
        %1662 = vmatpush1.bf16.msra.mxu0 %v1656
        %1663 = vmatprep.subr.bf16.mxu0 0
        %1664 = vmatpush1.bf16.msra.mxu0 0
        %1665 = vmatprep.subr.bf16.mxu0 0
        %1666 = vmatpush1.bf16.msra.mxu0 0
        %1667 = vmatprep.subr.bf16.mxu0 0
        %1668 = vmatpush1.bf16.msra.mxu0 0
        %1669 = vmatprep.subr.bf16.mxu0 0
        %1670 = vmatpush1.bf16.msra.mxu0 0
        %1671 = vmatprep.subr.bf16.mxu0 0
        %1672 = vmatpush1.bf16.msra.mxu0 0
        %1673 = vmatprep.subr.bf16.mxu0 0
        %1674 = vmatpush1.bf16.msra.mxu0 0
        %1675 = vmatprep.subr.bf16.mxu0 0
        %1676 = vmatpush1.bf16.msra.mxu0 0
        %1677 = vmatprep.subr.bf16.mxu0 0
        %1678 = vmatpush1.bf16.msra.mxu0 0
        %1679 = vmatprep.subr.bf16.mxu0 0
        %1680 = vmatpush1.bf16.msra.mxu0 0
        %1681 = vmatprep.subr.bf16.mxu0 0
        %1682 = vmatpush1.bf16.msra.mxu0 0
        %1683 = vmatprep.subr.bf16.mxu0 0
        %1684 = vmatpush1.bf16.msra.mxu0 0
        %1685 = vmatprep.subr.bf16.mxu0 0
        %1686 = vmatpush1.bf16.msra.mxu0 0
        %1687 = vmatprep.subr.bf16.mxu0 0
        %1688 = vmatpush1.bf16.msra.mxu0 0
        %1689 = vmatprep.subr.bf16.mxu0 0
        %1690 = vmatpush1.bf16.msra.mxu0 0
        %1691 = vmatprep.subr.bf16.mxu0 0
        %1692 = vmatpush1.bf16.msra.mxu0 0
        %1693 = vmatprep.mubr.bf16.mxu0 0
        %1694 = vmatmul.mubr.bf16.gmra.mrb[0].mxu0 %v1653
        %v1695 = vpop.f32.mrb[0].mxu0
        %v1696 = vadd.f32 0.0, %v1695
        %v1697 = vpop.f32.mrb[0].mxu0
        %v1698 = vadd.f32 0.0, %v1697
        %v1699 = vpop.f32.mrb[0].mxu0
        %v1700 = vadd.f32 0.0, %v1699
        %v1701 = vpop.f32.mrb[0].mxu0
        %v1702 = vadd.f32 0.0, %v1701
        %1703 = vdwg.mxu0
        %v1704 = vadd.f32 %v1614, %v1696
        %v1705 = vadd.f32 %v1615, %v1698
        %v1706 = vadd.f32 %v1616, %v1700
        %v1707 = vadd.f32 %v1617, %v1702
        %1708 = vrot.lane.b32.xlu0 %v871, 80
        %v1709 = vpop.permute.xlu0 %1708
        %v1710 = vrot.slane %v1709, 4
        %vm1711 = vcmask 654336
        %v1712 = vsel %vm1711, %v1710, %v1709
        %v1715 = vmul.bf16 %v225, %v1712
        %v1716 = vmul.bf16 %v226, %v1710
        %s1717 = scalar_lea.vmem %s2, 120
        %v1718 = vld [vmem:[%s1717] sm:$0xf]
        %v1719 = vld [vmem:[%s1717 + $0x4] sm:$0xf]
        %v1722 = vunpack.c.l.b16 %v1718
        %v1723 = vunpack.c.l.b16 %v1719
        %v1724 = vpack.c.b16 %v1723, %v1722
        %v1727 = vunpack.c.l.b16 %v1715
        %v1728 = vunpack.c.h.b16 %v1715
        %v1729 = vunpack.c.l.b16 %v1716
        %v1730 = vpack.c.b16 %v1727, %v1727
        %v1731 = vpack.c.b16 %v1728, %v1728
        %v1732 = vpack.c.b16 %v1729, %v1729
        %1733 = vrot.lane.b32.xlu0 %v1730, 48
        %v1734 = vpop.permute.xlu0 %1733
        %1735 = vrot.lane.b32.xlu0 %v1731, 48
        %v1736 = vpop.permute.xlu0 %1735
        %1737 = vrot.lane.b32.xlu0 %v1732, 48
        %v1738 = vpop.permute.xlu0 %1737
        %vm1739 = vcmask 392192
        %v1740 = vsel %vm1739, %v1734, %v1736
        %v1741 = vsel %vm1739, %v1736, %v1738
        %v1743 = vsel %vm309, %v1724, 0
        %v1746 = vsel %vm313, %v1740, 0
        %v1749 = vsel %vm313, %v1741, 0
        %1751 = vmatprep.subr.bf16.mxu0 %v1749
        %1752 = vmatpush1.bf16.msra.mxu0 %v1746
        %1753 = vmatprep.subr.bf16.mxu0 0
        %1754 = vmatpush1.bf16.msra.mxu0 0
        %1755 = vmatprep.subr.bf16.mxu0 0
        %1756 = vmatpush1.bf16.msra.mxu0 0
        %1757 = vmatprep.subr.bf16.mxu0 0
        %1758 = vmatpush1.bf16.msra.mxu0 0
        %1759 = vmatprep.subr.bf16.mxu0 0
        %1760 = vmatpush1.bf16.msra.mxu0 0
        %1761 = vmatprep.subr.bf16.mxu0 0
        %1762 = vmatpush1.bf16.msra.mxu0 0
        %1763 = vmatprep.subr.bf16.mxu0 0
        %1764 = vmatpush1.bf16.msra.mxu0 0
        %1765 = vmatprep.subr.bf16.mxu0 0
        %1766 = vmatpush1.bf16.msra.mxu0 0
        %1767 = vmatprep.subr.bf16.mxu0 0
        %1768 = vmatpush1.bf16.msra.mxu0 0
        %1769 = vmatprep.subr.bf16.mxu0 0
        %1770 = vmatpush1.bf16.msra.mxu0 0
        %1771 = vmatprep.subr.bf16.mxu0 0
        %1772 = vmatpush1.bf16.msra.mxu0 0
        %1773 = vmatprep.subr.bf16.mxu0 0
        %1774 = vmatpush1.bf16.msra.mxu0 0
        %1775 = vmatprep.subr.bf16.mxu0 0
        %1776 = vmatpush1.bf16.msra.mxu0 0
        %1777 = vmatprep.subr.bf16.mxu0 0
        %1778 = vmatpush1.bf16.msra.mxu0 0
        %1779 = vmatprep.subr.bf16.mxu0 0
        %1780 = vmatpush1.bf16.msra.mxu0 0
        %1781 = vmatprep.subr.bf16.mxu0 0
        %1782 = vmatpush1.bf16.msra.mxu0 0
        %1783 = vmatprep.mubr.bf16.mxu0 0
        %1784 = vmatmul.mubr.bf16.gmra.mrb[0].mxu0 %v1743
        %v1785 = vpop.f32.mrb[0].mxu0
        %v1786 = vadd.f32 0.0, %v1785
        %v1787 = vpop.f32.mrb[0].mxu0
        %v1788 = vadd.f32 0.0, %v1787
        %v1789 = vpop.f32.mrb[0].mxu0
        %v1790 = vadd.f32 0.0, %v1789
        %v1791 = vpop.f32.mrb[0].mxu0
        %v1792 = vadd.f32 0.0, %v1791
        %1793 = vdwg.mxu0
        %v1794 = vadd.f32 %v1704, %v1786
        %v1795 = vadd.f32 %v1705, %v1788
        %v1796 = vadd.f32 %v1706, %v1790
        %v1797 = vadd.f32 %v1707, %v1792
        %1798 = vrot.lane.b32.xlu0 %v980, 81
        %v1799 = vpop.permute.xlu0 %1798
        %v1800 = vrot.slane %v1799, 4
        %vm1801 = vcmask 662528
        %v1802 = vsel %vm1801, %v1800, %v1799
        %v1805 = vmul.bf16 %v225, %v1802
        %v1806 = vmul.bf16 %v226, %v1800
        %s1807 = scalar_lea.vmem %s2, 128
        %v1808 = vld [vmem:[%s1807] sm:$0xf]
        %v1809 = vld [vmem:[%s1807 + $0x4] sm:$0xf]
        %v1812 = vunpack.c.l.b16 %v1808
        %v1813 = vunpack.c.l.b16 %v1809
        %v1814 = vpack.c.b16 %v1813, %v1812
        %v1817 = vunpack.c.l.b16 %v1805
        %v1818 = vunpack.c.h.b16 %v1805
        %v1819 = vunpack.c.l.b16 %v1806
        %v1820 = vpack.c.b16 %v1817, %v1817
        %v1821 = vpack.c.b16 %v1818, %v1818
        %v1822 = vpack.c.b16 %v1819, %v1819
        %1823 = vrot.lane.b32.xlu0 %v1820, 47
        %v1824 = vpop.permute.xlu0 %1823
        %1825 = vrot.lane.b32.xlu0 %v1821, 47
        %v1826 = vpop.permute.xlu0 %1825
        %1827 = vrot.lane.b32.xlu0 %v1822, 47
        %v1828 = vpop.permute.xlu0 %1827
        %vm1829 = vcmask 384000
        %v1830 = vsel %vm1829, %v1824, %v1826
        %v1831 = vsel %vm1829, %v1826, %v1828
        %v1833 = vsel %vm309, %v1814, 0
        %v1836 = vsel %vm313, %v1830, 0
        %v1839 = vsel %vm313, %v1831, 0
        %1841 = vmatprep.subr.bf16.mxu0 %v1839
        %1842 = vmatpush1.bf16.msra.mxu0 %v1836
        %1843 = vmatprep.subr.bf16.mxu0 0
        %1844 = vmatpush1.bf16.msra.mxu0 0
        %1845 = vmatprep.subr.bf16.mxu0 0
        %1846 = vmatpush1.bf16.msra.mxu0 0
        %1847 = vmatprep.subr.bf16.mxu0 0
        %1848 = vmatpush1.bf16.msra.mxu0 0
        %1849 = vmatprep.subr.bf16.mxu0 0
        %1850 = vmatpush1.bf16.msra.mxu0 0
        %1851 = vmatprep.subr.bf16.mxu0 0
        %1852 = vmatpush1.bf16.msra.mxu0 0
        %1853 = vmatprep.subr.bf16.mxu0 0
        %1854 = vmatpush1.bf16.msra.mxu0 0
        %1855 = vmatprep.subr.bf16.mxu0 0
        %1856 = vmatpush1.bf16.msra.mxu0 0
        %1857 = vmatprep.subr.bf16.mxu0 0
        %1858 = vmatpush1.bf16.msra.mxu0 0
        %1859 = vmatprep.subr.bf16.mxu0 0
        %1860 = vmatpush1.bf16.msra.mxu0 0
        %1861 = vmatprep.subr.bf16.mxu0 0
        %1862 = vmatpush1.bf16.msra.mxu0 0
        %1863 = vmatprep.subr.bf16.mxu0 0
        %1864 = vmatpush1.bf16.msra.mxu0 0
        %1865 = vmatprep.subr.bf16.mxu0 0
        %1866 = vmatpush1.bf16.msra.mxu0 0
        %1867 = vmatprep.subr.bf16.mxu0 0
        %1868 = vmatpush1.bf16.msra.mxu0 0
        %1869 = vmatprep.subr.bf16.mxu0 0
        %1870 = vmatpush1.bf16.msra.mxu0 0
        %1871 = vmatprep.subr.bf16.mxu0 0
        %1872 = vmatpush1.bf16.msra.mxu0 0
        %1873 = vmatprep.mubr.bf16.mxu0 0
        %1874 = vmatmul.mubr.bf16.gmra.mrb[0].mxu0 %v1833
        %v1875 = vpop.f32.mrb[0].mxu0
        %v1876 = vadd.f32 0.0, %v1875
        %v1877 = vpop.f32.mrb[0].mxu0
        %v1878 = vadd.f32 0.0, %v1877
        %v1879 = vpop.f32.mrb[0].mxu0
        %v1880 = vadd.f32 0.0, %v1879
        %v1881 = vpop.f32.mrb[0].mxu0
        %v1882 = vadd.f32 0.0, %v1881
        %1883 = vdwg.mxu0
        %v1884 = vadd.f32 %v1794, %v1876
        %v1885 = vadd.f32 %v1795, %v1878
        %v1886 = vadd.f32 %v1796, %v1880
        %v1887 = vadd.f32 %v1797, %v1882
        %1888 = vrot.lane.b32.xlu0 %v1095, 82
        %v1889 = vpop.permute.xlu0 %1888
        %v1890 = vrot.slane %v1889, 4
        %vm1891 = vcmask 670720
        %v1892 = vsel %vm1891, %v1890, %v1889
        %v1895 = vmul.bf16 %v225, %v1892
        %v1896 = vmul.bf16 %v226, %v1890
        %s1897 = scalar_lea.vmem %s2, 136
        %v1898 = vld [vmem:[%s1897] sm:$0xf]
        %v1899 = vld [vmem:[%s1897 + $0x4] sm:$0xf]
        %v1902 = vunpack.c.l.b16 %v1898
        %v1903 = vunpack.c.l.b16 %v1899
        %v1904 = vpack.c.b16 %v1903, %v1902
        %v1907 = vunpack.c.l.b16 %v1895
        %v1908 = vunpack.c.h.b16 %v1895
        %v1909 = vunpack.c.l.b16 %v1896
        %v1910 = vpack.c.b16 %v1907, %v1907
        %v1911 = vpack.c.b16 %v1908, %v1908
        %v1912 = vpack.c.b16 %v1909, %v1909
        %1913 = vrot.lane.b32.xlu0 %v1910, 46
        %v1914 = vpop.permute.xlu0 %1913
        %1915 = vrot.lane.b32.xlu0 %v1911, 46
        %v1916 = vpop.permute.xlu0 %1915
        %1917 = vrot.lane.b32.xlu0 %v1912, 46
        %v1918 = vpop.permute.xlu0 %1917
        %vm1919 = vcmask 375808
        %v1920 = vsel %vm1919, %v1914, %v1916
        %v1921 = vsel %vm1919, %v1916, %v1918
        %v1923 = vsel %vm309, %v1904, 0
        %v1926 = vsel %vm313, %v1920, 0
        %v1929 = vsel %vm313, %v1921, 0
        %1931 = vmatprep.subr.bf16.mxu0 %v1929
        %1932 = vmatpush1.bf16.msra.mxu0 %v1926
        %1933 = vmatprep.subr.bf16.mxu0 0
        %1934 = vmatpush1.bf16.msra.mxu0 0
        %1935 = vmatprep.subr.bf16.mxu0 0
        %1936 = vmatpush1.bf16.msra.mxu0 0
        %1937 = vmatprep.subr.bf16.mxu0 0
        %1938 = vmatpush1.bf16.msra.mxu0 0
        %1939 = vmatprep.subr.bf16.mxu0 0
        %1940 = vmatpush1.bf16.msra.mxu0 0
        %1941 = vmatprep.subr.bf16.mxu0 0
        %1942 = vmatpush1.bf16.msra.mxu0 0
        %1943 = vmatprep.subr.bf16.mxu0 0
        %1944 = vmatpush1.bf16.msra.mxu0 0
        %1945 = vmatprep.subr.bf16.mxu0 0
        %1946 = vmatpush1.bf16.msra.mxu0 0
        %1947 = vmatprep.subr.bf16.mxu0 0
        %1948 = vmatpush1.bf16.msra.mxu0 0
        %1949 = vmatprep.subr.bf16.mxu0 0
        %1950 = vmatpush1.bf16.msra.mxu0 0
        %1951 = vmatprep.subr.bf16.mxu0 0
        %1952 = vmatpush1.bf16.msra.mxu0 0
        %1953 = vmatprep.subr.bf16.mxu0 0
        %1954 = vmatpush1.bf16.msra.mxu0 0
        %1955 = vmatprep.subr.bf16.mxu0 0
        %1956 = vmatpush1.bf16.msra.mxu0 0
        %1957 = vmatprep.subr.bf16.mxu0 0
        %1958 = vmatpush1.bf16.msra.mxu0 0
        %1959 = vmatprep.subr.bf16.mxu0 0
        %1960 = vmatpush1.bf16.msra.mxu0 0
        %1961 = vmatprep.subr.bf16.mxu0 0
        %1962 = vmatpush1.bf16.msra.mxu0 0
        %1963 = vmatprep.mubr.bf16.mxu0 0
        %1964 = vmatmul.mubr.bf16.gmra.mrb[0].mxu0 %v1923
        %v1965 = vpop.f32.mrb[0].mxu0
        %v1966 = vadd.f32 0.0, %v1965
        %v1967 = vpop.f32.mrb[0].mxu0
        %v1968 = vadd.f32 0.0, %v1967
        %v1969 = vpop.f32.mrb[0].mxu0
        %v1970 = vadd.f32 0.0, %v1969
        %v1971 = vpop.f32.mrb[0].mxu0
        %v1972 = vadd.f32 0.0, %v1971
        %1973 = vdwg.mxu0
        %v1974 = vadd.f32 %v1884, %v1966
        %v1975 = vadd.f32 %v1885, %v1968
        %v1976 = vadd.f32 %v1886, %v1970
        %v1977 = vadd.f32 %v1887, %v1972
        %v1978 = vrot.slane %v225, 4
        %v1979 = vrot.slane %v226, 4
        %vm1980 = vcmask 1043456
        %v1981 = vsel %vm1980, %v1978, %v1979
        %v1983 = vmul.bf16 %v1981, %v251
        %s1984 = scalar_lea.vmem %s2, 144
        %v1985 = vld [vmem:[%s1984] sm:$0xf]
        %v1986 = vld [vmem:[%s1984 + $0x4] sm:$0xf]
        %v1989 = vunpack.c.l.b16 %v1985
        %v1990 = vunpack.c.l.b16 %v1986
        %v1991 = vpack.c.b16 %v1990, %v1989
        %v1993 = vunpack.c.l.b16 %v1983
        %v1994 = vunpack.c.h.b16 %v1983
        %v1995 = vpack.c.b16 %v1993, %v1993
        %v1996 = vpack.c.b16 %v1994, %v1994
        %v1998 = vsel %vm309, %v1991, 0
        %v2001 = vsel %vm313, %v1995, 0
        %v2004 = vsel %vm313, %v1996, 0
        %2006 = vmatprep.subr.bf16.mxu0 %v2004
        %2007 = vmatpush1.bf16.msra.mxu0 %v2001
        %2008 = vmatprep.subr.bf16.mxu0 0
        %2009 = vmatpush1.bf16.msra.mxu0 0
        %2010 = vmatprep.subr.bf16.mxu0 0
        %2011 = vmatpush1.bf16.msra.mxu0 0
        %2012 = vmatprep.subr.bf16.mxu0 0
        %2013 = vmatpush1.bf16.msra.mxu0 0
        %2014 = vmatprep.subr.bf16.mxu0 0
        %2015 = vmatpush1.bf16.msra.mxu0 0
        %2016 = vmatprep.subr.bf16.mxu0 0
        %2017 = vmatpush1.bf16.msra.mxu0 0
        %2018 = vmatprep.subr.bf16.mxu0 0
        %2019 = vmatpush1.bf16.msra.mxu0 0
        %2020 = vmatprep.subr.bf16.mxu0 0
        %2021 = vmatpush1.bf16.msra.mxu0 0
        %2022 = vmatprep.subr.bf16.mxu0 0
        %2023 = vmatpush1.bf16.msra.mxu0 0
        %2024 = vmatprep.subr.bf16.mxu0 0
        %2025 = vmatpush1.bf16.msra.mxu0 0
        %2026 = vmatprep.subr.bf16.mxu0 0
        %2027 = vmatpush1.bf16.msra.mxu0 0
        %2028 = vmatprep.subr.bf16.mxu0 0
        %2029 = vmatpush1.bf16.msra.mxu0 0
        %2030 = vmatprep.subr.bf16.mxu0 0
        %2031 = vmatpush1.bf16.msra.mxu0 0
        %2032 = vmatprep.subr.bf16.mxu0 0
        %2033 = vmatpush1.bf16.msra.mxu0 0
        %2034 = vmatprep.subr.bf16.mxu0 0
        %2035 = vmatpush1.bf16.msra.mxu0 0
        %2036 = vmatprep.subr.bf16.mxu0 0
        %2037 = vmatpush1.bf16.msra.mxu0 0
        %2038 = vmatprep.mubr.bf16.mxu0 0
        %2039 = vmatmul.mubr.bf16.gmra.mrb[0].mxu0 %v1998
        %v2040 = vpop.f32.mrb[0].mxu0
        %v2041 = vadd.f32 0.0, %v2040
        %v2042 = vpop.f32.mrb[0].mxu0
        %v2043 = vadd.f32 0.0, %v2042
        %v2044 = vpop.f32.mrb[0].mxu0
        %v2045 = vadd.f32 0.0, %v2044
        %v2046 = vpop.f32.mrb[0].mxu0
        %v2047 = vadd.f32 0.0, %v2046
        %2048 = vdwg.mxu0
        %v2049 = vadd.f32 %v1974, %v2041
        %v2050 = vadd.f32 %v1975, %v2043
        %v2051 = vadd.f32 %v1976, %v2045
        %v2052 = vadd.f32 %v1977, %v2047
        %2053 = vrot.lane.b32.xlu0 %v225, 127
        %v2054 = vpop.permute.xlu0 %2053
        %2055 = vrot.lane.b32.xlu0 %v226, 127
        %v2056 = vpop.permute.xlu0 %2055
        %v2057 = vrot.slane %v2054, 4
        %v2058 = vrot.slane %v2056, 4
        %v2059 = vsel %vm1980, %v2057, %v2058
        %v2060 = vsel %vm306, %v2059, %v2056
        %v2063 = vmul.bf16 %v2060, %v274
        %s2064 = scalar_lea.vmem %s2, 152
        %v2065 = vld [vmem:[%s2064] sm:$0xf]
        %v2066 = vld [vmem:[%s2064 + $0x4] sm:$0xf]
        %v2069 = vunpack.c.l.b16 %v2065
        %v2070 = vunpack.c.l.b16 %v2066
        %v2071 = vpack.c.b16 %v2070, %v2069
        %v2073 = vunpack.c.l.b16 %v2063
        %v2074 = vunpack.c.h.b16 %v2063
        %v2075 = vpack.c.b16 %v2073, %v2073
        %v2076 = vpack.c.b16 %v2074, %v2074
        %v2078 = vsel %vm309, %v2071, 0
        %v2081 = vsel %vm313, %v2075, 0
        %v2084 = vsel %vm313, %v2076, 0
        %2086 = vmatprep.subr.bf16.mxu0 %v2084
        %2087 = vmatpush1.bf16.msra.mxu0 %v2081
        %2088 = vmatprep.subr.bf16.mxu0 0
        %2089 = vmatpush1.bf16.msra.mxu0 0
        %2090 = vmatprep.subr.bf16.mxu0 0
        %2091 = vmatpush1.bf16.msra.mxu0 0
        %2092 = vmatprep.subr.bf16.mxu0 0
        %2093 = vmatpush1.bf16.msra.mxu0 0
        %2094 = vmatprep.subr.bf16.mxu0 0
        %2095 = vmatpush1.bf16.msra.mxu0 0
        %2096 = vmatprep.subr.bf16.mxu0 0
        %2097 = vmatpush1.bf16.msra.mxu0 0
        %2098 = vmatprep.subr.bf16.mxu0 0
        %2099 = vmatpush1.bf16.msra.mxu0 0
        %2100 = vmatprep.subr.bf16.mxu0 0
        %2101 = vmatpush1.bf16.msra.mxu0 0
        %2102 = vmatprep.subr.bf16.mxu0 0
        %2103 = vmatpush1.bf16.msra.mxu0 0
        %2104 = vmatprep.subr.bf16.mxu0 0
        %2105 = vmatpush1.bf16.msra.mxu0 0
        %2106 = vmatprep.subr.bf16.mxu0 0
        %2107 = vmatpush1.bf16.msra.mxu0 0
        %2108 = vmatprep.subr.bf16.mxu0 0
        %2109 = vmatpush1.bf16.msra.mxu0 0
        %2110 = vmatprep.subr.bf16.mxu0 0
        %2111 = vmatpush1.bf16.msra.mxu0 0
        %2112 = vmatprep.subr.bf16.mxu0 0
        %2113 = vmatpush1.bf16.msra.mxu0 0
        %2114 = vmatprep.subr.bf16.mxu0 0
        %2115 = vmatpush1.bf16.msra.mxu0 0
        %2116 = vmatprep.subr.bf16.mxu0 0
        %2117 = vmatpush1.bf16.msra.mxu0 0
        %2118 = vmatprep.mubr.bf16.mxu0 0
        %2119 = vmatmul.mubr.bf16.gmra.mrb[0].mxu0 %v2078
        %v2120 = vpop.f32.mrb[0].mxu0
        %v2121 = vadd.f32 0.0, %v2120
        %v2122 = vpop.f32.mrb[0].mxu0
        %v2123 = vadd.f32 0.0, %v2122
        %v2124 = vpop.f32.mrb[0].mxu0
        %v2125 = vadd.f32 0.0, %v2124
        %v2126 = vpop.f32.mrb[0].mxu0
        %v2127 = vadd.f32 0.0, %v2126
        %2128 = vdwg.mxu0
        %v2129 = vadd.f32 %v2049, %v2121
        %v2130 = vadd.f32 %v2050, %v2123
        %v2131 = vadd.f32 %v2051, %v2125
        %v2132 = vadd.f32 %v2052, %v2127
        %2133 = vrot.lane.b32.xlu0 %v225, 126
        %v2134 = vpop.permute.xlu0 %2133
        %2135 = vrot.lane.b32.xlu0 %v226, 126
        %v2136 = vpop.permute.xlu0 %2135
        %v2137 = vrot.slane %v2134, 4
        %v2138 = vrot.slane %v2136, 4
        %v2139 = vsel %vm1980, %v2137, %v2138
        %v2140 = vsel %vm481, %v2139, %v2136
        %v2143 = vmul.bf16 %v2140, %v449
        %s2144 = scalar_lea.vmem %s2, 160
        %v2145 = vld [vmem:[%s2144] sm:$0xf]
        %v2146 = vld [vmem:[%s2144 + $0x4] sm:$0xf]
        %v2149 = vunpack.c.l.b16 %v2145
        %v2150 = vunpack.c.l.b16 %v2146
        %v2151 = vpack.c.b16 %v2150, %v2149
        %v2153 = vunpack.c.l.b16 %v2143
        %v2154 = vunpack.c.h.b16 %v2143
        %v2155 = vpack.c.b16 %v2153, %v2153
        %v2156 = vpack.c.b16 %v2154, %v2154
        %v2158 = vsel %vm309, %v2151, 0
        %v2161 = vsel %vm313, %v2155, 0
        %v2164 = vsel %vm313, %v2156, 0
        %2166 = vmatprep.subr.bf16.mxu0 %v2164
        %2167 = vmatpush1.bf16.msra.mxu0 %v2161
        %2168 = vmatprep.subr.bf16.mxu0 0
        %2169 = vmatpush1.bf16.msra.mxu0 0
        %2170 = vmatprep.subr.bf16.mxu0 0
        %2171 = vmatpush1.bf16.msra.mxu0 0
        %2172 = vmatprep.subr.bf16.mxu0 0
        %2173 = vmatpush1.bf16.msra.mxu0 0
        %2174 = vmatprep.subr.bf16.mxu0 0
        %2175 = vmatpush1.bf16.msra.mxu0 0
        %2176 = vmatprep.subr.bf16.mxu0 0
        %2177 = vmatpush1.bf16.msra.mxu0 0
        %2178 = vmatprep.subr.bf16.mxu0 0
        %2179 = vmatpush1.bf16.msra.mxu0 0
        %2180 = vmatprep.subr.bf16.mxu0 0
        %2181 = vmatpush1.bf16.msra.mxu0 0
        %2182 = vmatprep.subr.bf16.mxu0 0
        %2183 = vmatpush1.bf16.msra.mxu0 0
        %2184 = vmatprep.subr.bf16.mxu0 0
        %2185 = vmatpush1.bf16.msra.mxu0 0
        %2186 = vmatprep.subr.bf16.mxu0 0
        %2187 = vmatpush1.bf16.msra.mxu0 0
        %2188 = vmatprep.subr.bf16.mxu0 0
        %2189 = vmatpush1.bf16.msra.mxu0 0
        %2190 = vmatprep.subr.bf16.mxu0 0
        %2191 = vmatpush1.bf16.msra.mxu0 0
        %2192 = vmatprep.subr.bf16.mxu0 0
        %2193 = vmatpush1.bf16.msra.mxu0 0
        %2194 = vmatprep.subr.bf16.mxu0 0
        %2195 = vmatpush1.bf16.msra.mxu0 0
        %2196 = vmatprep.subr.bf16.mxu0 0
        %2197 = vmatpush1.bf16.msra.mxu0 0
        %2198 = vmatprep.mubr.bf16.mxu0 0
        %2199 = vmatmul.mubr.bf16.gmra.mrb[0].mxu0 %v2158
        %v2200 = vpop.f32.mrb[0].mxu0
        %v2201 = vadd.f32 0.0, %v2200
        %v2202 = vpop.f32.mrb[0].mxu0
        %v2203 = vadd.f32 0.0, %v2202
        %v2204 = vpop.f32.mrb[0].mxu0
        %v2205 = vadd.f32 0.0, %v2204
        %v2206 = vpop.f32.mrb[0].mxu0
        %v2207 = vadd.f32 0.0, %v2206
        %2208 = vdwg.mxu0
        %v2209 = vadd.f32 %v2129, %v2201
        %v2210 = vadd.f32 %v2130, %v2203
        %v2211 = vadd.f32 %v2131, %v2205
        %v2212 = vadd.f32 %v2132, %v2207
        %2213 = vrot.lane.b32.xlu0 %v225, 120
        %v2214 = vpop.permute.xlu0 %2213
        %2215 = vrot.lane.b32.xlu0 %v226, 120
        %v2216 = vpop.permute.xlu0 %2215
        %v2217 = vrot.slane %v2214, 4
        %v2218 = vrot.slane %v2216, 4
        %v2219 = vsel %vm1980, %v2217, %v2218
        %v2220 = vsel %vm590, %v2219, %v2216
        %v2223 = vmul.bf16 %v2220, %v558
        %s2224 = scalar_lea.vmem %s2, 168
        %v2225 = vld [vmem:[%s2224] sm:$0xf]
        %v2226 = vld [vmem:[%s2224 + $0x4] sm:$0xf]
        %v2229 = vunpack.c.l.b16 %v2225
        %v2230 = vunpack.c.l.b16 %v2226
        %v2231 = vpack.c.b16 %v2230, %v2229
        %v2233 = vunpack.c.l.b16 %v2223
        %v2234 = vunpack.c.h.b16 %v2223
        %v2235 = vpack.c.b16 %v2233, %v2233
        %v2236 = vpack.c.b16 %v2234, %v2234
        %v2238 = vsel %vm309, %v2231, 0
        %v2241 = vsel %vm313, %v2235, 0
        %v2244 = vsel %vm313, %v2236, 0
        %2246 = vmatprep.subr.bf16.mxu0 %v2244
        %2247 = vmatpush1.bf16.msra.mxu0 %v2241
        %2248 = vmatprep.subr.bf16.mxu0 0
        %2249 = vmatpush1.bf16.msra.mxu0 0
        %2250 = vmatprep.subr.bf16.mxu0 0
        %2251 = vmatpush1.bf16.msra.mxu0 0
        %2252 = vmatprep.subr.bf16.mxu0 0
        %2253 = vmatpush1.bf16.msra.mxu0 0
        %2254 = vmatprep.subr.bf16.mxu0 0
        %2255 = vmatpush1.bf16.msra.mxu0 0
        %2256 = vmatprep.subr.bf16.mxu0 0
        %2257 = vmatpush1.bf16.msra.mxu0 0
        %2258 = vmatprep.subr.bf16.mxu0 0
        %2259 = vmatpush1.bf16.msra.mxu0 0
        %2260 = vmatprep.subr.bf16.mxu0 0
        %2261 = vmatpush1.bf16.msra.mxu0 0
        %2262 = vmatprep.subr.bf16.mxu0 0
        %2263 = vmatpush1.bf16.msra.mxu0 0
        %2264 = vmatprep.subr.bf16.mxu0 0
        %2265 = vmatpush1.bf16.msra.mxu0 0
        %2266 = vmatprep.subr.bf16.mxu0 0
        %2267 = vmatpush1.bf16.msra.mxu0 0
        %2268 = vmatprep.subr.bf16.mxu0 0
        %2269 = vmatpush1.bf16.msra.mxu0 0
        %2270 = vmatprep.subr.bf16.mxu0 0
        %2271 = vmatpush1.bf16.msra.mxu0 0
        %2272 = vmatprep.subr.bf16.mxu0 0
        %2273 = vmatpush1.bf16.msra.mxu0 0
        %2274 = vmatprep.subr.bf16.mxu0 0
        %2275 = vmatpush1.bf16.msra.mxu0 0
        %2276 = vmatprep.subr.bf16.mxu0 0
        %2277 = vmatpush1.bf16.msra.mxu0 0
        %2278 = vmatprep.mubr.bf16.mxu0 0
        %2279 = vmatmul.mubr.bf16.gmra.mrb[0].mxu0 %v2238
        %v2280 = vpop.f32.mrb[0].mxu0
        %v2281 = vadd.f32 0.0, %v2280
        %v2282 = vpop.f32.mrb[0].mxu0
        %v2283 = vadd.f32 0.0, %v2282
        %v2284 = vpop.f32.mrb[0].mxu0
        %v2285 = vadd.f32 0.0, %v2284
        %v2286 = vpop.f32.mrb[0].mxu0
        %v2287 = vadd.f32 0.0, %v2286
        %2288 = vdwg.mxu0
        %v2289 = vadd.f32 %v2209, %v2281
        %v2290 = vadd.f32 %v2210, %v2283
        %v2291 = vadd.f32 %v2211, %v2285
        %v2292 = vadd.f32 %v2212, %v2287
        %s2293 = scalar_lea.vmem %s2, 176
        %v2294 = vld [vmem:[%s2293] sm:$0xf]
        %v2295 = vld [vmem:[%s2293 + $0x4] sm:$0xf]
        %v2298 = vunpack.c.l.b16 %v2294
        %v2299 = vunpack.c.l.b16 %v2295
        %v2300 = vpack.c.b16 %v2299, %v2298
        %v2301 = vunpack.c.h.b16 %v226
        %v2302 = vpack.c.b16 %v2301, %v2301
        %2303 = vrot.lane.b32.xlu0 %v2302, 119
        %v2304 = vpop.permute.xlu0 %2303
        %v2305 = vsel %vm671, %v670, %v2304
        %v2307 = vsel %vm309, %v2300, 0
        %v2310 = vsel %vm313, %v2305, 0
        %2312 = vmatprep.subr.bf16.mxu0 %v2310
        %2313 = vmatpush1.bf16.msra.mxu0 %v681
        %2314 = vmatprep.subr.bf16.mxu0 0
        %2315 = vmatpush1.bf16.msra.mxu0 0
        %2316 = vmatprep.subr.bf16.mxu0 0
        %2317 = vmatpush1.bf16.msra.mxu0 0
        %2318 = vmatprep.subr.bf16.mxu0 0
        %2319 = vmatpush1.bf16.msra.mxu0 0
        %2320 = vmatprep.subr.bf16.mxu0 0
        %2321 = vmatpush1.bf16.msra.mxu0 0
        %2322 = vmatprep.subr.bf16.mxu0 0
        %2323 = vmatpush1.bf16.msra.mxu0 0
        %2324 = vmatprep.subr.bf16.mxu0 0
        %2325 = vmatpush1.bf16.msra.mxu0 0
        %2326 = vmatprep.subr.bf16.mxu0 0
        %2327 = vmatpush1.bf16.msra.mxu0 0
        %2328 = vmatprep.subr.bf16.mxu0 0
        %2329 = vmatpush1.bf16.msra.mxu0 0
        %2330 = vmatprep.subr.bf16.mxu0 0
        %2331 = vmatpush1.bf16.msra.mxu0 0
        %2332 = vmatprep.subr.bf16.mxu0 0
        %2333 = vmatpush1.bf16.msra.mxu0 0
        %2334 = vmatprep.subr.bf16.mxu0 0
        %2335 = vmatpush1.bf16.msra.mxu0 0
        %2336 = vmatprep.subr.bf16.mxu0 0
        %2337 = vmatpush1.bf16.msra.mxu0 0
        %2338 = vmatprep.subr.bf16.mxu0 0
        %2339 = vmatpush1.bf16.msra.mxu0 0
        %2340 = vmatprep.subr.bf16.mxu0 0
        %2341 = vmatpush1.bf16.msra.mxu0 0
        %2342 = vmatprep.subr.bf16.mxu0 0
        %2343 = vmatpush1.bf16.msra.mxu0 0
        %2344 = vmatprep.mubr.bf16.mxu0 0
        %2345 = vmatmul.mubr.bf16.gmra.mrb[0].mxu0 %v2307
        %v2346 = vpop.f32.mrb[0].mxu0
        %v2347 = vadd.f32 0.0, %v2346
        %v2348 = vpop.f32.mrb[0].mxu0
        %v2349 = vadd.f32 0.0, %v2348
        %v2350 = vpop.f32.mrb[0].mxu0
        %v2351 = vadd.f32 0.0, %v2350
        %v2352 = vpop.f32.mrb[0].mxu0
        %v2353 = vadd.f32 0.0, %v2352
        %2354 = vdwg.mxu0
        %v2355 = vadd.f32 %v2289, %v2347
        %v2356 = vadd.f32 %v2290, %v2349
        %v2357 = vadd.f32 %v2291, %v2351
        %v2358 = vadd.f32 %v2292, %v2353
        %2359 = vrot.lane.b32.xlu0 %v225, 118
        %v2360 = vpop.permute.xlu0 %2359
        %2361 = vrot.lane.b32.xlu0 %v226, 118
        %v2362 = vpop.permute.xlu0 %2361
        %v2363 = vrot.slane %v2360, 4
        %v2364 = vrot.slane %v2362, 4
        %v2365 = vsel %vm1980, %v2363, %v2364
        %v2366 = vsel %vm788, %v2365, %v2362
        %v2369 = vmul.bf16 %v2366, %v756
        %s2370 = scalar_lea.vmem %s2, 184
        %v2371 = vld [vmem:[%s2370] sm:$0xf]
        %v2372 = vld [vmem:[%s2370 + $0x4] sm:$0xf]
        %v2375 = vunpack.c.l.b16 %v2371
        %v2376 = vunpack.c.l.b16 %v2372
        %v2377 = vpack.c.b16 %v2376, %v2375
        %v2379 = vunpack.c.l.b16 %v2369
        %v2380 = vunpack.c.h.b16 %v2369
        %v2381 = vpack.c.b16 %v2379, %v2379
        %v2382 = vpack.c.b16 %v2380, %v2380
        %v2384 = vsel %vm309, %v2377, 0
        %v2387 = vsel %vm313, %v2381, 0
        %v2390 = vsel %vm313, %v2382, 0
        %2392 = vmatprep.subr.bf16.mxu0 %v2390
        %2393 = vmatpush1.bf16.msra.mxu0 %v2387
        %2394 = vmatprep.subr.bf16.mxu0 0
        %2395 = vmatpush1.bf16.msra.mxu0 0
        %2396 = vmatprep.subr.bf16.mxu0 0
        %2397 = vmatpush1.bf16.msra.mxu0 0
        %2398 = vmatprep.subr.bf16.mxu0 0
        %2399 = vmatpush1.bf16.msra.mxu0 0
        %2400 = vmatprep.subr.bf16.mxu0 0
        %2401 = vmatpush1.bf16.msra.mxu0 0
        %2402 = vmatprep.subr.bf16.mxu0 0
        %2403 = vmatpush1.bf16.msra.mxu0 0
        %2404 = vmatprep.subr.bf16.mxu0 0
        %2405 = vmatpush1.bf16.msra.mxu0 0
        %2406 = vmatprep.subr.bf16.mxu0 0
        %2407 = vmatpush1.bf16.msra.mxu0 0
        %2408 = vmatprep.subr.bf16.mxu0 0
        %2409 = vmatpush1.bf16.msra.mxu0 0
        %2410 = vmatprep.subr.bf16.mxu0 0
        %2411 = vmatpush1.bf16.msra.mxu0 0
        %2412 = vmatprep.subr.bf16.mxu0 0
        %2413 = vmatpush1.bf16.msra.mxu0 0
        %2414 = vmatprep.subr.bf16.mxu0 0
        %2415 = vmatpush1.bf16.msra.mxu0 0
        %2416 = vmatprep.subr.bf16.mxu0 0
        %2417 = vmatpush1.bf16.msra.mxu0 0
        %2418 = vmatprep.subr.bf16.mxu0 0
        %2419 = vmatpush1.bf16.msra.mxu0 0
        %2420 = vmatprep.subr.bf16.mxu0 0
        %2421 = vmatpush1.bf16.msra.mxu0 0
        %2422 = vmatprep.subr.bf16.mxu0 0
        %2423 = vmatpush1.bf16.msra.mxu0 0
        %2424 = vmatprep.mubr.bf16.mxu0 0
        %2425 = vmatmul.mubr.bf16.gmra.mrb[0].mxu0 %v2384
        %v2426 = vpop.f32.mrb[0].mxu0
        %v2427 = vadd.f32 0.0, %v2426
        %v2428 = vpop.f32.mrb[0].mxu0
        %v2429 = vadd.f32 0.0, %v2428
        %v2430 = vpop.f32.mrb[0].mxu0
        %v2431 = vadd.f32 0.0, %v2430
        %v2432 = vpop.f32.mrb[0].mxu0
        %v2433 = vadd.f32 0.0, %v2432
        %2434 = vdwg.mxu0
        %v2435 = vadd.f32 %v2355, %v2427
        %v2436 = vadd.f32 %v2356, %v2429
        %v2437 = vadd.f32 %v2357, %v2431
        %v2438 = vadd.f32 %v2358, %v2433
        %2439 = vrot.lane.b32.xlu0 %v225, 112
        %v2440 = vpop.permute.xlu0 %2439
        %2441 = vrot.lane.b32.xlu0 %v226, 112
        %v2442 = vpop.permute.xlu0 %2441
        %v2443 = vrot.slane %v2440, 4
        %v2444 = vrot.slane %v2442, 4
        %v2445 = vsel %vm1980, %v2443, %v2444
        %v2446 = vsel %vm903, %v2445, %v2442
        %v2449 = vmul.bf16 %v2446, %v871
        %s2450 = scalar_lea.vmem %s2, 192
        %v2451 = vld [vmem:[%s2450] sm:$0xf]
        %v2452 = vld [vmem:[%s2450 + $0x4] sm:$0xf]
        %v2455 = vunpack.c.l.b16 %v2451
        %v2456 = vunpack.c.l.b16 %v2452
        %v2457 = vpack.c.b16 %v2456, %v2455
        %v2459 = vunpack.c.l.b16 %v2449
        %v2460 = vunpack.c.h.b16 %v2449
        %v2461 = vpack.c.b16 %v2459, %v2459
        %v2462 = vpack.c.b16 %v2460, %v2460
        %v2464 = vsel %vm309, %v2457, 0
        %v2467 = vsel %vm313, %v2461, 0
        %v2470 = vsel %vm313, %v2462, 0
        %2472 = vmatprep.subr.bf16.mxu0 %v2470
        %2473 = vmatpush1.bf16.msra.mxu0 %v2467
        %2474 = vmatprep.subr.bf16.mxu0 0
        %2475 = vmatpush1.bf16.msra.mxu0 0
        %2476 = vmatprep.subr.bf16.mxu0 0
        %2477 = vmatpush1.bf16.msra.mxu0 0
        %2478 = vmatprep.subr.bf16.mxu0 0
        %2479 = vmatpush1.bf16.msra.mxu0 0
        %2480 = vmatprep.subr.bf16.mxu0 0
        %2481 = vmatpush1.bf16.msra.mxu0 0
        %2482 = vmatprep.subr.bf16.mxu0 0
        %2483 = vmatpush1.bf16.msra.mxu0 0
        %2484 = vmatprep.subr.bf16.mxu0 0
        %2485 = vmatpush1.bf16.msra.mxu0 0
        %2486 = vmatprep.subr.bf16.mxu0 0
        %2487 = vmatpush1.bf16.msra.mxu0 0
        %2488 = vmatprep.subr.bf16.mxu0 0
        %2489 = vmatpush1.bf16.msra.mxu0 0
        %2490 = vmatprep.subr.bf16.mxu0 0
        %2491 = vmatpush1.bf16.msra.mxu0 0
        %2492 = vmatprep.subr.bf16.mxu0 0
        %2493 = vmatpush1.bf16.msra.mxu0 0
        %2494 = vmatprep.subr.bf16.mxu0 0
        %2495 = vmatpush1.bf16.msra.mxu0 0
        %2496 = vmatprep.subr.bf16.mxu0 0
        %2497 = vmatpush1.bf16.msra.mxu0 0
        %2498 = vmatprep.subr.bf16.mxu0 0
        %2499 = vmatpush1.bf16.msra.mxu0 0
        %2500 = vmatprep.subr.bf16.mxu0 0
        %2501 = vmatpush1.bf16.msra.mxu0 0
        %2502 = vmatprep.subr.bf16.mxu0 0
        %2503 = vmatpush1.bf16.msra.mxu0 0
        %2504 = vmatprep.mubr.bf16.mxu0 0
        %2505 = vmatmul.mubr.bf16.gmra.mrb[0].mxu0 %v2464
        %v2506 = vpop.f32.mrb[0].mxu0
        %v2507 = vadd.f32 0.0, %v2506
        %v2508 = vpop.f32.mrb[0].mxu0
        %v2509 = vadd.f32 0.0, %v2508
        %v2510 = vpop.f32.mrb[0].mxu0
        %v2511 = vadd.f32 0.0, %v2510
        %v2512 = vpop.f32.mrb[0].mxu0
        %v2513 = vadd.f32 0.0, %v2512
        %2514 = vdwg.mxu0
        %v2515 = vadd.f32 %v2435, %v2507
        %v2516 = vadd.f32 %v2436, %v2509
        %v2517 = vadd.f32 %v2437, %v2511
        %v2518 = vadd.f32 %v2438, %v2513
        %2519 = vrot.lane.b32.xlu0 %v225, 111
        %v2520 = vpop.permute.xlu0 %2519
        %2521 = vrot.lane.b32.xlu0 %v226, 111
        %v2522 = vpop.permute.xlu0 %2521
        %v2523 = vrot.slane %v2520, 4
        %v2524 = vrot.slane %v2522, 4
        %v2525 = vsel %vm1980, %v2523, %v2524
        %v2526 = vsel %vm1012, %v2525, %v2522
        %v2529 = vmul.bf16 %v2526, %v980
        %s2530 = scalar_lea.vmem %s2, 200
        %v2531 = vld [vmem:[%s2530] sm:$0xf]
        %v2532 = vld [vmem:[%s2530 + $0x4] sm:$0xf]
        %v2535 = vunpack.c.l.b16 %v2531
        %v2536 = vunpack.c.l.b16 %v2532
        %v2537 = vpack.c.b16 %v2536, %v2535
        %v2539 = vunpack.c.l.b16 %v2529
        %v2540 = vunpack.c.h.b16 %v2529
        %v2541 = vpack.c.b16 %v2539, %v2539
        %v2542 = vpack.c.b16 %v2540, %v2540
        %v2544 = vsel %vm309, %v2537, 0
        %v2547 = vsel %vm313, %v2541, 0
        %v2550 = vsel %vm313, %v2542, 0
        %2552 = vmatprep.subr.bf16.mxu0 %v2550
        %2553 = vmatpush1.bf16.msra.mxu0 %v2547
        %2554 = vmatprep.subr.bf16.mxu0 0
        %2555 = vmatpush1.bf16.msra.mxu0 0
        %2556 = vmatprep.subr.bf16.mxu0 0
        %2557 = vmatpush1.bf16.msra.mxu0 0
        %2558 = vmatprep.subr.bf16.mxu0 0
        %2559 = vmatpush1.bf16.msra.mxu0 0
        %2560 = vmatprep.subr.bf16.mxu0 0
        %2561 = vmatpush1.bf16.msra.mxu0 0
        %2562 = vmatprep.subr.bf16.mxu0 0
        %2563 = vmatpush1.bf16.msra.mxu0 0
        %2564 = vmatprep.subr.bf16.mxu0 0
        %2565 = vmatpush1.bf16.msra.mxu0 0
        %2566 = vmatprep.subr.bf16.mxu0 0
        %2567 = vmatpush1.bf16.msra.mxu0 0
        %2568 = vmatprep.subr.bf16.mxu0 0
        %2569 = vmatpush1.bf16.msra.mxu0 0
        %2570 = vmatprep.subr.bf16.mxu0 0
        %2571 = vmatpush1.bf16.msra.mxu0 0
        %2572 = vmatprep.subr.bf16.mxu0 0
        %2573 = vmatpush1.bf16.msra.mxu0 0
        %2574 = vmatprep.subr.bf16.mxu0 0
        %2575 = vmatpush1.bf16.msra.mxu0 0
        %2576 = vmatprep.subr.bf16.mxu0 0
        %2577 = vmatpush1.bf16.msra.mxu0 0
        %2578 = vmatprep.subr.bf16.mxu0 0
        %2579 = vmatpush1.bf16.msra.mxu0 0
        %2580 = vmatprep.subr.bf16.mxu0 0
        %2581 = vmatpush1.bf16.msra.mxu0 0
        %2582 = vmatprep.subr.bf16.mxu0 0
        %2583 = vmatpush1.bf16.msra.mxu0 0
        %2584 = vmatprep.mubr.bf16.mxu0 0
        %2585 = vmatmul.mubr.bf16.gmra.mrb[0].mxu0 %v2544
        %v2586 = vpop.f32.mrb[0].mxu0
        %v2587 = vadd.f32 0.0, %v2586
        %v2588 = vpop.f32.mrb[0].mxu0
        %v2589 = vadd.f32 0.0, %v2588
        %v2590 = vpop.f32.mrb[0].mxu0
        %v2591 = vadd.f32 0.0, %v2590
        %v2592 = vpop.f32.mrb[0].mxu0
        %v2593 = vadd.f32 0.0, %v2592
        %2594 = vdwg.mxu0
        %v2595 = vadd.f32 %v2515, %v2587
        %v2596 = vadd.f32 %v2516, %v2589
        %v2597 = vadd.f32 %v2517, %v2591
        %v2598 = vadd.f32 %v2518, %v2593
        %2599 = vrot.lane.b32.xlu0 %v225, 110
        %v2600 = vpop.permute.xlu0 %2599
        %2601 = vrot.lane.b32.xlu0 %v226, 110
        %v2602 = vpop.permute.xlu0 %2601
        %v2603 = vrot.slane %v2600, 4
        %v2604 = vrot.slane %v2602, 4
        %v2605 = vsel %vm1980, %v2603, %v2604
        %v2606 = vsel %vm1127, %v2605, %v2602
        %v2609 = vmul.bf16 %v2606, %v1095
        %s2610 = scalar_lea.vmem %s2, 208
        %v2611 = vld [vmem:[%s2610] sm:$0xf]
        %v2612 = vld [vmem:[%s2610 + $0x4] sm:$0xf]
        %v2615 = vunpack.c.l.b16 %v2611
        %v2616 = vunpack.c.l.b16 %v2612
        %v2617 = vpack.c.b16 %v2616, %v2615
        %v2619 = vunpack.c.l.b16 %v2609
        %v2620 = vunpack.c.h.b16 %v2609
        %v2621 = vpack.c.b16 %v2619, %v2619
        %v2622 = vpack.c.b16 %v2620, %v2620
        %v2624 = vsel %vm309, %v2617, 0
        %v2627 = vsel %vm313, %v2621, 0
        %v2630 = vsel %vm313, %v2622, 0
        %2632 = vmatprep.subr.bf16.mxu0 %v2630
        %2633 = vmatpush1.bf16.msra.mxu0 %v2627
        %2634 = vmatprep.subr.bf16.mxu0 0
        %2635 = vmatpush1.bf16.msra.mxu0 0
        %2636 = vmatprep.subr.bf16.mxu0 0
        %2637 = vmatpush1.bf16.msra.mxu0 0
        %2638 = vmatprep.subr.bf16.mxu0 0
        %2639 = vmatpush1.bf16.msra.mxu0 0
        %2640 = vmatprep.subr.bf16.mxu0 0
        %2641 = vmatpush1.bf16.msra.mxu0 0
        %2642 = vmatprep.subr.bf16.mxu0 0
        %2643 = vmatpush1.bf16.msra.mxu0 0
        %2644 = vmatprep.subr.bf16.mxu0 0
        %2645 = vmatpush1.bf16.msra.mxu0 0
        %2646 = vmatprep.subr.bf16.mxu0 0
        %2647 = vmatpush1.bf16.msra.mxu0 0
        %2648 = vmatprep.subr.bf16.mxu0 0
        %2649 = vmatpush1.bf16.msra.mxu0 0
        %2650 = vmatprep.subr.bf16.mxu0 0
        %2651 = vmatpush1.bf16.msra.mxu0 0
        %2652 = vmatprep.subr.bf16.mxu0 0
        %2653 = vmatpush1.bf16.msra.mxu0 0
        %2654 = vmatprep.subr.bf16.mxu0 0
        %2655 = vmatpush1.bf16.msra.mxu0 0
        %2656 = vmatprep.subr.bf16.mxu0 0
        %2657 = vmatpush1.bf16.msra.mxu0 0
        %2658 = vmatprep.subr.bf16.mxu0 0
        %2659 = vmatpush1.bf16.msra.mxu0 0
        %2660 = vmatprep.subr.bf16.mxu0 0
        %2661 = vmatpush1.bf16.msra.mxu0 0
        %2662 = vmatprep.subr.bf16.mxu0 0
        %2663 = vmatpush1.bf16.msra.mxu0 0
        %2664 = vmatprep.mubr.bf16.mxu0 0
        %2665 = vmatmul.mubr.bf16.gmra.mrb[0].mxu0 %v2624
        %v2666 = vpop.f32.mrb[0].mxu0
        %v2667 = vadd.f32 0.0, %v2666
        %v2668 = vpop.f32.mrb[0].mxu0
        %v2669 = vadd.f32 0.0, %v2668
        %v2670 = vpop.f32.mrb[0].mxu0
        %v2671 = vadd.f32 0.0, %v2670
        %v2672 = vpop.f32.mrb[0].mxu0
        %v2673 = vadd.f32 0.0, %v2672
        %2674 = vdwg.mxu0
        %v2675 = vadd.f32 %v2595, %v2667
        %v2676 = vadd.f32 %v2596, %v2669
        %v2677 = vadd.f32 %v2597, %v2671
        %v2678 = vadd.f32 %v2598, %v2673
        %v2679 = vld [vmem:[%s3] sm:$0xff]
        %v2680 = vld [vmem:[%s3 + $0x8] sm:$0xff]
        %v2681 = vld [vmem:[%s3] sm:$0x1]
        %2683 = vset.pattern.permute.xlu0 0
        %2684 = vperm.xlu0 %2683, %v2679
        %v2685 = vpop.permute.xlu0 %2684
        %2688 = vset.pattern.permute.xlu0 0
        %2689 = vperm.xlu0 %2688, %v2680
        %v2690 = vpop.permute.xlu0 %2689
        %v2692 = vadd.f32 %v2675, %v2685
        %v2693 = vadd.f32 %v2676, %v2685
        %v2694 = vadd.f32 %v2677, %v2690
        %v2695 = vadd.f32 %v2678, %v2690
        %v2696 = vmax.f32 %v2692, 0.0
        %v2697 = vmax.f32 %v2693, 0.0
        %v2698 = vmax.f32 %v2694, 0.0
        %v2699 = vmax.f32 %v2695, 0.0
        %2700 = vset.pattern.permute.xlu0 1
        %2701 = vperm.xlu0 %2700, %v2679
        %v2702 = vpop.permute.xlu0 %2701
        %2704 = vset.pattern.permute.xlu0 1
        %2705 = vperm.xlu0 %2704, %v2680
        %v2706 = vpop.permute.xlu0 %2705
        %v2708 = vmul.f32 %v2696, %v2702
        %v2709 = vmul.f32 %v2697, %v2702
        %v2710 = vmul.f32 %v2698, %v2706
        %v2711 = vmul.f32 %v2699, %v2706
        %v2712 = vadd.f32 %v2708, %v2710
        %v2713 = vrot.slane %v2712, 4
        %v2714 = vadd.f32 %v2712, %v2713
        %v2715 = vrot.slane %v2714, 2
        %v2716 = vadd.f32 %v2714, %v2715
        %v2717 = vrot.slane %v2716, 1
        %v2718 = vadd.f32 %v2716, %v2717
        %v2719 = vadd.f32 %v2709, %v2711
        %v2720 = vrot.slane %v2719, 4
        %v2721 = vadd.f32 %v2719, %v2720
        %v2722 = vrot.slane %v2721, 2
        %v2723 = vadd.f32 %v2721, %v2722
        %v2724 = vrot.slane %v2723, 1
        %v2725 = vadd.f32 %v2723, %v2724
        %2727 = vset.pattern.permute.xlu0 2
        %2728 = vperm.xlu0 %2727, %v2681
        %v2729 = vpop.permute.xlu0 %2728
        %v2731 = vadd.f32 %v2718, %v2729
        %v2732 = vadd.f32 %v2725, %v2729
        %v2733 = vxor.u32 %v2731, 2147483648
        %v2734 = vxor.u32 %v2732, 2147483648
        %v2735 = vmul.f32 %v2733, 1.442695
        %v2736 = vpow.pop %v2735
        %v2737 = vmul.f32 %v2734, 1.442695
        %v2738 = vpow.pop %v2737
        %v2739 = vadd.f32 %v2736, 1.0
        %v2740 = vadd.f32 %v2738, 1.0
        %v2741 = vrcp.pop %v2739
        %v2742 = vmul.f32 1.0, %v2741
        %v2743 = vrcp.pop %v2740
        %v2744 = vmul.f32 1.0, %v2743
        %v2745 = vunpack.c.l.bf16 %v225
        %v2746 = vunpack.c.h.bf16 %v225
        %v2747 = vunpack.c.l.bf16 %v226
        %v2748 = vlaneseq
        %v2749 = vshrl.u32 %v2748, 7
        %v2750 = vsub.s32 0, %v2749
        %v2751 = vrot.slane %v2742, %v2750
        %v2752 = vlaneseq
        %v2753 = vshrl.u32 %v2752, 7
        %v2754 = vsub.s32 0, %v2753
        %v2755 = vrot.slane %v2744, %v2754
        %2758 = vrot.lane.b32.xlu0 %v2751, 73
        %v2759 = vpop.permute.xlu0 %2758
        %2760 = vrot.lane.b32.xlu0 %v2755, 73
        %v2761 = vpop.permute.xlu0 %2760
        %vm2762 = vcmask 596992
        %v2763 = vsel %vm2762, %v2759, %v2761
        %v2767 = vmul.f32 %v2745, %v2759
        %v2768 = vmul.f32 %v2746, %v2763
        %v2769 = vmul.f32 %v2747, %v2761
        %v2773 = vcombine.high %v2767, %v2768
        %v2774 = vcombine.high %v2769, %v2769
        %2775 = vrot.lane.b32.xlu0 %v2773, 55
        %v2776 = vpop.permute.xlu0 %2775
        %2777 = vrot.lane.b32.xlu0 %v2774, 55
        %v2778 = vpop.permute.xlu0 %2777
        %v2779 = vrot.slane %v2776, 4
        %v2780 = vrot.slane %v2778, 4
        %v2781 = vsel %vm313, %v2779, %v2780
        %vm2782 = vcmask 449536
        %v2783 = vsel %vm2782, %v2776, %v2781
        %2785 = vst [vmem:[%s214] sm:$0xff] %v2783
        %s2786 = sand.u32 %s131, 1
        %s2787 = scalar_lea.sflag [#allocation3], %s2786
        %s2788 = sand.u32 %s131, 1
        %s2789 = smul.addr %s2788, 8
        %s2790 = scalar_lea.vmem [#allocation2], %s2789
        // Predicated region
        $region37: #{tpu_custom_call.1} parent=35 // pred_check
          %p2791 = pneg %p141
        $region38: #{tpu_custom_call.1} parent=35 // pred_check_branch
          %2793 = sbr.rel (%p2791) target = $region40
        $region39: #{tpu_custom_call.1} parent=35 // pred_region
          %s2795 = ssub.s32 128, 128
          %2796 = vsyncadd %s2787, %s2795
          %s2797 = smul.addr %s23, 2
          %s2798 = smul.addr %s22, 4
          %s2799 = sadd.s32 %s2797, %s2798
          %s2800 = smul.addr %s2799, 64
          %s2801 = scalar_lea.hbm %s4, %s2800
          %s2803 = sshll.u32 %s2790, 4
          %s2804 = int_to_ptr.vmem [resolvable:$true] %s2803
          %2806 = dma.vmem_to_hbm [thread:$0]  %s2804, 128, %s2801, %s2787
        $region40: #{tpu_custom_call.1} parent=35 // pred_fallthru
          _
      $region36: #{tpu_custom_call.1} parent=5 // pred_fallthru
        _
      %p2807 = scmp.le.s32.totalorder 2, %s13
      // Predicated region
      $region41: #{tpu_custom_call.1} parent=5 // pred_check
        %p2808 = pneg %p2807
      $region42: #{tpu_custom_call.1} parent=5 // pred_check_branch
        %2810 = sbr.rel (%p2808) target = $region44
      $region43: #{tpu_custom_call.1} parent=5 // pred_region
        %s2811 = ssub.s32 %s13, 2
        // Predicated region
        $region45: #{tpu_custom_call.1} parent=43 // pred_check
          %p2812 = pneg %p147
        $region46: #{tpu_custom_call.1} parent=43 // pred_check_branch
          %2814 = sbr.rel (%p2812) target = $region48
        $region47: #{tpu_custom_call.1} parent=43 // pred_region
          %s2815 = sand.u32 %s132, 1
          %s2816 = scalar_lea.sflag [#allocation3], %s2815
          %s2817 = sand.u32 %s132, 1
          %s2818 = smul.addr %s2817, 8
          %s2819 = scalar_lea.vmem [#allocation2], %s2818
          %2820 = dma.done %s2816, 128
        $region48: #{tpu_custom_call.1} parent=43 // pred_fallthru
          _
      $region44: #{tpu_custom_call.1} parent=5 // pred_fallthru
        _
    $region6: #{tpu_custom_call.1} parent=1 // loop_footer
      %s17 = sadd.s32 1, %s13
    $region7: #{tpu_custom_call.1} parent=1 // loop_footer_branch
      %12 = sbr.rel target = $region3
    $region8: #{tpu_custom_call.1} parent=1 // loop_exit
      _
    %2821 = vsyncpa [#allocation3], 1
    %s2822 = scalar_lea.sflag [#allocation3], 1
    %2823 = vsyncpa %s2822, 1

</llo_original>
